<compile_context>
chip_gen: v6e
topology: v6e:2x2x1
jax: 0.10.0
libtpu: 0.0.40
codegen_flags: <defaults>
</compile_context>

<pallas_src>
import numpy as np
import jax
import jax.numpy as jnp
from jax import lax
from jax.experimental import pallas as pl
from jax.experimental.pallas import tpu as pltpu


# ----------------------------- Pallas kernel ------------------------------- #

def _bidir_rnn_kernel(x_ref, wih_ref, whh_ref, o_ref, xi_ref):
    """Fused bidirectional single-layer tanh RNN (no bias), one N-tile per program.

    x_ref  : [T, D,  Nt]  input, N on lanes.
    wih_ref: [2H, D]      concat(W_ih_fwd, W_ih_bwd)       (torch layout).
    whh_ref: [2H, 2H]     block_diag(W_hh_fwd, W_hh_bwd)   (torch layout).
    o_ref  : [T, 2H, Nt]  rows 0:H = forward h_t, rows H:2H = backward h_t.
    xi_ref : [T, 2H, Nt]  VMEM scratch for the hoisted input projection.
    """
    T = x_ref.shape[0]
    Nt = x_ref.shape[2]
    H2 = wih_ref.shape[0]
    H = H2 // 2

    # Hoist weight reads out of the loops.
    wih = wih_ref[...]
    whh = whh_ref[...]

    # ---- Hoisted input projection (off the serialized recurrence path) ----
    # xi[t, 0:H]  = W_ih_f @ x[t]       (forward term used at step t)
    # xi[t, H:2H] = W_ih_b @ x[T-1-t]   (backward term used at step t)
    def proj(t, carry):
        p = jnp.dot(wih, x_ref[t], preferred_element_type=jnp.float32)  # [2H, Nt]
        xi_ref[t, :H, :] = p[:H, :]
        xi_ref[T - 1 - t, H:, :] = p[H:, :]
        return carry

    lax.fori_loop(0, T, proj, 0, unroll=True)

    # ---- Fused fwd+bwd recurrence: one [2H,2H]x[2H,Nt] matmul + tanh / step ----
    h0 = jnp.zeros((H2, Nt), jnp.float32)

    def step(i, h):
        h_new = jnp.tanh(
            xi_ref[i] + jnp.dot(whh, h, preferred_element_type=jnp.float32))
        o_ref[i, :H, :] = h_new[:H, :]           # forward output at time i
        o_ref[T - 1 - i, H:, :] = h_new[H:, :]   # backward output at time T-1-i
        return h_new

    lax.fori_loop(0, T, step, h0, unroll=True)


def bidir_rnn_pallas(x, w_ih_f, w_hh_f, w_ih_b, w_hh_b):
    """x: [T, N, D] float32; torch-layout weights ([H, D], [H, H]).

    Returns the bidirectional RNN output [T, N, 2H] (features = [fwd | bwd]),
    matching torch nn.RNN(nonlinearity='tanh', bias=False, bidirectional=True).
    """
    T, N, D = x.shape
    H = w_hh_f.shape[0]
    H2 = 2 * H

    LANE = 128
    N_pad = ((N + LANE - 1) // LANE) * LANE
    # N tile: large enough to amortize per-grid-step overhead, but keep >=2
    # parallel blocks when there is enough work (v7x has 2 TensorCores).
    if N_pad >= 1024:
        n_tile = 512
    elif N_pad >= 512:
        n_tile = 256
    elif N_pad >= 256:
        n_tile = 128
    else:
        n_tile = N_pad

    # [T, N, D] -> [T, D, N_pad]: N on lanes (lane-dense vregs / MXU / stores).
    xt = jnp.transpose(x, (0, 2, 1))
    if N_pad != N:
        xt = jnp.pad(xt, ((0, 0), (0, 0), (0, N_pad - N)))

    w_ih = jnp.concatenate([w_ih_f, w_ih_b], axis=0)                     # [2H, D]
    zeros = jnp.zeros((H, H), w_hh_f.dtype)
    w_hh = jnp.concatenate(
        [jnp.concatenate([w_hh_f, zeros], axis=1),
         jnp.concatenate([zeros, w_hh_b], axis=1)], axis=0)              # [2H, 2H]

    o = pl.pallas_call(
        _bidir_rnn_kernel,
        out_shape=jax.ShapeDtypeStruct((T, H2, N_pad), jnp.float32),
        grid_spec=pltpu.PrefetchScalarGridSpec(
            num_scalar_prefetch=0,
            grid=(N_pad // n_tile,),
            in_specs=[
                pl.BlockSpec((T, D, n_tile), lambda n: (0, 0, n)),   # x
                pl.BlockSpec((H2, D), lambda n: (0, 0)),             # W_ih (fwd|bwd)
                pl.BlockSpec((H2, H2), lambda n: (0, 0)),            # W_hh block-diag
            ],
            out_specs=pl.BlockSpec((T, H2, n_tile), lambda n: (0, 0, n)),
            scratch_shapes=[pltpu.VMEM((T, H2, n_tile), jnp.float32)],
        ),
        compiler_params=pltpu.CompilerParams(
            dimension_semantics=("parallel",)),
    )(xt, w_ih, w_hh)

    # [T, 2H, N_pad] -> [T, N, 2H]  (drop lane padding; fwd = 0:H, bwd = H:2H)
    return jnp.transpose(o[:, :, :N], (0, 2, 1))


# ------------------------- pure-JAX reference RNN -------------------------- #

def bidir_rnn_reference(x, w_ih_f, w_hh_f, w_ih_b, w_hh_b):
    """x: [T, N, D] -> [T, N, 2H]; mirrors torch nn.RNN (tanh, no bias, bidir)."""
    T, N, D = x.shape
    H = w_hh_f.shape[0]
    h0 = jnp.zeros((N, H), jnp.float32)

    def make_step(w_ih, w_hh):
        def f(h, x_t):
            h_new = jnp.tanh(x_t @ w_ih.T + h @ w_hh.T)
            return h_new, h_new
        return f

    _, hf = lax.scan(make_step(w_ih_f, w_hh_f), h0, x)
    _, hb = lax.scan(make_step(w_ih_b, w_hh_b), h0, x[::-1])
    return jnp.concatenate([hf, hb[::-1]], axis=-1)


# ----------------------- ShortSeqRNN forward (glue) ------------------------ #

def short_seq_rnn_forward(query, params, *, heads, kernel_size, overlap,
                          use_pallas=True):
    """Replicates ShortSeqRNN.forward(query) with key=None, value=None, stride=1."""
    bs, seqlen, dim = query.shape
    assert dim % heads == 0
    head_dim = dim // heads

    num_segments = int(np.ceil(seqlen / kernel_size))
    target_len = num_segments * kernel_size
    seg_len = kernel_size + 2 * overlap

    # F.pad(query, (0, 0, overlap, target_len + overlap - seqlen, 0, 0))
    q = jnp.pad(query, ((0, 0),
                        (overlap, target_len + overlap - seqlen),
                        (0, 0)))

    # segment slicing + cat along dim 0 (segment-major, exactly as torch.cat(segs, 0))
    segs = [q[:, i * kernel_size:(i + 1) * kernel_size + 2 * overlap]
            for i in range(num_segments)]
    q = jnp.concatenate(segs, axis=0)                                  # [NS*bs, T, dim]

    # split heads: view + transpose(1,2) + reshape
    q = q.reshape(q.shape[0], q.shape[1], heads, -1)                   # [NS*bs, T, heads, hd]
    q = jnp.transpose(q, (0, 2, 1, 3)).reshape(-1, seg_len, head_dim)  # [NS*bs*heads, T, hd]

    # RNN hot path in Pallas (time-major layout)
    x = jnp.transpose(q, (1, 0, 2))                                    # [T, N, hd]
    rnn_fn = bidir_rnn_pallas if use_pallas else bidir_rnn_reference
    out = rnn_fn(x, params["w_ih_f"], params["w_hh_f"],
                 params["w_ih_b"], params["w_hh_b"])                   # [T, N, hd]
    q = jnp.transpose(out, (1, 0, 2))                                  # [N, T, hd]

    # merge heads back (transpose(1,2) + reshape, as in the module)
    h2 = q.shape[2]
    q = q.reshape(-1, heads, seg_len, h2)
    q = jnp.transpose(q, (0, 2, 1, 3)).reshape(-1, seg_len, heads * h2)  # [NS*bs, T, dim]

    # faithful row-major reshape(bs, -1, dim) then slice [overlap : seqlen+overlap]
    # (intentionally replicates the original module's segment-ordering quirk)
    q = q.reshape(bs, -1, dim)[:, overlap:seqlen + overlap]
    return q


# ---------------------------------- main ----------------------------------- #

if __name__ == "__main__":
    # module hyper-params (small, consistent with __init__ constraints)
    hidden_size = 32
    heads = 2
    head_size = hidden_size // heads        # 16
    kernel_size = 8
    overlap = 2
    bs, seqlen = 2, 16

    D_in = hidden_size // heads             # RNN input size  = 16
    H = hidden_size // (2 * heads)          # RNN hidden size = 8

    key = jax.random.PRNGKey(0)
    k_q, k1, k2, k3, k4 = jax.random.split(key, 5)

    # deterministic nn.RNN-style parameter init: U(-1/sqrt(H), 1/sqrt(H)), no bias
    scale = 1.0 / np.sqrt(H)
    params = {
        "w_ih_f": jax.random.uniform(k1, (H, D_in), jnp.float32, -scale, scale),
        "w_hh_f": jax.random.uniform(k2, (H, H), jnp.float32, -scale, scale),
        "w_ih_b": jax.random.uniform(k3, (H, D_in), jnp.float32, -scale, scale),
        "w_hh_b": jax.random.uniform(k4, (H, H), jnp.float32, -scale, scale),
    }

    query = jax.random.normal(k_q, (bs, seqlen, hidden_size), jnp.float32)

    out = short_seq_rnn_forward(query, params, heads=heads,
                                kernel_size=kernel_size, overlap=overlap,
                                use_pallas=True)
    out = jax.block_until_ready(out)

    ref = short_seq_rnn_forward(query, params, heads=heads,
                                kernel_size=kernel_size, overlap=overlap,
                                use_pallas=False)
    ref = jax.block_until_ready(ref)

    assert out.shape == (bs, seqlen, hidden_size), out.shape
    np.testing.assert_allclose(np.asarray(out), np.asarray(ref),
                               rtol=2e-3, atol=2e-3)
    print("KERNEL_OK")
</pallas_src>

<mosaic_0001>
module attributes {stable_mosaic.version = 11 : i64} {
  func.func @_bidir_rnn_kernel(%arg0: i32, %arg1: memref<12x16x128xf32, #tpu.memory_space<vmem>>, %arg2: memref<16x16xf32, #tpu.memory_space<vmem>>, %arg3: memref<16x16xf32, #tpu.memory_space<vmem>>, %arg4: memref<12x16x128xf32, #tpu.memory_space<vmem>>, %arg5: memref<12x16x128xf32, #tpu.memory_space<vmem>>) attributes {dimension_semantics = [#tpu.dimension_semantics<parallel>], iteration_bounds = array<i64: 1>, scalar_prefetch = 0 : i64, scratch_operands = 1 : i64, tpu.core_type = #tpu.core_type<tc>, window_params = [{transform_indices = @transform_0, window_bounds = array<i64: 12, 16, 128>}, {pipeline_mode = #tpu.pipeline_mode<synchronous>, transform_indices = @transform_1, window_bounds = array<i64: 16, 16>}, {pipeline_mode = #tpu.pipeline_mode<synchronous>, transform_indices = @transform_2, window_bounds = array<i64: 16, 16>}, {transform_indices = @transform_3, window_bounds = array<i64: 12, 16, 128>}]} {
    %c0 = arith.constant 0 : index
    %c0_0 = arith.constant 0 : index
    %0 = vector.load %arg2[%c0, %c0_0] : memref<16x16xf32, #tpu.memory_space<vmem>>, vector<16x16xf32>
    %c0_1 = arith.constant 0 : index
    %c0_2 = arith.constant 0 : index
    %1 = vector.load %arg3[%c0_1, %c0_2] : memref<16x16xf32, #tpu.memory_space<vmem>>, vector<16x16xf32>
    %c0_i32 = arith.constant 0 : i32
    %2 = arith.index_cast %c0_i32 : i32 to index
    %c0_3 = arith.constant 0 : index
    %c0_4 = arith.constant 0 : index
    %3 = vector.load %arg1[%2, %c0_3, %c0_4] : memref<12x16x128xf32, #tpu.memory_space<vmem>>, vector<1x16x128xf32>
    %4 = vector.shape_cast %3 : vector<1x16x128xf32> to vector<16x128xf32>
    %cst = arith.constant dense<0.000000e+00> : vector<16x128xf32>
    %5 = tpu.matmul %0, %4, %cst {dimension_numbers = #tpu.dot_dimension_numbers<[1], [0], [0], [1], [0, 0, 1, 1], [], []>} : vector<16x16xf32>, vector<16x128xf32>, vector<16x128xf32> -> vector<16x128xf32>
    %6 = vector.extract_strided_slice %5 {offsets = [0, 0], sizes = [8, 128], strides = [1, 1]} : vector<16x128xf32> to vector<8x128xf32>
    %7 = arith.index_cast %c0_i32 : i32 to index
    %c0_5 = arith.constant 0 : index
    %c0_6 = arith.constant 0 : index
    %8 = vector.load %arg5[%7, %c0_5, %c0_6] : memref<12x16x128xf32, #tpu.memory_space<vmem>>, vector<1x8x128xf32>
    %9 = vector.shape_cast %8 : vector<1x8x128xf32> to vector<8x128xf32>
    %10 = vector.shape_cast %6 : vector<8x128xf32> to vector<1x8x128xf32>
    tpu.vector_store %arg5[%7, %c0_5, %c0_6], %10 {strides = array<i32>} : memref<12x16x128xf32, #tpu.memory_space<vmem>>, vector<1x8x128xf32>,
    %11 = vector.extract_strided_slice %5 {offsets = [8, 0], sizes = [8, 128], strides = [1, 1]} : vector<16x128xf32> to vector<8x128xf32>
    %c11_i32 = arith.constant 11 : i32
    %12 = arith.subi %c11_i32, %c0_i32 : i32
    %13 = arith.index_cast %12 : i32 to index
    %c8 = arith.constant 8 : index
    %c0_7 = arith.constant 0 : index
    %14 = vector.load %arg5[%13, %c8, %c0_7] : memref<12x16x128xf32, #tpu.memory_space<vmem>>, vector<1x8x128xf32>
    %15 = vector.shape_cast %14 : vector<1x8x128xf32> to vector<8x128xf32>
    %16 = vector.shape_cast %11 : vector<8x128xf32> to vector<1x8x128xf32>
    tpu.vector_store %arg5[%13, %c8, %c0_7], %16 {strides = array<i32>} : memref<12x16x128xf32, #tpu.memory_space<vmem>>, vector<1x8x128xf32>,
    %c1_i32 = arith.constant 1 : i32
    %17 = arith.index_cast %c1_i32 : i32 to index
    %c0_8 = arith.constant 0 : index
    %c0_9 = arith.constant 0 : index
    %18 = vector.load %arg1[%17, %c0_8, %c0_9] : memref<12x16x128xf32, #tpu.memory_space<vmem>>, vector<1x16x128xf32>
    %19 = vector.shape_cast %18 : vector<1x16x128xf32> to vector<16x128xf32>
    %cst_10 = arith.constant dense<0.000000e+00> : vector<16x128xf32>
    %20 = tpu.matmul %0, %19, %cst_10 {dimension_numbers = #tpu.dot_dimension_numbers<[1], [0], [0], [1], [0, 0, 1, 1], [], []>} : vector<16x16xf32>, vector<16x128xf32>, vector<16x128xf32> -> vector<16x128xf32>
    %21 = vector.extract_strided_slice %20 {offsets = [0, 0], sizes = [8, 128], strides = [1, 1]} : vector<16x128xf32> to vector<8x128xf32>
    %22 = arith.index_cast %c1_i32 : i32 to index
    %c0_11 = arith.constant 0 : index
    %c0_12 = arith.constant 0 : index
    %23 = vector.load %arg5[%22, %c0_11, %c0_12] : memref<12x16x128xf32, #tpu.memory_space<vmem>>, vector<1x8x128xf32>
    %24 = vector.shape_cast %23 : vector<1x8x128xf32> to vector<8x128xf32>
    %25 = vector.shape_cast %21 : vector<8x128xf32> to vector<1x8x128xf32>
    tpu.vector_store %arg5[%22, %c0_11, %c0_12], %25 {strides = array<i32>} : memref<12x16x128xf32, #tpu.memory_space<vmem>>, vector<1x8x128xf32>,
    %26 = vector.extract_strided_slice %20 {offsets = [8, 0], sizes = [8, 128], strides = [1, 1]} : vector<16x128xf32> to vector<8x128xf32>
    %c11_i32_13 = arith.constant 11 : i32
    %27 = arith.subi %c11_i32_13, %c1_i32 : i32
    %28 = arith.index_cast %27 : i32 to index
    %c8_14 = arith.constant 8 : index
    %c0_15 = arith.constant 0 : index
    %29 = vector.load %arg5[%28, %c8_14, %c0_15] : memref<12x16x128xf32, #tpu.memory_space<vmem>>, vector<1x8x128xf32>
    %30 = vector.shape_cast %29 : vector<1x8x128xf32> to vector<8x128xf32>
    %31 = vector.shape_cast %26 : vector<8x128xf32> to vector<1x8x128xf32>
    tpu.vector_store %arg5[%28, %c8_14, %c0_15], %31 {strides = array<i32>} : memref<12x16x128xf32, #tpu.memory_space<vmem>>, vector<1x8x128xf32>,
    %c2_i32 = arith.constant 2 : i32
    %32 = arith.index_cast %c2_i32 : i32 to index
    %c0_16 = arith.constant 0 : index
    %c0_17 = arith.constant 0 : index
    %33 = vector.load %arg1[%32, %c0_16, %c0_17] : memref<12x16x128xf32, #tpu.memory_space<vmem>>, vector<1x16x128xf32>
    %34 = vector.shape_cast %33 : vector<1x16x128xf32> to vector<16x128xf32>
    %cst_18 = arith.constant dense<0.000000e+00> : vector<16x128xf32>
    %35 = tpu.matmul %0, %34, %cst_18 {dimension_numbers = #tpu.dot_dimension_numbers<[1], [0], [0], [1], [0, 0, 1, 1], [], []>} : vector<16x16xf32>, vector<16x128xf32>, vector<16x128xf32> -> vector<16x128xf32>
    %36 = vector.extract_strided_slice %35 {offsets = [0, 0], sizes = [8, 128], strides = [1, 1]} : vector<16x128xf32> to vector<8x128xf32>
    %37 = arith.index_cast %c2_i32 : i32 to index
    %c0_19 = arith.constant 0 : index
    %c0_20 = arith.constant 0 : index
    %38 = vector.load %arg5[%37, %c0_19, %c0_20] : memref<12x16x128xf32, #tpu.memory_space<vmem>>, vector<1x8x128xf32>
    %39 = vector.shape_cast %38 : vector<1x8x128xf32> to vector<8x128xf32>
    %40 = vector.shape_cast %36 : vector<8x128xf32> to vector<1x8x128xf32>
    tpu.vector_store %arg5[%37, %c0_19, %c0_20], %40 {strides = array<i32>} : memref<12x16x128xf32, #tpu.memory_space<vmem>>, vector<1x8x128xf32>,
    %41 = vector.extract_strided_slice %35 {offsets = [8, 0], sizes = [8, 128], strides = [1, 1]} : vector<16x128xf32> to vector<8x128xf32>
    %c11_i32_21 = arith.constant 11 : i32
    %42 = arith.subi %c11_i32_21, %c2_i32 : i32
    %43 = arith.index_cast %42 : i32 to index
    %c8_22 = arith.constant 8 : index
    %c0_23 = arith.constant 0 : index
    %44 = vector.load %arg5[%43, %c8_22, %c0_23] : memref<12x16x128xf32, #tpu.memory_space<vmem>>, vector<1x8x128xf32>
    %45 = vector.shape_cast %44 : vector<1x8x128xf32> to vector<8x128xf32>
    %46 = vector.shape_cast %41 : vector<8x128xf32> to vector<1x8x128xf32>
    tpu.vector_store %arg5[%43, %c8_22, %c0_23], %46 {strides = array<i32>} : memref<12x16x128xf32, #tpu.memory_space<vmem>>, vector<1x8x128xf32>,
    %c3_i32 = arith.constant 3 : i32
    %47 = arith.index_cast %c3_i32 : i32 to index
    %c0_24 = arith.constant 0 : index
    %c0_25 = arith.constant 0 : index
    %48 = vector.load %arg1[%47, %c0_24, %c0_25] : memref<12x16x128xf32, #tpu.memory_space<vmem>>, vector<1x16x128xf32>
    %49 = vector.shape_cast %48 : vector<1x16x128xf32> to vector<16x128xf32>
    %cst_26 = arith.constant dense<0.000000e+00> : vector<16x128xf32>
    %50 = tpu.matmul %0, %49, %cst_26 {dimension_numbers = #tpu.dot_dimension_numbers<[1], [0], [0], [1], [0, 0, 1, 1], [], []>} : vector<16x16xf32>, vector<16x128xf32>, vector<16x128xf32> -> vector<16x128xf32>
    %51 = vector.extract_strided_slice %50 {offsets = [0, 0], sizes = [8, 128], strides = [1, 1]} : vector<16x128xf32> to vector<8x128xf32>
    %52 = arith.index_cast %c3_i32 : i32 to index
    %c0_27 = arith.constant 0 : index
    %c0_28 = arith.constant 0 : index
    %53 = vector.load %arg5[%52, %c0_27, %c0_28] : memref<12x16x128xf32, #tpu.memory_space<vmem>>, vector<1x8x128xf32>
    %54 = vector.shape_cast %53 : vector<1x8x128xf32> to vector<8x128xf32>
    %55 = vector.shape_cast %51 : vector<8x128xf32> to vector<1x8x128xf32>
    tpu.vector_store %arg5[%52, %c0_27, %c0_28], %55 {strides = array<i32>} : memref<12x16x128xf32, #tpu.memory_space<vmem>>, vector<1x8x128xf32>,
    %56 = vector.extract_strided_slice %50 {offsets = [8, 0], sizes = [8, 128], strides = [1, 1]} : vector<16x128xf32> to vector<8x128xf32>
    %c11_i32_29 = arith.constant 11 : i32
    %57 = arith.subi %c11_i32_29, %c3_i32 : i32
    %58 = arith.index_cast %57 : i32 to index
    %c8_30 = arith.constant 8 : index
    %c0_31 = arith.constant 0 : index
    %59 = vector.load %arg5[%58, %c8_30, %c0_31] : memref<12x16x128xf32, #tpu.memory_space<vmem>>, vector<1x8x128xf32>
    %60 = vector.shape_cast %59 : vector<1x8x128xf32> to vector<8x128xf32>
    %61 = vector.shape_cast %56 : vector<8x128xf32> to vector<1x8x128xf32>
    tpu.vector_store %arg5[%58, %c8_30, %c0_31], %61 {strides = array<i32>} : memref<12x16x128xf32, #tpu.memory_space<vmem>>, vector<1x8x128xf32>,
    %c4_i32 = arith.constant 4 : i32
    %62 = arith.index_cast %c4_i32 : i32 to index
    %c0_32 = arith.constant 0 : index
    %c0_33 = arith.constant 0 : index
    %63 = vector.load %arg1[%62, %c0_32, %c0_33] : memref<12x16x128xf32, #tpu.memory_space<vmem>>, vector<1x16x128xf32>
    %64 = vector.shape_cast %63 : vector<1x16x128xf32> to vector<16x128xf32>
    %cst_34 = arith.constant dense<0.000000e+00> : vector<16x128xf32>
    %65 = tpu.matmul %0, %64, %cst_34 {dimension_numbers = #tpu.dot_dimension_numbers<[1], [0], [0], [1], [0, 0, 1, 1], [], []>} : vector<16x16xf32>, vector<16x128xf32>, vector<16x128xf32> -> vector<16x128xf32>
    %66 = vector.extract_strided_slice %65 {offsets = [0, 0], sizes = [8, 128], strides = [1, 1]} : vector<16x128xf32> to vector<8x128xf32>
    %67 = arith.index_cast %c4_i32 : i32 to index
    %c0_35 = arith.constant 0 : index
    %c0_36 = arith.constant 0 : index
    %68 = vector.load %arg5[%67, %c0_35, %c0_36] : memref<12x16x128xf32, #tpu.memory_space<vmem>>, vector<1x8x128xf32>
    %69 = vector.shape_cast %68 : vector<1x8x128xf32> to vector<8x128xf32>
    %70 = vector.shape_cast %66 : vector<8x128xf32> to vector<1x8x128xf32>
    tpu.vector_store %arg5[%67, %c0_35, %c0_36], %70 {strides = array<i32>} : memref<12x16x128xf32, #tpu.memory_space<vmem>>, vector<1x8x128xf32>,
    %71 = vector.extract_strided_slice %65 {offsets = [8, 0], sizes = [8, 128], strides = [1, 1]} : vector<16x128xf32> to vector<8x128xf32>
    %c11_i32_37 = arith.constant 11 : i32
    %72 = arith.subi %c11_i32_37, %c4_i32 : i32
    %73 = arith.index_cast %72 : i32 to index
    %c8_38 = arith.constant 8 : index
    %c0_39 = arith.constant 0 : index
    %74 = vector.load %arg5[%73, %c8_38, %c0_39] : memref<12x16x128xf32, #tpu.memory_space<vmem>>, vector<1x8x128xf32>
    %75 = vector.shape_cast %74 : vector<1x8x128xf32> to vector<8x128xf32>
    %76 = vector.shape_cast %71 : vector<8x128xf32> to vector<1x8x128xf32>
    tpu.vector_store %arg5[%73, %c8_38, %c0_39], %76 {strides = array<i32>} : memref<12x16x128xf32, #tpu.memory_space<vmem>>, vector<1x8x128xf32>,
    %c5_i32 = arith.constant 5 : i32
    %77 = arith.index_cast %c5_i32 : i32 to index
    %c0_40 = arith.constant 0 : index
    %c0_41 = arith.constant 0 : index
    %78 = vector.load %arg1[%77, %c0_40, %c0_41] : memref<12x16x128xf32, #tpu.memory_space<vmem>>, vector<1x16x128xf32>
    %79 = vector.shape_cast %78 : vector<1x16x128xf32> to vector<16x128xf32>
    %cst_42 = arith.constant dense<0.000000e+00> : vector<16x128xf32>
    %80 = tpu.matmul %0, %79, %cst_42 {dimension_numbers = #tpu.dot_dimension_numbers<[1], [0], [0], [1], [0, 0, 1, 1], [], []>} : vector<16x16xf32>, vector<16x128xf32>, vector<16x128xf32> -> vector<16x128xf32>
    %81 = vector.extract_strided_slice %80 {offsets = [0, 0], sizes = [8, 128], strides = [1, 1]} : vector<16x128xf32> to vector<8x128xf32>
    %82 = arith.index_cast %c5_i32 : i32 to index
    %c0_43 = arith.constant 0 : index
    %c0_44 = arith.constant 0 : index
    %83 = vector.load %arg5[%82, %c0_43, %c0_44] : memref<12x16x128xf32, #tpu.memory_space<vmem>>, vector<1x8x128xf32>
    %84 = vector.shape_cast %83 : vector<1x8x128xf32> to vector<8x128xf32>
    %85 = vector.shape_cast %81 : vector<8x128xf32> to vector<1x8x128xf32>
    tpu.vector_store %arg5[%82, %c0_43, %c0_44], %85 {strides = array<i32>} : memref<12x16x128xf32, #tpu.memory_space<vmem>>, vector<1x8x128xf32>,
    %86 = vector.extract_strided_slice %80 {offsets = [8, 0], sizes = [8, 128], strides = [1, 1]} : vector<16x128xf32> to vector<8x128xf32>
    %c11_i32_45 = arith.constant 11 : i32
    %87 = arith.subi %c11_i32_45, %c5_i32 : i32
    %88 = arith.index_cast %87 : i32 to index
    %c8_46 = arith.constant 8 : index
    %c0_47 = arith.constant 0 : index
    %89 = vector.load %arg5[%88, %c8_46, %c0_47] : memref<12x16x128xf32, #tpu.memory_space<vmem>>, vector<1x8x128xf32>
    %90 = vector.shape_cast %89 : vector<1x8x128xf32> to vector<8x128xf32>
    %91 = vector.shape_cast %86 : vector<8x128xf32> to vector<1x8x128xf32>
    tpu.vector_store %arg5[%88, %c8_46, %c0_47], %91 {strides = array<i32>} : memref<12x16x128xf32, #tpu.memory_space<vmem>>, vector<1x8x128xf32>,
    %c6_i32 = arith.constant 6 : i32
    %92 = arith.index_cast %c6_i32 : i32 to index
    %c0_48 = arith.constant 0 : index
    %c0_49 = arith.constant 0 : index
    %93 = vector.load %arg1[%92, %c0_48, %c0_49] : memref<12x16x128xf32, #tpu.memory_space<vmem>>, vector<1x16x128xf32>
    %94 = vector.shape_cast %93 : vector<1x16x128xf32> to vector<16x128xf32>
    %cst_50 = arith.constant dense<0.000000e+00> : vector<16x128xf32>
    %95 = tpu.matmul %0, %94, %cst_50 {dimension_numbers = #tpu.dot_dimension_numbers<[1], [0], [0], [1], [0, 0, 1, 1], [], []>} : vector<16x16xf32>, vector<16x128xf32>, vector<16x128xf32> -> vector<16x128xf32>
    %96 = vector.extract_strided_slice %95 {offsets = [0, 0], sizes = [8, 128], strides = [1, 1]} : vector<16x128xf32> to vector<8x128xf32>
    %97 = arith.index_cast %c6_i32 : i32 to index
    %c0_51 = arith.constant 0 : index
    %c0_52 = arith.constant 0 : index
    %98 = vector.load %arg5[%97, %c0_51, %c0_52] : memref<12x16x128xf32, #tpu.memory_space<vmem>>, vector<1x8x128xf32>
    %99 = vector.shape_cast %98 : vector<1x8x128xf32> to vector<8x128xf32>
    %100 = vector.shape_cast %96 : vector<8x128xf32> to vector<1x8x128xf32>
    tpu.vector_store %arg5[%97, %c0_51, %c0_52], %100 {strides = array<i32>} : memref<12x16x128xf32, #tpu.memory_space<vmem>>, vector<1x8x128xf32>,
    %101 = vector.extract_strided_slice %95 {offsets = [8, 0], sizes = [8, 128], strides = [1, 1]} : vector<16x128xf32> to vector<8x128xf32>
    %c11_i32_53 = arith.constant 11 : i32
    %102 = arith.subi %c11_i32_53, %c6_i32 : i32
    %103 = arith.index_cast %102 : i32 to index
    %c8_54 = arith.constant 8 : index
    %c0_55 = arith.constant 0 : index
    %104 = vector.load %arg5[%103, %c8_54, %c0_55] : memref<12x16x128xf32, #tpu.memory_space<vmem>>, vector<1x8x128xf32>
    %105 = vector.shape_cast %104 : vector<1x8x128xf32> to vector<8x128xf32>
    %106 = vector.shape_cast %101 : vector<8x128xf32> to vector<1x8x128xf32>
    tpu.vector_store %arg5[%103, %c8_54, %c0_55], %106 {strides = array<i32>} : memref<12x16x128xf32, #tpu.memory_space<vmem>>, vector<1x8x128xf32>,
    %c7_i32 = arith.constant 7 : i32
    %107 = arith.index_cast %c7_i32 : i32 to index
    %c0_56 = arith.constant 0 : index
    %c0_57 = arith.constant 0 : index
    %108 = vector.load %arg1[%107, %c0_56, %c0_57] : memref<12x16x128xf32, #tpu.memory_space<vmem>>, vector<1x16x128xf32>
    %109 = vector.shape_cast %108 : vector<1x16x128xf32> to vector<16x128xf32>
    %cst_58 = arith.constant dense<0.000000e+00> : vector<16x128xf32>
    %110 = tpu.matmul %0, %109, %cst_58 {dimension_numbers = #tpu.dot_dimension_numbers<[1], [0], [0], [1], [0, 0, 1, 1], [], []>} : vector<16x16xf32>, vector<16x128xf32>, vector<16x128xf32> -> vector<16x128xf32>
    %111 = vector.extract_strided_slice %110 {offsets = [0, 0], sizes = [8, 128], strides = [1, 1]} : vector<16x128xf32> to vector<8x128xf32>
    %112 = arith.index_cast %c7_i32 : i32 to index
    %c0_59 = arith.constant 0 : index
    %c0_60 = arith.constant 0 : index
    %113 = vector.load %arg5[%112, %c0_59, %c0_60] : memref<12x16x128xf32, #tpu.memory_space<vmem>>, vector<1x8x128xf32>
    %114 = vector.shape_cast %113 : vector<1x8x128xf32> to vector<8x128xf32>
    %115 = vector.shape_cast %111 : vector<8x128xf32> to vector<1x8x128xf32>
    tpu.vector_store %arg5[%112, %c0_59, %c0_60], %115 {strides = array<i32>} : memref<12x16x128xf32, #tpu.memory_space<vmem>>, vector<1x8x128xf32>,
    %116 = vector.extract_strided_slice %110 {offsets = [8, 0], sizes = [8, 128], strides = [1, 1]} : vector<16x128xf32> to vector<8x128xf32>
    %c11_i32_61 = arith.constant 11 : i32
    %117 = arith.subi %c11_i32_61, %c7_i32 : i32
    %118 = arith.index_cast %117 : i32 to index
    %c8_62 = arith.constant 8 : index
    %c0_63 = arith.constant 0 : index
    %119 = vector.load %arg5[%118, %c8_62, %c0_63] : memref<12x16x128xf32, #tpu.memory_space<vmem>>, vector<1x8x128xf32>
    %120 = vector.shape_cast %119 : vector<1x8x128xf32> to vector<8x128xf32>
    %121 = vector.shape_cast %116 : vector<8x128xf32> to vector<1x8x128xf32>
    tpu.vector_store %arg5[%118, %c8_62, %c0_63], %121 {strides = array<i32>} : memref<12x16x128xf32, #tpu.memory_space<vmem>>, vector<1x8x128xf32>,
    %c8_i32 = arith.constant 8 : i32
    %122 = arith.index_cast %c8_i32 : i32 to index
    %c0_64 = arith.constant 0 : index
    %c0_65 = arith.constant 0 : index
    %123 = vector.load %arg1[%122, %c0_64, %c0_65] : memref<12x16x128xf32, #tpu.memory_space<vmem>>, vector<1x16x128xf32>
    %124 = vector.shape_cast %123 : vector<1x16x128xf32> to vector<16x128xf32>
    %cst_66 = arith.constant dense<0.000000e+00> : vector<16x128xf32>
    %125 = tpu.matmul %0, %124, %cst_66 {dimension_numbers = #tpu.dot_dimension_numbers<[1], [0], [0], [1], [0, 0, 1, 1], [], []>} : vector<16x16xf32>, vector<16x128xf32>, vector<16x128xf32> -> vector<16x128xf32>
    %126 = vector.extract_strided_slice %125 {offsets = [0, 0], sizes = [8, 128], strides = [1, 1]} : vector<16x128xf32> to vector<8x128xf32>
    %127 = arith.index_cast %c8_i32 : i32 to index
    %c0_67 = arith.constant 0 : index
    %c0_68 = arith.constant 0 : index
    %128 = vector.load %arg5[%127, %c0_67, %c0_68] : memref<12x16x128xf32, #tpu.memory_space<vmem>>, vector<1x8x128xf32>
    %129 = vector.shape_cast %128 : vector<1x8x128xf32> to vector<8x128xf32>
    %130 = vector.shape_cast %126 : vector<8x128xf32> to vector<1x8x128xf32>
    tpu.vector_store %arg5[%127, %c0_67, %c0_68], %130 {strides = array<i32>} : memref<12x16x128xf32, #tpu.memory_space<vmem>>, vector<1x8x128xf32>,
    %131 = vector.extract_strided_slice %125 {offsets = [8, 0], sizes = [8, 128], strides = [1, 1]} : vector<16x128xf32> to vector<8x128xf32>
    %c11_i32_69 = arith.constant 11 : i32
    %132 = arith.subi %c11_i32_69, %c8_i32 : i32
    %133 = arith.index_cast %132 : i32 to index
    %c8_70 = arith.constant 8 : index
    %c0_71 = arith.constant 0 : index
    %134 = vector.load %arg5[%133, %c8_70, %c0_71] : memref<12x16x128xf32, #tpu.memory_space<vmem>>, vector<1x8x128xf32>
    %135 = vector.shape_cast %134 : vector<1x8x128xf32> to vector<8x128xf32>
    %136 = vector.shape_cast %131 : vector<8x128xf32> to vector<1x8x128xf32>
    tpu.vector_store %arg5[%133, %c8_70, %c0_71], %136 {strides = array<i32>} : memref<12x16x128xf32, #tpu.memory_space<vmem>>, vector<1x8x128xf32>,
    %c9_i32 = arith.constant 9 : i32
    %137 = arith.index_cast %c9_i32 : i32 to index
    %c0_72 = arith.constant 0 : index
    %c0_73 = arith.constant 0 : index
    %138 = vector.load %arg1[%137, %c0_72, %c0_73] : memref<12x16x128xf32, #tpu.memory_space<vmem>>, vector<1x16x128xf32>
    %139 = vector.shape_cast %138 : vector<1x16x128xf32> to vector<16x128xf32>
    %cst_74 = arith.constant dense<0.000000e+00> : vector<16x128xf32>
    %140 = tpu.matmul %0, %139, %cst_74 {dimension_numbers = #tpu.dot_dimension_numbers<[1], [0], [0], [1], [0, 0, 1, 1], [], []>} : vector<16x16xf32>, vector<16x128xf32>, vector<16x128xf32> -> vector<16x128xf32>
    %141 = vector.extract_strided_slice %140 {offsets = [0, 0], sizes = [8, 128], strides = [1, 1]} : vector<16x128xf32> to vector<8x128xf32>
    %142 = arith.index_cast %c9_i32 : i32 to index
    %c0_75 = arith.constant 0 : index
    %c0_76 = arith.constant 0 : index
    %143 = vector.load %arg5[%142, %c0_75, %c0_76] : memref<12x16x128xf32, #tpu.memory_space<vmem>>, vector<1x8x128xf32>
    %144 = vector.shape_cast %143 : vector<1x8x128xf32> to vector<8x128xf32>
    %145 = vector.shape_cast %141 : vector<8x128xf32> to vector<1x8x128xf32>
    tpu.vector_store %arg5[%142, %c0_75, %c0_76], %145 {strides = array<i32>} : memref<12x16x128xf32, #tpu.memory_space<vmem>>, vector<1x8x128xf32>,
    %146 = vector.extract_strided_slice %140 {offsets = [8, 0], sizes = [8, 128], strides = [1, 1]} : vector<16x128xf32> to vector<8x128xf32>
    %c11_i32_77 = arith.constant 11 : i32
    %147 = arith.subi %c11_i32_77, %c9_i32 : i32
    %148 = arith.index_cast %147 : i32 to index
    %c8_78 = arith.constant 8 : index
    %c0_79 = arith.constant 0 : index
    %149 = vector.load %arg5[%148, %c8_78, %c0_79] : memref<12x16x128xf32, #tpu.memory_space<vmem>>, vector<1x8x128xf32>
    %150 = vector.shape_cast %149 : vector<1x8x128xf32> to vector<8x128xf32>
    %151 = vector.shape_cast %146 : vector<8x128xf32> to vector<1x8x128xf32>
    tpu.vector_store %arg5[%148, %c8_78, %c0_79], %151 {strides = array<i32>} : memref<12x16x128xf32, #tpu.memory_space<vmem>>, vector<1x8x128xf32>,
    %c10_i32 = arith.constant 10 : i32
    %152 = arith.index_cast %c10_i32 : i32 to index
    %c0_80 = arith.constant 0 : index
    %c0_81 = arith.constant 0 : index
    %153 = vector.load %arg1[%152, %c0_80, %c0_81] : memref<12x16x128xf32, #tpu.memory_space<vmem>>, vector<1x16x128xf32>
    %154 = vector.shape_cast %153 : vector<1x16x128xf32> to vector<16x128xf32>
    %cst_82 = arith.constant dense<0.000000e+00> : vector<16x128xf32>
    %155 = tpu.matmul %0, %154, %cst_82 {dimension_numbers = #tpu.dot_dimension_numbers<[1], [0], [0], [1], [0, 0, 1, 1], [], []>} : vector<16x16xf32>, vector<16x128xf32>, vector<16x128xf32> -> vector<16x128xf32>
    %156 = vector.extract_strided_slice %155 {offsets = [0, 0], sizes = [8, 128], strides = [1, 1]} : vector<16x128xf32> to vector<8x128xf32>
    %157 = arith.index_cast %c10_i32 : i32 to index
    %c0_83 = arith.constant 0 : index
    %c0_84 = arith.constant 0 : index
    %158 = vector.load %arg5[%157, %c0_83, %c0_84] : memref<12x16x128xf32, #tpu.memory_space<vmem>>, vector<1x8x128xf32>
    %159 = vector.shape_cast %158 : vector<1x8x128xf32> to vector<8x128xf32>
    %160 = vector.shape_cast %156 : vector<8x128xf32> to vector<1x8x128xf32>
    tpu.vector_store %arg5[%157, %c0_83, %c0_84], %160 {strides = array<i32>} : memref<12x16x128xf32, #tpu.memory_space<vmem>>, vector<1x8x128xf32>,
    %161 = vector.extract_strided_slice %155 {offsets = [8, 0], sizes = [8, 128], strides = [1, 1]} : vector<16x128xf32> to vector<8x128xf32>
    %c11_i32_85 = arith.constant 11 : i32
    %162 = arith.subi %c11_i32_85, %c10_i32 : i32
    %163 = arith.index_cast %162 : i32 to index
    %c8_86 = arith.constant 8 : index
    %c0_87 = arith.constant 0 : index
    %164 = vector.load %arg5[%163, %c8_86, %c0_87] : memref<12x16x128xf32, #tpu.memory_space<vmem>>, vector<1x8x128xf32>
    %165 = vector.shape_cast %164 : vector<1x8x128xf32> to vector<8x128xf32>
    %166 = vector.shape_cast %161 : vector<8x128xf32> to vector<1x8x128xf32>
    tpu.vector_store %arg5[%163, %c8_86, %c0_87], %166 {strides = array<i32>} : memref<12x16x128xf32, #tpu.memory_space<vmem>>, vector<1x8x128xf32>,
    %c11_i32_88 = arith.constant 11 : i32
    %167 = arith.index_cast %c11_i32_88 : i32 to index
    %c0_89 = arith.constant 0 : index
    %c0_90 = arith.constant 0 : index
    %168 = vector.load %arg1[%167, %c0_89, %c0_90] : memref<12x16x128xf32, #tpu.memory_space<vmem>>, vector<1x16x128xf32>
    %169 = vector.shape_cast %168 : vector<1x16x128xf32> to vector<16x128xf32>
    %cst_91 = arith.constant dense<0.000000e+00> : vector<16x128xf32>
    %170 = tpu.matmul %0, %169, %cst_91 {dimension_numbers = #tpu.dot_dimension_numbers<[1], [0], [0], [1], [0, 0, 1, 1], [], []>} : vector<16x16xf32>, vector<16x128xf32>, vector<16x128xf32> -> vector<16x128xf32>
    %171 = vector.extract_strided_slice %170 {offsets = [0, 0], sizes = [8, 128], strides = [1, 1]} : vector<16x128xf32> to vector<8x128xf32>
    %172 = arith.index_cast %c11_i32_88 : i32 to index
    %c0_92 = arith.constant 0 : index
    %c0_93 = arith.constant 0 : index
    %173 = vector.load %arg5[%172, %c0_92, %c0_93] : memref<12x16x128xf32, #tpu.memory_space<vmem>>, vector<1x8x128xf32>
    %174 = vector.shape_cast %173 : vector<1x8x128xf32> to vector<8x128xf32>
    %175 = vector.shape_cast %171 : vector<8x128xf32> to vector<1x8x128xf32>
    tpu.vector_store %arg5[%172, %c0_92, %c0_93], %175 {strides = array<i32>} : memref<12x16x128xf32, #tpu.memory_space<vmem>>, vector<1x8x128xf32>,
    %176 = vector.extract_strided_slice %170 {offsets = [8, 0], sizes = [8, 128], strides = [1, 1]} : vector<16x128xf32> to vector<8x128xf32>
    %c11_i32_94 = arith.constant 11 : i32
    %177 = arith.subi %c11_i32_94, %c11_i32_88 : i32
    %178 = arith.index_cast %177 : i32 to index
    %c8_95 = arith.constant 8 : index
    %c0_96 = arith.constant 0 : index
    %179 = vector.load %arg5[%178, %c8_95, %c0_96] : memref<12x16x128xf32, #tpu.memory_space<vmem>>, vector<1x8x128xf32>
    %180 = vector.shape_cast %179 : vector<1x8x128xf32> to vector<8x128xf32>
    %181 = vector.shape_cast %176 : vector<8x128xf32> to vector<1x8x128xf32>
    tpu.vector_store %arg5[%178, %c8_95, %c0_96], %181 {strides = array<i32>} : memref<12x16x128xf32, #tpu.memory_space<vmem>>, vector<1x8x128xf32>,
    %c12_i32 = arith.constant 12 : i32
    %cst_97 = arith.constant 0.000000e+00 : f32
    %182 = vector.broadcast %cst_97 : f32 to vector<16x128xf32>
    %c0_i32_98 = arith.constant 0 : i32
    %183 = arith.index_cast %c0_i32_98 : i32 to index
    %c0_99 = arith.constant 0 : index
    %c0_100 = arith.constant 0 : index
    %184 = vector.load %arg5[%183, %c0_99, %c0_100] : memref<12x16x128xf32, #tpu.memory_space<vmem>>, vector<1x16x128xf32>
    %185 = vector.shape_cast %184 : vector<1x16x128xf32> to vector<16x128xf32>
    %cst_101 = arith.constant dense<0.000000e+00> : vector<16x128xf32>
    %186 = tpu.matmul %1, %182, %cst_101 {dimension_numbers = #tpu.dot_dimension_numbers<[1], [0], [0], [1], [0, 0, 1, 1], [], []>} : vector<16x16xf32>, vector<16x128xf32>, vector<16x128xf32> -> vector<16x128xf32>
    %187 = arith.addf %185, %186 : vector<16x128xf32>
    %188 = math.tanh %187 : vector<16x128xf32>
    %189 = vector.extract_strided_slice %188 {offsets = [0, 0], sizes = [8, 128], strides = [1, 1]} : vector<16x128xf32> to vector<8x128xf32>
    %190 = arith.index_cast %c0_i32_98 : i32 to index
    %c0_102 = arith.constant 0 : index
    %c0_103 = arith.constant 0 : index
    %191 = vector.load %arg4[%190, %c0_102, %c0_103] : memref<12x16x128xf32, #tpu.memory_space<vmem>>, vector<1x8x128xf32>
    %192 = vector.shape_cast %191 : vector<1x8x128xf32> to vector<8x128xf32>
    %193 = vector.shape_cast %189 : vector<8x128xf32> to vector<1x8x128xf32>
    tpu.vector_store %arg4[%190, %c0_102, %c0_103], %193 {strides = array<i32>} : memref<12x16x128xf32, #tpu.memory_space<vmem>>, vector<1x8x128xf32>,
    %194 = vector.extract_strided_slice %188 {offsets = [8, 0], sizes = [8, 128], strides = [1, 1]} : vector<16x128xf32> to vector<8x128xf32>
    %c11_i32_104 = arith.constant 11 : i32
    %195 = arith.subi %c11_i32_104, %c0_i32_98 : i32
    %196 = arith.index_cast %195 : i32 to index
    %c8_105 = arith.constant 8 : index
    %c0_106 = arith.constant 0 : index
    %197 = vector.load %arg4[%196, %c8_105, %c0_106] : memref<12x16x128xf32, #tpu.memory_space<vmem>>, vector<1x8x128xf32>
    %198 = vector.shape_cast %197 : vector<1x8x128xf32> to vector<8x128xf32>
    %199 = vector.shape_cast %194 : vector<8x128xf32> to vector<1x8x128xf32>
    tpu.vector_store %arg4[%196, %c8_105, %c0_106], %199 {strides = array<i32>} : memref<12x16x128xf32, #tpu.memory_space<vmem>>, vector<1x8x128xf32>,
    %c1_i32_107 = arith.constant 1 : i32
    %200 = arith.index_cast %c1_i32_107 : i32 to index
    %c0_108 = arith.constant 0 : index
    %c0_109 = arith.constant 0 : index
    %201 = vector.load %arg5[%200, %c0_108, %c0_109] : memref<12x16x128xf32, #tpu.memory_space<vmem>>, vector<1x16x128xf32>
    %202 = vector.shape_cast %201 : vector<1x16x128xf32> to vector<16x128xf32>
    %cst_110 = arith.constant dense<0.000000e+00> : vector<16x128xf32>
    %203 = tpu.matmul %1, %188, %cst_110 {dimension_numbers = #tpu.dot_dimension_numbers<[1], [0], [0], [1], [0, 0, 1, 1], [], []>} : vector<16x16xf32>, vector<16x128xf32>, vector<16x128xf32> -> vector<16x128xf32>
    %204 = arith.addf %202, %203 : vector<16x128xf32>
    %205 = math.tanh %204 : vector<16x128xf32>
    %206 = vector.extract_strided_slice %205 {offsets = [0, 0], sizes = [8, 128], strides = [1, 1]} : vector<16x128xf32> to vector<8x128xf32>
    %207 = arith.index_cast %c1_i32_107 : i32 to index
    %c0_111 = arith.constant 0 : index
    %c0_112 = arith.constant 0 : index
    %208 = vector.load %arg4[%207, %c0_111, %c0_112] : memref<12x16x128xf32, #tpu.memory_space<vmem>>, vector<1x8x128xf32>
    %209 = vector.shape_cast %208 : vector<1x8x128xf32> to vector<8x128xf32>
    %210 = vector.shape_cast %206 : vector<8x128xf32> to vector<1x8x128xf32>
    tpu.vector_store %arg4[%207, %c0_111, %c0_112], %210 {strides = array<i32>} : memref<12x16x128xf32, #tpu.memory_space<vmem>>, vector<1x8x128xf32>,
    %211 = vector.extract_strided_slice %205 {offsets = [8, 0], sizes = [8, 128], strides = [1, 1]} : vector<16x128xf32> to vector<8x128xf32>
    %c11_i32_113 = arith.constant 11 : i32
    %212 = arith.subi %c11_i32_113, %c1_i32_107 : i32
    %213 = arith.index_cast %212 : i32 to index
    %c8_114 = arith.constant 8 : index
    %c0_115 = arith.constant 0 : index
    %214 = vector.load %arg4[%213, %c8_114, %c0_115] : memref<12x16x128xf32, #tpu.memory_space<vmem>>, vector<1x8x128xf32>
    %215 = vector.shape_cast %214 : vector<1x8x128xf32> to vector<8x128xf32>
    %216 = vector.shape_cast %211 : vector<8x128xf32> to vector<1x8x128xf32>
    tpu.vector_store %arg4[%213, %c8_114, %c0_115], %216 {strides = array<i32>} : memref<12x16x128xf32, #tpu.memory_space<vmem>>, vector<1x8x128xf32>,
    %c2_i32_116 = arith.constant 2 : i32
    %217 = arith.index_cast %c2_i32_116 : i32 to index
    %c0_117 = arith.constant 0 : index
    %c0_118 = arith.constant 0 : index
    %218 = vector.load %arg5[%217, %c0_117, %c0_118] : memref<12x16x128xf32, #tpu.memory_space<vmem>>, vector<1x16x128xf32>
    %219 = vector.shape_cast %218 : vector<1x16x128xf32> to vector<16x128xf32>
    %cst_119 = arith.constant dense<0.000000e+00> : vector<16x128xf32>
    %220 = tpu.matmul %1, %205, %cst_119 {dimension_numbers = #tpu.dot_dimension_numbers<[1], [0], [0], [1], [0, 0, 1, 1], [], []>} : vector<16x16xf32>, vector<16x128xf32>, vector<16x128xf32> -> vector<16x128xf32>
    %221 = arith.addf %219, %220 : vector<16x128xf32>
    %222 = math.tanh %221 : vector<16x128xf32>
    %223 = vector.extract_strided_slice %222 {offsets = [0, 0], sizes = [8, 128], strides = [1, 1]} : vector<16x128xf32> to vector<8x128xf32>
    %224 = arith.index_cast %c2_i32_116 : i32 to index
    %c0_120 = arith.constant 0 : index
    %c0_121 = arith.constant 0 : index
    %225 = vector.load %arg4[%224, %c0_120, %c0_121] : memref<12x16x128xf32, #tpu.memory_space<vmem>>, vector<1x8x128xf32>
    %226 = vector.shape_cast %225 : vector<1x8x128xf32> to vector<8x128xf32>
    %227 = vector.shape_cast %223 : vector<8x128xf32> to vector<1x8x128xf32>
    tpu.vector_store %arg4[%224, %c0_120, %c0_121], %227 {strides = array<i32>} : memref<12x16x128xf32, #tpu.memory_space<vmem>>, vector<1x8x128xf32>,
    %228 = vector.extract_strided_slice %222 {offsets = [8, 0], sizes = [8, 128], strides = [1, 1]} : vector<16x128xf32> to vector<8x128xf32>
    %c11_i32_122 = arith.constant 11 : i32
    %229 = arith.subi %c11_i32_122, %c2_i32_116 : i32
    %230 = arith.index_cast %229 : i32 to index
    %c8_123 = arith.constant 8 : index
    %c0_124 = arith.constant 0 : index
    %231 = vector.load %arg4[%230, %c8_123, %c0_124] : memref<12x16x128xf32, #tpu.memory_space<vmem>>, vector<1x8x128xf32>
    %232 = vector.shape_cast %231 : vector<1x8x128xf32> to vector<8x128xf32>
    %233 = vector.shape_cast %228 : vector<8x128xf32> to vector<1x8x128xf32>
    tpu.vector_store %arg4[%230, %c8_123, %c0_124], %233 {strides = array<i32>} : memref<12x16x128xf32, #tpu.memory_space<vmem>>, vector<1x8x128xf32>,
    %c3_i32_125 = arith.constant 3 : i32
    %234 = arith.index_cast %c3_i32_125 : i32 to index
    %c0_126 = arith.constant 0 : index
    %c0_127 = arith.constant 0 : index
    %235 = vector.load %arg5[%234, %c0_126, %c0_127] : memref<12x16x128xf32, #tpu.memory_space<vmem>>, vector<1x16x128xf32>
    %236 = vector.shape_cast %235 : vector<1x16x128xf32> to vector<16x128xf32>
    %cst_128 = arith.constant dense<0.000000e+00> : vector<16x128xf32>
    %237 = tpu.matmul %1, %222, %cst_128 {dimension_numbers = #tpu.dot_dimension_numbers<[1], [0], [0], [1], [0, 0, 1, 1], [], []>} : vector<16x16xf32>, vector<16x128xf32>, vector<16x128xf32> -> vector<16x128xf32>
    %238 = arith.addf %236, %237 : vector<16x128xf32>
    %239 = math.tanh %238 : vector<16x128xf32>
    %240 = vector.extract_strided_slice %239 {offsets = [0, 0], sizes = [8, 128], strides = [1, 1]} : vector<16x128xf32> to vector<8x128xf32>
    %241 = arith.index_cast %c3_i32_125 : i32 to index
    %c0_129 = arith.constant 0 : index
    %c0_130 = arith.constant 0 : index
    %242 = vector.load %arg4[%241, %c0_129, %c0_130] : memref<12x16x128xf32, #tpu.memory_space<vmem>>, vector<1x8x128xf32>
    %243 = vector.shape_cast %242 : vector<1x8x128xf32> to vector<8x128xf32>
    %244 = vector.shape_cast %240 : vector<8x128xf32> to vector<1x8x128xf32>
    tpu.vector_store %arg4[%241, %c0_129, %c0_130], %244 {strides = array<i32>} : memref<12x16x128xf32, #tpu.memory_space<vmem>>, vector<1x8x128xf32>,
    %245 = vector.extract_strided_slice %239 {offsets = [8, 0], sizes = [8, 128], strides = [1, 1]} : vector<16x128xf32> to vector<8x128xf32>
    %c11_i32_131 = arith.constant 11 : i32
    %246 = arith.subi %c11_i32_131, %c3_i32_125 : i32
    %247 = arith.index_cast %246 : i32 to index
    %c8_132 = arith.constant 8 : index
    %c0_133 = arith.constant 0 : index
    %248 = vector.load %arg4[%247, %c8_132, %c0_133] : memref<12x16x128xf32, #tpu.memory_space<vmem>>, vector<1x8x128xf32>
    %249 = vector.shape_cast %248 : vector<1x8x128xf32> to vector<8x128xf32>
    %250 = vector.shape_cast %245 : vector<8x128xf32> to vector<1x8x128xf32>
    tpu.vector_store %arg4[%247, %c8_132, %c0_133], %250 {strides = array<i32>} : memref<12x16x128xf32, #tpu.memory_space<vmem>>, vector<1x8x128xf32>,
    %c4_i32_134 = arith.constant 4 : i32
    %251 = arith.index_cast %c4_i32_134 : i32 to index
    %c0_135 = arith.constant 0 : index
    %c0_136 = arith.constant 0 : index
    %252 = vector.load %arg5[%251, %c0_135, %c0_136] : memref<12x16x128xf32, #tpu.memory_space<vmem>>, vector<1x16x128xf32>
    %253 = vector.shape_cast %252 : vector<1x16x128xf32> to vector<16x128xf32>
    %cst_137 = arith.constant dense<0.000000e+00> : vector<16x128xf32>
    %254 = tpu.matmul %1, %239, %cst_137 {dimension_numbers = #tpu.dot_dimension_numbers<[1], [0], [0], [1], [0, 0, 1, 1], [], []>} : vector<16x16xf32>, vector<16x128xf32>, vector<16x128xf32> -> vector<16x128xf32>
    %255 = arith.addf %253, %254 : vector<16x128xf32>
    %256 = math.tanh %255 : vector<16x128xf32>
    %257 = vector.extract_strided_slice %256 {offsets = [0, 0], sizes = [8, 128], strides = [1, 1]} : vector<16x128xf32> to vector<8x128xf32>
    %258 = arith.index_cast %c4_i32_134 : i32 to index
    %c0_138 = arith.constant 0 : index
    %c0_139 = arith.constant 0 : index
    %259 = vector.load %arg4[%258, %c0_138, %c0_139] : memref<12x16x128xf32, #tpu.memory_space<vmem>>, vector<1x8x128xf32>
    %260 = vector.shape_cast %259 : vector<1x8x128xf32> to vector<8x128xf32>
    %261 = vector.shape_cast %257 : vector<8x128xf32> to vector<1x8x128xf32>
    tpu.vector_store %arg4[%258, %c0_138, %c0_139], %261 {strides = array<i32>} : memref<12x16x128xf32, #tpu.memory_space<vmem>>, vector<1x8x128xf32>,
    %262 = vector.extract_strided_slice %256 {offsets = [8, 0], sizes = [8, 128], strides = [1, 1]} : vector<16x128xf32> to vector<8x128xf32>
    %c11_i32_140 = arith.constant 11 : i32
    %263 = arith.subi %c11_i32_140, %c4_i32_134 : i32
    %264 = arith.index_cast %263 : i32 to index
    %c8_141 = arith.constant 8 : index
    %c0_142 = arith.constant 0 : index
    %265 = vector.load %arg4[%264, %c8_141, %c0_142] : memref<12x16x128xf32, #tpu.memory_space<vmem>>, vector<1x8x128xf32>
    %266 = vector.shape_cast %265 : vector<1x8x128xf32> to vector<8x128xf32>
    %267 = vector.shape_cast %262 : vector<8x128xf32> to vector<1x8x128xf32>
    tpu.vector_store %arg4[%264, %c8_141, %c0_142], %267 {strides = array<i32>} : memref<12x16x128xf32, #tpu.memory_space<vmem>>, vector<1x8x128xf32>,
    %c5_i32_143 = arith.constant 5 : i32
    %268 = arith.index_cast %c5_i32_143 : i32 to index
    %c0_144 = arith.constant 0 : index
    %c0_145 = arith.constant 0 : index
    %269 = vector.load %arg5[%268, %c0_144, %c0_145] : memref<12x16x128xf32, #tpu.memory_space<vmem>>, vector<1x16x128xf32>
    %270 = vector.shape_cast %269 : vector<1x16x128xf32> to vector<16x128xf32>
    %cst_146 = arith.constant dense<0.000000e+00> : vector<16x128xf32>
    %271 = tpu.matmul %1, %256, %cst_146 {dimension_numbers = #tpu.dot_dimension_numbers<[1], [0], [0], [1], [0, 0, 1, 1], [], []>} : vector<16x16xf32>, vector<16x128xf32>, vector<16x128xf32> -> vector<16x128xf32>
    %272 = arith.addf %270, %271 : vector<16x128xf32>
    %273 = math.tanh %272 : vector<16x128xf32>
    %274 = vector.extract_strided_slice %273 {offsets = [0, 0], sizes = [8, 128], strides = [1, 1]} : vector<16x128xf32> to vector<8x128xf32>
    %275 = arith.index_cast %c5_i32_143 : i32 to index
    %c0_147 = arith.constant 0 : index
    %c0_148 = arith.constant 0 : index
    %276 = vector.load %arg4[%275, %c0_147, %c0_148] : memref<12x16x128xf32, #tpu.memory_space<vmem>>, vector<1x8x128xf32>
    %277 = vector.shape_cast %276 : vector<1x8x128xf32> to vector<8x128xf32>
    %278 = vector.shape_cast %274 : vector<8x128xf32> to vector<1x8x128xf32>
    tpu.vector_store %arg4[%275, %c0_147, %c0_148], %278 {strides = array<i32>} : memref<12x16x128xf32, #tpu.memory_space<vmem>>, vector<1x8x128xf32>,
    %279 = vector.extract_strided_slice %273 {offsets = [8, 0], sizes = [8, 128], strides = [1, 1]} : vector<16x128xf32> to vector<8x128xf32>
    %c11_i32_149 = arith.constant 11 : i32
    %280 = arith.subi %c11_i32_149, %c5_i32_143 : i32
    %281 = arith.index_cast %280 : i32 to index
    %c8_150 = arith.constant 8 : index
    %c0_151 = arith.constant 0 : index
    %282 = vector.load %arg4[%281, %c8_150, %c0_151] : memref<12x16x128xf32, #tpu.memory_space<vmem>>, vector<1x8x128xf32>
    %283 = vector.shape_cast %282 : vector<1x8x128xf32> to vector<8x128xf32>
    %284 = vector.shape_cast %279 : vector<8x128xf32> to vector<1x8x128xf32>
    tpu.vector_store %arg4[%281, %c8_150, %c0_151], %284 {strides = array<i32>} : memref<12x16x128xf32, #tpu.memory_space<vmem>>, vector<1x8x128xf32>,
    %c6_i32_152 = arith.constant 6 : i32
    %285 = arith.index_cast %c6_i32_152 : i32 to index
    %c0_153 = arith.constant 0 : index
    %c0_154 = arith.constant 0 : index
    %286 = vector.load %arg5[%285, %c0_153, %c0_154] : memref<12x16x128xf32, #tpu.memory_space<vmem>>, vector<1x16x128xf32>
    %287 = vector.shape_cast %286 : vector<1x16x128xf32> to vector<16x128xf32>
    %cst_155 = arith.constant dense<0.000000e+00> : vector<16x128xf32>
    %288 = tpu.matmul %1, %273, %cst_155 {dimension_numbers = #tpu.dot_dimension_numbers<[1], [0], [0], [1], [0, 0, 1, 1], [], []>} : vector<16x16xf32>, vector<16x128xf32>, vector<16x128xf32> -> vector<16x128xf32>
    %289 = arith.addf %287, %288 : vector<16x128xf32>
    %290 = math.tanh %289 : vector<16x128xf32>
    %291 = vector.extract_strided_slice %290 {offsets = [0, 0], sizes = [8, 128], strides = [1, 1]} : vector<16x128xf32> to vector<8x128xf32>
    %292 = arith.index_cast %c6_i32_152 : i32 to index
    %c0_156 = arith.constant 0 : index
    %c0_157 = arith.constant 0 : index
    %293 = vector.load %arg4[%292, %c0_156, %c0_157] : memref<12x16x128xf32, #tpu.memory_space<vmem>>, vector<1x8x128xf32>
    %294 = vector.shape_cast %293 : vector<1x8x128xf32> to vector<8x128xf32>
    %295 = vector.shape_cast %291 : vector<8x128xf32> to vector<1x8x128xf32>
    tpu.vector_store %arg4[%292, %c0_156, %c0_157], %295 {strides = array<i32>} : memref<12x16x128xf32, #tpu.memory_space<vmem>>, vector<1x8x128xf32>,
    %296 = vector.extract_strided_slice %290 {offsets = [8, 0], sizes = [8, 128], strides = [1, 1]} : vector<16x128xf32> to vector<8x128xf32>
    %c11_i32_158 = arith.constant 11 : i32
    %297 = arith.subi %c11_i32_158, %c6_i32_152 : i32
    %298 = arith.index_cast %297 : i32 to index
    %c8_159 = arith.constant 8 : index
    %c0_160 = arith.constant 0 : index
    %299 = vector.load %arg4[%298, %c8_159, %c0_160] : memref<12x16x128xf32, #tpu.memory_space<vmem>>, vector<1x8x128xf32>
    %300 = vector.shape_cast %299 : vector<1x8x128xf32> to vector<8x128xf32>
    %301 = vector.shape_cast %296 : vector<8x128xf32> to vector<1x8x128xf32>
    tpu.vector_store %arg4[%298, %c8_159, %c0_160], %301 {strides = array<i32>} : memref<12x16x128xf32, #tpu.memory_space<vmem>>, vector<1x8x128xf32>,
    %c7_i32_161 = arith.constant 7 : i32
    %302 = arith.index_cast %c7_i32_161 : i32 to index
    %c0_162 = arith.constant 0 : index
    %c0_163 = arith.constant 0 : index
    %303 = vector.load %arg5[%302, %c0_162, %c0_163] : memref<12x16x128xf32, #tpu.memory_space<vmem>>, vector<1x16x128xf32>
    %304 = vector.shape_cast %303 : vector<1x16x128xf32> to vector<16x128xf32>
    %cst_164 = arith.constant dense<0.000000e+00> : vector<16x128xf32>
    %305 = tpu.matmul %1, %290, %cst_164 {dimension_numbers = #tpu.dot_dimension_numbers<[1], [0], [0], [1], [0, 0, 1, 1], [], []>} : vector<16x16xf32>, vector<16x128xf32>, vector<16x128xf32> -> vector<16x128xf32>
    %306 = arith.addf %304, %305 : vector<16x128xf32>
    %307 = math.tanh %306 : vector<16x128xf32>
    %308 = vector.extract_strided_slice %307 {offsets = [0, 0], sizes = [8, 128], strides = [1, 1]} : vector<16x128xf32> to vector<8x128xf32>
    %309 = arith.index_cast %c7_i32_161 : i32 to index
    %c0_165 = arith.constant 0 : index
    %c0_166 = arith.constant 0 : index
    %310 = vector.load %arg4[%309, %c0_165, %c0_166] : memref<12x16x128xf32, #tpu.memory_space<vmem>>, vector<1x8x128xf32>
    %311 = vector.shape_cast %310 : vector<1x8x128xf32> to vector<8x128xf32>
    %312 = vector.shape_cast %308 : vector<8x128xf32> to vector<1x8x128xf32>
    tpu.vector_store %arg4[%309, %c0_165, %c0_166], %312 {strides = array<i32>} : memref<12x16x128xf32, #tpu.memory_space<vmem>>, vector<1x8x128xf32>,
    %313 = vector.extract_strided_slice %307 {offsets = [8, 0], sizes = [8, 128], strides = [1, 1]} : vector<16x128xf32> to vector<8x128xf32>
    %c11_i32_167 = arith.constant 11 : i32
    %314 = arith.subi %c11_i32_167, %c7_i32_161 : i32
    %315 = arith.index_cast %314 : i32 to index
    %c8_168 = arith.constant 8 : index
    %c0_169 = arith.constant 0 : index
    %316 = vector.load %arg4[%315, %c8_168, %c0_169] : memref<12x16x128xf32, #tpu.memory_space<vmem>>, vector<1x8x128xf32>
    %317 = vector.shape_cast %316 : vector<1x8x128xf32> to vector<8x128xf32>
    %318 = vector.shape_cast %313 : vector<8x128xf32> to vector<1x8x128xf32>
    tpu.vector_store %arg4[%315, %c8_168, %c0_169], %318 {strides = array<i32>} : memref<12x16x128xf32, #tpu.memory_space<vmem>>, vector<1x8x128xf32>,
    %c8_i32_170 = arith.constant 8 : i32
    %319 = arith.index_cast %c8_i32_170 : i32 to index
    %c0_171 = arith.constant 0 : index
    %c0_172 = arith.constant 0 : index
    %320 = vector.load %arg5[%319, %c0_171, %c0_172] : memref<12x16x128xf32, #tpu.memory_space<vmem>>, vector<1x16x128xf32>
    %321 = vector.shape_cast %320 : vector<1x16x128xf32> to vector<16x128xf32>
    %cst_173 = arith.constant dense<0.000000e+00> : vector<16x128xf32>
    %322 = tpu.matmul %1, %307, %cst_173 {dimension_numbers = #tpu.dot_dimension_numbers<[1], [0], [0], [1], [0, 0, 1, 1], [], []>} : vector<16x16xf32>, vector<16x128xf32>, vector<16x128xf32> -> vector<16x128xf32>
    %323 = arith.addf %321, %322 : vector<16x128xf32>
    %324 = math.tanh %323 : vector<16x128xf32>
    %325 = vector.extract_strided_slice %324 {offsets = [0, 0], sizes = [8, 128], strides = [1, 1]} : vector<16x128xf32> to vector<8x128xf32>
    %326 = arith.index_cast %c8_i32_170 : i32 to index
    %c0_174 = arith.constant 0 : index
    %c0_175 = arith.constant 0 : index
    %327 = vector.load %arg4[%326, %c0_174, %c0_175] : memref<12x16x128xf32, #tpu.memory_space<vmem>>, vector<1x8x128xf32>
    %328 = vector.shape_cast %327 : vector<1x8x128xf32> to vector<8x128xf32>
    %329 = vector.shape_cast %325 : vector<8x128xf32> to vector<1x8x128xf32>
    tpu.vector_store %arg4[%326, %c0_174, %c0_175], %329 {strides = array<i32>} : memref<12x16x128xf32, #tpu.memory_space<vmem>>, vector<1x8x128xf32>,
    %330 = vector.extract_strided_slice %324 {offsets = [8, 0], sizes = [8, 128], strides = [1, 1]} : vector<16x128xf32> to vector<8x128xf32>
    %c11_i32_176 = arith.constant 11 : i32
    %331 = arith.subi %c11_i32_176, %c8_i32_170 : i32
    %332 = arith.index_cast %331 : i32 to index
    %c8_177 = arith.constant 8 : index
    %c0_178 = arith.constant 0 : index
    %333 = vector.load %arg4[%332, %c8_177, %c0_178] : memref<12x16x128xf32, #tpu.memory_space<vmem>>, vector<1x8x128xf32>
    %334 = vector.shape_cast %333 : vector<1x8x128xf32> to vector<8x128xf32>
    %335 = vector.shape_cast %330 : vector<8x128xf32> to vector<1x8x128xf32>
    tpu.vector_store %arg4[%332, %c8_177, %c0_178], %335 {strides = array<i32>} : memref<12x16x128xf32, #tpu.memory_space<vmem>>, vector<1x8x128xf32>,
    %c9_i32_179 = arith.constant 9 : i32
    %336 = arith.index_cast %c9_i32_179 : i32 to index
    %c0_180 = arith.constant 0 : index
    %c0_181 = arith.constant 0 : index
    %337 = vector.load %arg5[%336, %c0_180, %c0_181] : memref<12x16x128xf32, #tpu.memory_space<vmem>>, vector<1x16x128xf32>
    %338 = vector.shape_cast %337 : vector<1x16x128xf32> to vector<16x128xf32>
    %cst_182 = arith.constant dense<0.000000e+00> : vector<16x128xf32>
    %339 = tpu.matmul %1, %324, %cst_182 {dimension_numbers = #tpu.dot_dimension_numbers<[1], [0], [0], [1], [0, 0, 1, 1], [], []>} : vector<16x16xf32>, vector<16x128xf32>, vector<16x128xf32> -> vector<16x128xf32>
    %340 = arith.addf %338, %339 : vector<16x128xf32>
    %341 = math.tanh %340 : vector<16x128xf32>
    %342 = vector.extract_strided_slice %341 {offsets = [0, 0], sizes = [8, 128], strides = [1, 1]} : vector<16x128xf32> to vector<8x128xf32>
    %343 = arith.index_cast %c9_i32_179 : i32 to index
    %c0_183 = arith.constant 0 : index
    %c0_184 = arith.constant 0 : index
    %344 = vector.load %arg4[%343, %c0_183, %c0_184] : memref<12x16x128xf32, #tpu.memory_space<vmem>>, vector<1x8x128xf32>
    %345 = vector.shape_cast %344 : vector<1x8x128xf32> to vector<8x128xf32>
    %346 = vector.shape_cast %342 : vector<8x128xf32> to vector<1x8x128xf32>
    tpu.vector_store %arg4[%343, %c0_183, %c0_184], %346 {strides = array<i32>} : memref<12x16x128xf32, #tpu.memory_space<vmem>>, vector<1x8x128xf32>,
    %347 = vector.extract_strided_slice %341 {offsets = [8, 0], sizes = [8, 128], strides = [1, 1]} : vector<16x128xf32> to vector<8x128xf32>
    %c11_i32_185 = arith.constant 11 : i32
    %348 = arith.subi %c11_i32_185, %c9_i32_179 : i32
    %349 = arith.index_cast %348 : i32 to index
    %c8_186 = arith.constant 8 : index
    %c0_187 = arith.constant 0 : index
    %350 = vector.load %arg4[%349, %c8_186, %c0_187] : memref<12x16x128xf32, #tpu.memory_space<vmem>>, vector<1x8x128xf32>
    %351 = vector.shape_cast %350 : vector<1x8x128xf32> to vector<8x128xf32>
    %352 = vector.shape_cast %347 : vector<8x128xf32> to vector<1x8x128xf32>
    tpu.vector_store %arg4[%349, %c8_186, %c0_187], %352 {strides = array<i32>} : memref<12x16x128xf32, #tpu.memory_space<vmem>>, vector<1x8x128xf32>,
    %c10_i32_188 = arith.constant 10 : i32
    %353 = arith.index_cast %c10_i32_188 : i32 to index
    %c0_189 = arith.constant 0 : index
    %c0_190 = arith.constant 0 : index
    %354 = vector.load %arg5[%353, %c0_189, %c0_190] : memref<12x16x128xf32, #tpu.memory_space<vmem>>, vector<1x16x128xf32>
    %355 = vector.shape_cast %354 : vector<1x16x128xf32> to vector<16x128xf32>
    %cst_191 = arith.constant dense<0.000000e+00> : vector<16x128xf32>
    %356 = tpu.matmul %1, %341, %cst_191 {dimension_numbers = #tpu.dot_dimension_numbers<[1], [0], [0], [1], [0, 0, 1, 1], [], []>} : vector<16x16xf32>, vector<16x128xf32>, vector<16x128xf32> -> vector<16x128xf32>
    %357 = arith.addf %355, %356 : vector<16x128xf32>
    %358 = math.tanh %357 : vector<16x128xf32>
    %359 = vector.extract_strided_slice %358 {offsets = [0, 0], sizes = [8, 128], strides = [1, 1]} : vector<16x128xf32> to vector<8x128xf32>
    %360 = arith.index_cast %c10_i32_188 : i32 to index
    %c0_192 = arith.constant 0 : index
    %c0_193 = arith.constant 0 : index
    %361 = vector.load %arg4[%360, %c0_192, %c0_193] : memref<12x16x128xf32, #tpu.memory_space<vmem>>, vector<1x8x128xf32>
    %362 = vector.shape_cast %361 : vector<1x8x128xf32> to vector<8x128xf32>
    %363 = vector.shape_cast %359 : vector<8x128xf32> to vector<1x8x128xf32>
    tpu.vector_store %arg4[%360, %c0_192, %c0_193], %363 {strides = array<i32>} : memref<12x16x128xf32, #tpu.memory_space<vmem>>, vector<1x8x128xf32>,
    %364 = vector.extract_strided_slice %358 {offsets = [8, 0], sizes = [8, 128], strides = [1, 1]} : vector<16x128xf32> to vector<8x128xf32>
    %c11_i32_194 = arith.constant 11 : i32
    %365 = arith.subi %c11_i32_194, %c10_i32_188 : i32
    %366 = arith.index_cast %365 : i32 to index
    %c8_195 = arith.constant 8 : index
    %c0_196 = arith.constant 0 : index
    %367 = vector.load %arg4[%366, %c8_195, %c0_196] : memref<12x16x128xf32, #tpu.memory_space<vmem>>, vector<1x8x128xf32>
    %368 = vector.shape_cast %367 : vector<1x8x128xf32> to vector<8x128xf32>
    %369 = vector.shape_cast %364 : vector<8x128xf32> to vector<1x8x128xf32>
    tpu.vector_store %arg4[%366, %c8_195, %c0_196], %369 {strides = array<i32>} : memref<12x16x128xf32, #tpu.memory_space<vmem>>, vector<1x8x128xf32>,
    %c11_i32_197 = arith.constant 11 : i32
    %370 = arith.index_cast %c11_i32_197 : i32 to index
    %c0_198 = arith.constant 0 : index
    %c0_199 = arith.constant 0 : index
    %371 = vector.load %arg5[%370, %c0_198, %c0_199] : memref<12x16x128xf32, #tpu.memory_space<vmem>>, vector<1x16x128xf32>
    %372 = vector.shape_cast %371 : vector<1x16x128xf32> to vector<16x128xf32>
    %cst_200 = arith.constant dense<0.000000e+00> : vector<16x128xf32>
    %373 = tpu.matmul %1, %358, %cst_200 {dimension_numbers = #tpu.dot_dimension_numbers<[1], [0], [0], [1], [0, 0, 1, 1], [], []>} : vector<16x16xf32>, vector<16x128xf32>, vector<16x128xf32> -> vector<16x128xf32>
    %374 = arith.addf %372, %373 : vector<16x128xf32>
    %375 = math.tanh %374 : vector<16x128xf32>
    %376 = vector.extract_strided_slice %375 {offsets = [0, 0], sizes = [8, 128], strides = [1, 1]} : vector<16x128xf32> to vector<8x128xf32>
    %377 = arith.index_cast %c11_i32_197 : i32 to index
    %c0_201 = arith.constant 0 : index
    %c0_202 = arith.constant 0 : index
    %378 = vector.load %arg4[%377, %c0_201, %c0_202] : memref<12x16x128xf32, #tpu.memory_space<vmem>>, vector<1x8x128xf32>
    %379 = vector.shape_cast %378 : vector<1x8x128xf32> to vector<8x128xf32>
    %380 = vector.shape_cast %376 : vector<8x128xf32> to vector<1x8x128xf32>
    tpu.vector_store %arg4[%377, %c0_201, %c0_202], %380 {strides = array<i32>} : memref<12x16x128xf32, #tpu.memory_space<vmem>>, vector<1x8x128xf32>,
    %381 = vector.extract_strided_slice %375 {offsets = [8, 0], sizes = [8, 128], strides = [1, 1]} : vector<16x128xf32> to vector<8x128xf32>
    %c11_i32_203 = arith.constant 11 : i32
    %382 = arith.subi %c11_i32_203, %c11_i32_197 : i32
    %383 = arith.index_cast %382 : i32 to index
    %c8_204 = arith.constant 8 : index
    %c0_205 = arith.constant 0 : index
    %384 = vector.load %arg4[%383, %c8_204, %c0_205] : memref<12x16x128xf32, #tpu.memory_space<vmem>>, vector<1x8x128xf32>
    %385 = vector.shape_cast %384 : vector<1x8x128xf32> to vector<8x128xf32>
    %386 = vector.shape_cast %381 : vector<8x128xf32> to vector<1x8x128xf32>
    tpu.vector_store %arg4[%383, %c8_204, %c0_205], %386 {strides = array<i32>} : memref<12x16x128xf32, #tpu.memory_space<vmem>>, vector<1x8x128xf32>,
    %c12_i32_206 = arith.constant 12 : i32
    return
  }
  func.func @transform_0(%arg0: i32) -> (i32, i32, i32) {
    %c0_i32 = arith.constant 0 : i32
    %c0_i32_0 = arith.constant 0 : i32
    %c0_i32_1 = arith.constant 0 : i32
    return %c0_i32, %c0_i32_0, %arg0 : i32, i32, i32
  }
  func.func @transform_1(%arg0: i32) -> (i32, i32) {
    %c0_i32 = arith.constant 0 : i32
    %c0_i32_0 = arith.constant 0 : i32
    %c0_i32_1 = arith.constant 0 : i32
    return %c0_i32, %c0_i32_0 : i32, i32
  }
  func.func @transform_2(%arg0: i32) -> (i32, i32) {
    %c0_i32 = arith.constant 0 : i32
    %c0_i32_0 = arith.constant 0 : i32
    %c0_i32_1 = arith.constant 0 : i32
    return %c0_i32, %c0_i32_0 : i32, i32
  }
  func.func @transform_3(%arg0: i32) -> (i32, i32, i32) {
    %c0_i32 = arith.constant 0 : i32
    %c0_i32_0 = arith.constant 0 : i32
    %c0_i32_1 = arith.constant 0 : i32
    return %c0_i32, %c0_i32_0, %arg0 : i32, i32, i32
  }
}

</mosaic_0001>

<llo_original>
// kernel: tpu_custom_call.1
$region0: #{tpu_custom_call.1}
  #allocation0 [shape = 'u32[]', space=smem, size = 0x4, offset = 0x4, fixed_abs, tag = 'smem constant byte address 0x4 - core index']
  #allocation1 [shape = 'u32[144,128]{1,0:T(1,128)}', space=vmem, size = 0x12000, scoped, tag = 'internal scratch']
  #allocation2 [shape = 'f32[12,16,128]{2,1,0:T(8,128)}', space=vmem, size = 0x18000, scoped, tag = 'scratch operand']
  %s0 = inlined_call_operand.hbm [shape: f32[12,16,128], index: 0, kind: input, shape index: {}]
  %s1 = inlined_call_operand.hbm [shape: f32[16,16], index: 1, kind: input, shape index: {}]
  %s2 = inlined_call_operand.hbm [shape: f32[16,16], index: 2, kind: input, shape index: {}]
  %s3 = inlined_call_operand.hbm [shape: f32[12,16,128], index: 3, kind: output, shape index: {}]
  %s4 = sld [smem:[#allocation0]]
  $region34: #{tpu_custom_call.1} parent=0
    _
  %s6 = ssub.s32 1, %s4
  %s7 = scalar_select 0, %s6, %s4
  $region1: #{tpu_custom_call.1} parent=0
    #allocation3 [shape = 'u8[98304]{0}', space=vmem, size = 0x18000, scoped, tag = 'input window, operand 0, single buffered']
    #allocation4 [shape = 's32[1]{0}', space=sflag, size = 0x4, scoped, tag = 'scoped memory for tpu_custom_call.1']
    #allocation5 [shape = 's32[1]{0}', space=sflag, size = 0x4, scoped, tag = 'scoped memory for tpu_custom_call.1']
    #allocation6 [shape = 'u8[8192]{0}', space=vmem, size = 0x2000, scoped, tag = 'input window, operand 1, single buffered']
    #allocation7 [shape = 's32[1]{0}', space=sflag, size = 0x4, scoped, tag = 'scoped memory for tpu_custom_call.1']
    #allocation8 [shape = 'u8[8192]{0}', space=vmem, size = 0x2000, scoped, tag = 'input window, operand 2, single buffered']
    #allocation9 [shape = 'u8[98304]{0}', space=vmem, size = 0x18000, scoped, tag = 'output window, operand 0, single buffered']
    %8 = vsyncpa [#allocation4], 0
    %9 = vsyncpa [#allocation7], 0
    %10 = vsyncpa [#allocation5], 0
    // Predicated region
    $region2: #{tpu_custom_call.1} parent=1 // pred_check
      _
    $region3: #{tpu_custom_call.1} parent=1 // pred_check_branch
      %12 = sbr.rel (0) target = $region5
    $region4: #{tpu_custom_call.1} parent=1 // pred_region
      %s14 = ssub.s32 3072, 3072
      %15 = vsyncadd [#allocation4], %s14
      %s16 = sshll.u32 [#allocation3], 4
      %s17 = int_to_ptr.vmem [resolvable:$true] %s16
      %22 = dma.hbm_to_vmem [thread:$0]  %s0, 3072, %s17, [#allocation4], 128, 128, 8
    $region5: #{tpu_custom_call.1} parent=1 // pred_fallthru
      _
    // Predicated region
    $region6: #{tpu_custom_call.1} parent=1 // pred_check
      _
    $region7: #{tpu_custom_call.1} parent=1 // pred_check_branch
      %24 = sbr.rel (0) target = $region9
    $region8: #{tpu_custom_call.1} parent=1 // pred_region
      %s26 = ssub.s32 256, 256
      %27 = vsyncadd [#allocation7], %s26
      %s28 = sshll.u32 [#allocation6], 4
      %s29 = int_to_ptr.vmem [resolvable:$true] %s28
      %34 = dma.hbm_to_vmem [thread:$0]  %s1, 256, %s29, [#allocation7], 128, 128, 8
    $region9: #{tpu_custom_call.1} parent=1 // pred_fallthru
      _
    // Predicated region
    $region10: #{tpu_custom_call.1} parent=1 // pred_check
      _
    $region11: #{tpu_custom_call.1} parent=1 // pred_check_branch
      %36 = sbr.rel (0) target = $region13
    $region12: #{tpu_custom_call.1} parent=1 // pred_region
      %s38 = ssub.s32 256, 256
      %39 = vsyncadd [#allocation7], %s38
      %s40 = sshll.u32 [#allocation8], 4
      %s41 = int_to_ptr.vmem [resolvable:$true] %s40
      %46 = dma.hbm_to_vmem [thread:$0]  %s2, 256, %s41, [#allocation7], 128, 128, 8
    $region13: #{tpu_custom_call.1} parent=1 // pred_fallthru
      _
    // Predicated region
    $region14: #{tpu_custom_call.1} parent=1 // pred_check
      _
    $region15: #{tpu_custom_call.1} parent=1 // pred_check_branch
      %48 = sbr.rel (0) target = $region17
    $region16: #{tpu_custom_call.1} parent=1 // pred_region
      %49 = dma.done [#allocation4], 3072
    $region17: #{tpu_custom_call.1} parent=1 // pred_fallthru
      _
    // Predicated region
    $region18: #{tpu_custom_call.1} parent=1 // pred_check
      _
    $region19: #{tpu_custom_call.1} parent=1 // pred_check_branch
      %51 = sbr.rel (0) target = $region21
    $region20: #{tpu_custom_call.1} parent=1 // pred_region
      %52 = dma.done [#allocation7], 256
    $region21: #{tpu_custom_call.1} parent=1 // pred_fallthru
      _
    // Predicated region
    $region22: #{tpu_custom_call.1} parent=1 // pred_check
      _
    $region23: #{tpu_custom_call.1} parent=1 // pred_check_branch
      %54 = sbr.rel (0) target = $region25
    $region24: #{tpu_custom_call.1} parent=1 // pred_region
      %55 = dma.done [#allocation7], 256
    $region25: #{tpu_custom_call.1} parent=1 // pred_fallthru
      _
    %v56 = vld [vmem:[#allocation6] sm:$0xff]
    %v57 = vld [vmem:[#allocation6 + $0x8] sm:$0xff]
    %v58 = vld [vmem:[#allocation8] sm:$0xff]
    %v59 = vld [vmem:[#allocation8 + $0x8] sm:$0xff]
    %v60 = vld [vmem:[#allocation3] sm:$0xff]
    %v61 = vld [vmem:[#allocation3 + $0x8] sm:$0xff]
    %vm62 = vcmask 130048
    %v64 = vsel %vm62, %v56, 0
    %v67 = vsel %vm62, %v57, 0
    %69 = vmatprep.subr.mxu0 0.0
    %70 = vmatpush1.msra.mxu0 0.0
    %71 = vmatprep.subr.mxu0 0.0
    %72 = vmatpush1.msra.mxu0 0.0
    %73 = vmatprep.subr.mxu0 0.0
    %74 = vmatpush1.msra.mxu0 0.0
    %75 = vmatprep.subr.mxu0 0.0
    %76 = vmatpush1.msra.mxu0 0.0
    %77 = vmatprep.subr.mxu0 0.0
    %78 = vmatpush1.msra.mxu0 0.0
    %79 = vmatprep.subr.mxu0 0.0
    %80 = vmatpush1.msra.mxu0 0.0
    %81 = vmatprep.subr.mxu0 0.0
    %82 = vmatpush1.msra.mxu0 0.0
    %83 = vmatprep.subr.mxu0 0.0
    %84 = vmatpush1.msra.mxu0 0.0
    %85 = vmatprep.subr.mxu0 0.0
    %86 = vmatpush1.msra.mxu0 0.0
    %87 = vmatprep.subr.mxu0 0.0
    %88 = vmatpush1.msra.mxu0 0.0
    %89 = vmatprep.subr.mxu0 0.0
    %90 = vmatpush1.msra.mxu0 0.0
    %91 = vmatprep.subr.mxu0 0.0
    %92 = vmatpush1.msra.mxu0 0.0
    %93 = vmatprep.subr.mxu0 0.0
    %94 = vmatpush1.msra.mxu0 0.0
    %95 = vmatprep.subr.mxu0 0.0
    %96 = vmatpush1.msra.mxu0 0.0
    %97 = vmatprep.subr.mxu0 0.0
    %98 = vmatpush1.msra.mxu0 %v61
    %99 = vmatprep.subr.mxu0 0.0
    %100 = vmatpush1.msra.mxu0 %v60
    %101 = vmatprep.subr.mxu0 0.0
    %102 = vmatpush2.msra.mxu0 0.0
    %103 = vmatprep.subr.mxu0 0.0
    %104 = vmatpush2.msra.mxu0 0.0
    %105 = vmatprep.subr.mxu0 0.0
    %106 = vmatpush2.msra.mxu0 0.0
    %107 = vmatprep.subr.mxu0 0.0
    %108 = vmatpush2.msra.mxu0 0.0
    %109 = vmatprep.subr.mxu0 0.0
    %110 = vmatpush2.msra.mxu0 0.0
    %111 = vmatprep.subr.mxu0 0.0
    %112 = vmatpush2.msra.mxu0 0.0
    %113 = vmatprep.subr.mxu0 0.0
    %114 = vmatpush2.msra.mxu0 0.0
    %115 = vmatprep.subr.mxu0 0.0
    %116 = vmatpush2.msra.mxu0 0.0
    %117 = vmatprep.subr.mxu0 0.0
    %118 = vmatpush2.msra.mxu0 0.0
    %119 = vmatprep.subr.mxu0 0.0
    %120 = vmatpush2.msra.mxu0 0.0
    %121 = vmatprep.subr.mxu0 0.0
    %122 = vmatpush2.msra.mxu0 0.0
    %123 = vmatprep.subr.mxu0 0.0
    %124 = vmatpush2.msra.mxu0 0.0
    %125 = vmatprep.subr.mxu0 0.0
    %126 = vmatpush2.msra.mxu0 0.0
    %127 = vmatprep.subr.mxu0 0.0
    %128 = vmatpush2.msra.mxu0 0.0
    %129 = vmatprep.subr.mxu0 0.0
    %130 = vmatpush2.msra.mxu0 0.0
    %131 = vmatprep.subr.mxu0 0.0
    %132 = vmatpush2.msra.mxu0 0.0
    %133 = vmatprep.mubr.f32.mxu0 0.0
    %134 = vmatmul.mubr.f32.gmra.mxu0 %v64
    %v135 = vpop.f32.mrf.mxu0
    %v136 = vadd.f32 0.0, %v135
    %v137 = vpop.f32.mrf.mxu0
    %138 = vmatprep.mubr.f32.mxu0 0.0
    %139 = vmatmul.mubr.f32.gmra.mxu0 %v67
    %v140 = vpop.f32.mrf.mxu0
    %v141 = vadd.f32 0.0, %v140
    %v142 = vpop.f32.mrf.mxu0
    %143 = vdwg.mxu0
    %144 = vst [vmem:[#allocation2] sm:$0xff] %v136
    %s145 = scalar_lea.vmem [#allocation2], 176
    %146 = vst [vmem:[%s145 + $0x8] sm:$0xff] %v141
    %s147 = scalar_lea.vmem [#allocation3], 16
    %v148 = vld [vmem:[%s147] sm:$0xff]
    %v149 = vld [vmem:[%s147 + $0x8] sm:$0xff]
    %150 = vmatprep.subr.mxu0 0.0
    %151 = vmatpush1.msra.mxu0 0.0
    %152 = vmatprep.subr.mxu0 0.0
    %153 = vmatpush1.msra.mxu0 0.0
    %154 = vmatprep.subr.mxu0 0.0
    %155 = vmatpush1.msra.mxu0 0.0
    %156 = vmatprep.subr.mxu0 0.0
    %157 = vmatpush1.msra.mxu0 0.0
    %158 = vmatprep.subr.mxu0 0.0
    %159 = vmatpush1.msra.mxu0 0.0
    %160 = vmatprep.subr.mxu0 0.0
    %161 = vmatpush1.msra.mxu0 0.0
    %162 = vmatprep.subr.mxu0 0.0
    %163 = vmatpush1.msra.mxu0 0.0
    %164 = vmatprep.subr.mxu0 0.0
    %165 = vmatpush1.msra.mxu0 0.0
    %166 = vmatprep.subr.mxu0 0.0
    %167 = vmatpush1.msra.mxu0 0.0
    %168 = vmatprep.subr.mxu0 0.0
    %169 = vmatpush1.msra.mxu0 0.0
    %170 = vmatprep.subr.mxu0 0.0
    %171 = vmatpush1.msra.mxu0 0.0
    %172 = vmatprep.subr.mxu0 0.0
    %173 = vmatpush1.msra.mxu0 0.0
    %174 = vmatprep.subr.mxu0 0.0
    %175 = vmatpush1.msra.mxu0 0.0
    %176 = vmatprep.subr.mxu0 0.0
    %177 = vmatpush1.msra.mxu0 0.0
    %178 = vmatprep.subr.mxu0 0.0
    %179 = vmatpush1.msra.mxu0 %v149
    %180 = vmatprep.subr.mxu0 0.0
    %181 = vmatpush1.msra.mxu0 %v148
    %182 = vmatprep.subr.mxu0 0.0
    %183 = vmatpush2.msra.mxu0 0.0
    %184 = vmatprep.subr.mxu0 0.0
    %185 = vmatpush2.msra.mxu0 0.0
    %186 = vmatprep.subr.mxu0 0.0
    %187 = vmatpush2.msra.mxu0 0.0
    %188 = vmatprep.subr.mxu0 0.0
    %189 = vmatpush2.msra.mxu0 0.0
    %190 = vmatprep.subr.mxu0 0.0
    %191 = vmatpush2.msra.mxu0 0.0
    %192 = vmatprep.subr.mxu0 0.0
    %193 = vmatpush2.msra.mxu0 0.0
    %194 = vmatprep.subr.mxu0 0.0
    %195 = vmatpush2.msra.mxu0 0.0
    %196 = vmatprep.subr.mxu0 0.0
    %197 = vmatpush2.msra.mxu0 0.0
    %198 = vmatprep.subr.mxu0 0.0
    %199 = vmatpush2.msra.mxu0 0.0
    %200 = vmatprep.subr.mxu0 0.0
    %201 = vmatpush2.msra.mxu0 0.0
    %202 = vmatprep.subr.mxu0 0.0
    %203 = vmatpush2.msra.mxu0 0.0
    %204 = vmatprep.subr.mxu0 0.0
    %205 = vmatpush2.msra.mxu0 0.0
    %206 = vmatprep.subr.mxu0 0.0
    %207 = vmatpush2.msra.mxu0 0.0
    %208 = vmatprep.subr.mxu0 0.0
    %209 = vmatpush2.msra.mxu0 0.0
    %210 = vmatprep.subr.mxu0 0.0
    %211 = vmatpush2.msra.mxu0 0.0
    %212 = vmatprep.subr.mxu0 0.0
    %213 = vmatpush2.msra.mxu0 0.0
    %214 = vmatprep.mubr.f32.mxu0 0.0
    %215 = vmatmul.mubr.f32.gmra.mxu0 %v64
    %v216 = vpop.f32.mrf.mxu0
    %v217 = vadd.f32 0.0, %v216
    %v218 = vpop.f32.mrf.mxu0
    %219 = vmatprep.mubr.f32.mxu0 0.0
    %220 = vmatmul.mubr.f32.gmra.mxu0 %v67
    %v221 = vpop.f32.mrf.mxu0
    %v222 = vadd.f32 0.0, %v221
    %v223 = vpop.f32.mrf.mxu0
    %224 = vdwg.mxu0
    %s225 = scalar_lea.vmem [#allocation2], 16
    %226 = vst [vmem:[%s225] sm:$0xff] %v217
    %s227 = scalar_lea.vmem [#allocation2], 160
    %228 = vst [vmem:[%s227 + $0x8] sm:$0xff] %v222
    %s229 = scalar_lea.vmem [#allocation3], 32
    %v230 = vld [vmem:[%s229] sm:$0xff]
    %v231 = vld [vmem:[%s229 + $0x8] sm:$0xff]
    %232 = vmatprep.subr.mxu0 0.0
    %233 = vmatpush1.msra.mxu0 0.0
    %234 = vmatprep.subr.mxu0 0.0
    %235 = vmatpush1.msra.mxu0 0.0
    %236 = vmatprep.subr.mxu0 0.0
    %237 = vmatpush1.msra.mxu0 0.0
    %238 = vmatprep.subr.mxu0 0.0
    %239 = vmatpush1.msra.mxu0 0.0
    %240 = vmatprep.subr.mxu0 0.0
    %241 = vmatpush1.msra.mxu0 0.0
    %242 = vmatprep.subr.mxu0 0.0
    %243 = vmatpush1.msra.mxu0 0.0
    %244 = vmatprep.subr.mxu0 0.0
    %245 = vmatpush1.msra.mxu0 0.0
    %246 = vmatprep.subr.mxu0 0.0
    %247 = vmatpush1.msra.mxu0 0.0
    %248 = vmatprep.subr.mxu0 0.0
    %249 = vmatpush1.msra.mxu0 0.0
    %250 = vmatprep.subr.mxu0 0.0
    %251 = vmatpush1.msra.mxu0 0.0
    %252 = vmatprep.subr.mxu0 0.0
    %253 = vmatpush1.msra.mxu0 0.0
    %254 = vmatprep.subr.mxu0 0.0
    %255 = vmatpush1.msra.mxu0 0.0
    %256 = vmatprep.subr.mxu0 0.0
    %257 = vmatpush1.msra.mxu0 0.0
    %258 = vmatprep.subr.mxu0 0.0
    %259 = vmatpush1.msra.mxu0 0.0
    %260 = vmatprep.subr.mxu0 0.0
    %261 = vmatpush1.msra.mxu0 %v231
    %262 = vmatprep.subr.mxu0 0.0
    %263 = vmatpush1.msra.mxu0 %v230
    %264 = vmatprep.subr.mxu0 0.0
    %265 = vmatpush2.msra.mxu0 0.0
    %266 = vmatprep.subr.mxu0 0.0
    %267 = vmatpush2.msra.mxu0 0.0
    %268 = vmatprep.subr.mxu0 0.0
    %269 = vmatpush2.msra.mxu0 0.0
    %270 = vmatprep.subr.mxu0 0.0
    %271 = vmatpush2.msra.mxu0 0.0
    %272 = vmatprep.subr.mxu0 0.0
    %273 = vmatpush2.msra.mxu0 0.0
    %274 = vmatprep.subr.mxu0 0.0
    %275 = vmatpush2.msra.mxu0 0.0
    %276 = vmatprep.subr.mxu0 0.0
    %277 = vmatpush2.msra.mxu0 0.0
    %278 = vmatprep.subr.mxu0 0.0
    %279 = vmatpush2.msra.mxu0 0.0
    %280 = vmatprep.subr.mxu0 0.0
    %281 = vmatpush2.msra.mxu0 0.0
    %282 = vmatprep.subr.mxu0 0.0
    %283 = vmatpush2.msra.mxu0 0.0
    %284 = vmatprep.subr.mxu0 0.0
    %285 = vmatpush2.msra.mxu0 0.0
    %286 = vmatprep.subr.mxu0 0.0
    %287 = vmatpush2.msra.mxu0 0.0
    %288 = vmatprep.subr.mxu0 0.0
    %289 = vmatpush2.msra.mxu0 0.0
    %290 = vmatprep.subr.mxu0 0.0
    %291 = vmatpush2.msra.mxu0 0.0
    %292 = vmatprep.subr.mxu0 0.0
    %293 = vmatpush2.msra.mxu0 0.0
    %294 = vmatprep.subr.mxu0 0.0
    %295 = vmatpush2.msra.mxu0 0.0
    %296 = vmatprep.mubr.f32.mxu0 0.0
    %297 = vmatmul.mubr.f32.gmra.mxu0 %v64
    %v298 = vpop.f32.mrf.mxu0
    %v299 = vadd.f32 0.0, %v298
    %v300 = vpop.f32.mrf.mxu0
    %301 = vmatprep.mubr.f32.mxu0 0.0
    %302 = vmatmul.mubr.f32.gmra.mxu0 %v67
    %v303 = vpop.f32.mrf.mxu0
    %v304 = vadd.f32 0.0, %v303
    %v305 = vpop.f32.mrf.mxu0
    %306 = vdwg.mxu0
    %s307 = scalar_lea.vmem [#allocation2], 32
    %308 = vst [vmem:[%s307] sm:$0xff] %v299
    %s309 = scalar_lea.vmem [#allocation2], 144
    %310 = vst [vmem:[%s309 + $0x8] sm:$0xff] %v304
    %s311 = scalar_lea.vmem [#allocation3], 48
    %v312 = vld [vmem:[%s311] sm:$0xff]
    %v313 = vld [vmem:[%s311 + $0x8] sm:$0xff]
    %314 = vmatprep.subr.mxu0 0.0
    %315 = vmatpush1.msra.mxu0 0.0
    %316 = vmatprep.subr.mxu0 0.0
    %317 = vmatpush1.msra.mxu0 0.0
    %318 = vmatprep.subr.mxu0 0.0
    %319 = vmatpush1.msra.mxu0 0.0
    %320 = vmatprep.subr.mxu0 0.0
    %321 = vmatpush1.msra.mxu0 0.0
    %322 = vmatprep.subr.mxu0 0.0
    %323 = vmatpush1.msra.mxu0 0.0
    %324 = vmatprep.subr.mxu0 0.0
    %325 = vmatpush1.msra.mxu0 0.0
    %326 = vmatprep.subr.mxu0 0.0
    %327 = vmatpush1.msra.mxu0 0.0
    %328 = vmatprep.subr.mxu0 0.0
    %329 = vmatpush1.msra.mxu0 0.0
    %330 = vmatprep.subr.mxu0 0.0
    %331 = vmatpush1.msra.mxu0 0.0
    %332 = vmatprep.subr.mxu0 0.0
    %333 = vmatpush1.msra.mxu0 0.0
    %334 = vmatprep.subr.mxu0 0.0
    %335 = vmatpush1.msra.mxu0 0.0
    %336 = vmatprep.subr.mxu0 0.0
    %337 = vmatpush1.msra.mxu0 0.0
    %338 = vmatprep.subr.mxu0 0.0
    %339 = vmatpush1.msra.mxu0 0.0
    %340 = vmatprep.subr.mxu0 0.0
    %341 = vmatpush1.msra.mxu0 0.0
    %342 = vmatprep.subr.mxu0 0.0
    %343 = vmatpush1.msra.mxu0 %v313
    %344 = vmatprep.subr.mxu0 0.0
    %345 = vmatpush1.msra.mxu0 %v312
    %346 = vmatprep.subr.mxu0 0.0
    %347 = vmatpush2.msra.mxu0 0.0
    %348 = vmatprep.subr.mxu0 0.0
    %349 = vmatpush2.msra.mxu0 0.0
    %350 = vmatprep.subr.mxu0 0.0
    %351 = vmatpush2.msra.mxu0 0.0
    %352 = vmatprep.subr.mxu0 0.0
    %353 = vmatpush2.msra.mxu0 0.0
    %354 = vmatprep.subr.mxu0 0.0
    %355 = vmatpush2.msra.mxu0 0.0
    %356 = vmatprep.subr.mxu0 0.0
    %357 = vmatpush2.msra.mxu0 0.0
    %358 = vmatprep.subr.mxu0 0.0
    %359 = vmatpush2.msra.mxu0 0.0
    %360 = vmatprep.subr.mxu0 0.0
    %361 = vmatpush2.msra.mxu0 0.0
    %362 = vmatprep.subr.mxu0 0.0
    %363 = vmatpush2.msra.mxu0 0.0
    %364 = vmatprep.subr.mxu0 0.0
    %365 = vmatpush2.msra.mxu0 0.0
    %366 = vmatprep.subr.mxu0 0.0
    %367 = vmatpush2.msra.mxu0 0.0
    %368 = vmatprep.subr.mxu0 0.0
    %369 = vmatpush2.msra.mxu0 0.0
    %370 = vmatprep.subr.mxu0 0.0
    %371 = vmatpush2.msra.mxu0 0.0
    %372 = vmatprep.subr.mxu0 0.0
    %373 = vmatpush2.msra.mxu0 0.0
    %374 = vmatprep.subr.mxu0 0.0
    %375 = vmatpush2.msra.mxu0 0.0
    %376 = vmatprep.subr.mxu0 0.0
    %377 = vmatpush2.msra.mxu0 0.0
    %378 = vmatprep.mubr.f32.mxu0 0.0
    %379 = vmatmul.mubr.f32.gmra.mxu0 %v64
    %v380 = vpop.f32.mrf.mxu0
    %v381 = vadd.f32 0.0, %v380
    %v382 = vpop.f32.mrf.mxu0
    %383 = vmatprep.mubr.f32.mxu0 0.0
    %384 = vmatmul.mubr.f32.gmra.mxu0 %v67
    %v385 = vpop.f32.mrf.mxu0
    %v386 = vadd.f32 0.0, %v385
    %v387 = vpop.f32.mrf.mxu0
    %388 = vdwg.mxu0
    %s389 = scalar_lea.vmem [#allocation2], 48
    %390 = vst [vmem:[%s389] sm:$0xff] %v381
    %s391 = scalar_lea.vmem [#allocation2], 128
    %392 = vst [vmem:[%s391 + $0x8] sm:$0xff] %v386
    %s393 = scalar_lea.vmem [#allocation3], 64
    %v394 = vld [vmem:[%s393] sm:$0xff]
    %v395 = vld [vmem:[%s393 + $0x8] sm:$0xff]
    %396 = vmatprep.subr.mxu0 0.0
    %397 = vmatpush1.msra.mxu0 0.0
    %398 = vmatprep.subr.mxu0 0.0
    %399 = vmatpush1.msra.mxu0 0.0
    %400 = vmatprep.subr.mxu0 0.0
    %401 = vmatpush1.msra.mxu0 0.0
    %402 = vmatprep.subr.mxu0 0.0
    %403 = vmatpush1.msra.mxu0 0.0
    %404 = vmatprep.subr.mxu0 0.0
    %405 = vmatpush1.msra.mxu0 0.0
    %406 = vmatprep.subr.mxu0 0.0
    %407 = vmatpush1.msra.mxu0 0.0
    %408 = vmatprep.subr.mxu0 0.0
    %409 = vmatpush1.msra.mxu0 0.0
    %410 = vmatprep.subr.mxu0 0.0
    %411 = vmatpush1.msra.mxu0 0.0
    %412 = vmatprep.subr.mxu0 0.0
    %413 = vmatpush1.msra.mxu0 0.0
    %414 = vmatprep.subr.mxu0 0.0
    %415 = vmatpush1.msra.mxu0 0.0
    %416 = vmatprep.subr.mxu0 0.0
    %417 = vmatpush1.msra.mxu0 0.0
    %418 = vmatprep.subr.mxu0 0.0
    %419 = vmatpush1.msra.mxu0 0.0
    %420 = vmatprep.subr.mxu0 0.0
    %421 = vmatpush1.msra.mxu0 0.0
    %422 = vmatprep.subr.mxu0 0.0
    %423 = vmatpush1.msra.mxu0 0.0
    %424 = vmatprep.subr.mxu0 0.0
    %425 = vmatpush1.msra.mxu0 %v395
    %426 = vmatprep.subr.mxu0 0.0
    %427 = vmatpush1.msra.mxu0 %v394
    %428 = vmatprep.subr.mxu0 0.0
    %429 = vmatpush2.msra.mxu0 0.0
    %430 = vmatprep.subr.mxu0 0.0
    %431 = vmatpush2.msra.mxu0 0.0
    %432 = vmatprep.subr.mxu0 0.0
    %433 = vmatpush2.msra.mxu0 0.0
    %434 = vmatprep.subr.mxu0 0.0
    %435 = vmatpush2.msra.mxu0 0.0
    %436 = vmatprep.subr.mxu0 0.0
    %437 = vmatpush2.msra.mxu0 0.0
    %438 = vmatprep.subr.mxu0 0.0
    %439 = vmatpush2.msra.mxu0 0.0
    %440 = vmatprep.subr.mxu0 0.0
    %441 = vmatpush2.msra.mxu0 0.0
    %442 = vmatprep.subr.mxu0 0.0
    %443 = vmatpush2.msra.mxu0 0.0
    %444 = vmatprep.subr.mxu0 0.0
    %445 = vmatpush2.msra.mxu0 0.0
    %446 = vmatprep.subr.mxu0 0.0
    %447 = vmatpush2.msra.mxu0 0.0
    %448 = vmatprep.subr.mxu0 0.0
    %449 = vmatpush2.msra.mxu0 0.0
    %450 = vmatprep.subr.mxu0 0.0
    %451 = vmatpush2.msra.mxu0 0.0
    %452 = vmatprep.subr.mxu0 0.0
    %453 = vmatpush2.msra.mxu0 0.0
    %454 = vmatprep.subr.mxu0 0.0
    %455 = vmatpush2.msra.mxu0 0.0
    %456 = vmatprep.subr.mxu0 0.0
    %457 = vmatpush2.msra.mxu0 0.0
    %458 = vmatprep.subr.mxu0 0.0
    %459 = vmatpush2.msra.mxu0 0.0
    %460 = vmatprep.mubr.f32.mxu0 0.0
    %461 = vmatmul.mubr.f32.gmra.mxu0 %v64
    %v462 = vpop.f32.mrf.mxu0
    %v463 = vadd.f32 0.0, %v462
    %v464 = vpop.f32.mrf.mxu0
    %465 = vmatprep.mubr.f32.mxu0 0.0
    %466 = vmatmul.mubr.f32.gmra.mxu0 %v67
    %v467 = vpop.f32.mrf.mxu0
    %v468 = vadd.f32 0.0, %v467
    %v469 = vpop.f32.mrf.mxu0
    %470 = vdwg.mxu0
    %s471 = scalar_lea.vmem [#allocation2], 64
    %472 = vst [vmem:[%s471] sm:$0xff] %v463
    %s473 = scalar_lea.vmem [#allocation2], 112
    %474 = vst [vmem:[%s473 + $0x8] sm:$0xff] %v468
    %s475 = scalar_lea.vmem [#allocation3], 80
    %v476 = vld [vmem:[%s475] sm:$0xff]
    %v477 = vld [vmem:[%s475 + $0x8] sm:$0xff]
    %478 = vmatprep.subr.mxu0 0.0
    %479 = vmatpush1.msra.mxu0 0.0
    %480 = vmatprep.subr.mxu0 0.0
    %481 = vmatpush1.msra.mxu0 0.0
    %482 = vmatprep.subr.mxu0 0.0
    %483 = vmatpush1.msra.mxu0 0.0
    %484 = vmatprep.subr.mxu0 0.0
    %485 = vmatpush1.msra.mxu0 0.0
    %486 = vmatprep.subr.mxu0 0.0
    %487 = vmatpush1.msra.mxu0 0.0
    %488 = vmatprep.subr.mxu0 0.0
    %489 = vmatpush1.msra.mxu0 0.0
    %490 = vmatprep.subr.mxu0 0.0
    %491 = vmatpush1.msra.mxu0 0.0
    %492 = vmatprep.subr.mxu0 0.0
    %493 = vmatpush1.msra.mxu0 0.0
    %494 = vmatprep.subr.mxu0 0.0
    %495 = vmatpush1.msra.mxu0 0.0
    %496 = vmatprep.subr.mxu0 0.0
    %497 = vmatpush1.msra.mxu0 0.0
    %498 = vmatprep.subr.mxu0 0.0
    %499 = vmatpush1.msra.mxu0 0.0
    %500 = vmatprep.subr.mxu0 0.0
    %501 = vmatpush1.msra.mxu0 0.0
    %502 = vmatprep.subr.mxu0 0.0
    %503 = vmatpush1.msra.mxu0 0.0
    %504 = vmatprep.subr.mxu0 0.0
    %505 = vmatpush1.msra.mxu0 0.0
    %506 = vmatprep.subr.mxu0 0.0
    %507 = vmatpush1.msra.mxu0 %v477
    %508 = vmatprep.subr.mxu0 0.0
    %509 = vmatpush1.msra.mxu0 %v476
    %510 = vmatprep.subr.mxu0 0.0
    %511 = vmatpush2.msra.mxu0 0.0
    %512 = vmatprep.subr.mxu0 0.0
    %513 = vmatpush2.msra.mxu0 0.0
    %514 = vmatprep.subr.mxu0 0.0
    %515 = vmatpush2.msra.mxu0 0.0
    %516 = vmatprep.subr.mxu0 0.0
    %517 = vmatpush2.msra.mxu0 0.0
    %518 = vmatprep.subr.mxu0 0.0
    %519 = vmatpush2.msra.mxu0 0.0
    %520 = vmatprep.subr.mxu0 0.0
    %521 = vmatpush2.msra.mxu0 0.0
    %522 = vmatprep.subr.mxu0 0.0
    %523 = vmatpush2.msra.mxu0 0.0
    %524 = vmatprep.subr.mxu0 0.0
    %525 = vmatpush2.msra.mxu0 0.0
    %526 = vmatprep.subr.mxu0 0.0
    %527 = vmatpush2.msra.mxu0 0.0
    %528 = vmatprep.subr.mxu0 0.0
    %529 = vmatpush2.msra.mxu0 0.0
    %530 = vmatprep.subr.mxu0 0.0
    %531 = vmatpush2.msra.mxu0 0.0
    %532 = vmatprep.subr.mxu0 0.0
    %533 = vmatpush2.msra.mxu0 0.0
    %534 = vmatprep.subr.mxu0 0.0
    %535 = vmatpush2.msra.mxu0 0.0
    %536 = vmatprep.subr.mxu0 0.0
    %537 = vmatpush2.msra.mxu0 0.0
    %538 = vmatprep.subr.mxu0 0.0
    %539 = vmatpush2.msra.mxu0 0.0
    %540 = vmatprep.subr.mxu0 0.0
    %541 = vmatpush2.msra.mxu0 0.0
    %542 = vmatprep.mubr.f32.mxu0 0.0
    %543 = vmatmul.mubr.f32.gmra.mxu0 %v64
    %v544 = vpop.f32.mrf.mxu0
    %v545 = vadd.f32 0.0, %v544
    %v546 = vpop.f32.mrf.mxu0
    %547 = vmatprep.mubr.f32.mxu0 0.0
    %548 = vmatmul.mubr.f32.gmra.mxu0 %v67
    %v549 = vpop.f32.mrf.mxu0
    %v550 = vadd.f32 0.0, %v549
    %v551 = vpop.f32.mrf.mxu0
    %552 = vdwg.mxu0
    %s553 = scalar_lea.vmem [#allocation2], 80
    %554 = vst [vmem:[%s553] sm:$0xff] %v545
    %s555 = scalar_lea.vmem [#allocation2], 96
    %556 = vst [vmem:[%s555 + $0x8] sm:$0xff] %v550
    %s557 = scalar_lea.vmem [#allocation3], 96
    %v558 = vld [vmem:[%s557] sm:$0xff]
    %v559 = vld [vmem:[%s557 + $0x8] sm:$0xff]
    %560 = vmatprep.subr.mxu0 0.0
    %561 = vmatpush1.msra.mxu0 0.0
    %562 = vmatprep.subr.mxu0 0.0
    %563 = vmatpush1.msra.mxu0 0.0
    %564 = vmatprep.subr.mxu0 0.0
    %565 = vmatpush1.msra.mxu0 0.0
    %566 = vmatprep.subr.mxu0 0.0
    %567 = vmatpush1.msra.mxu0 0.0
    %568 = vmatprep.subr.mxu0 0.0
    %569 = vmatpush1.msra.mxu0 0.0
    %570 = vmatprep.subr.mxu0 0.0
    %571 = vmatpush1.msra.mxu0 0.0
    %572 = vmatprep.subr.mxu0 0.0
    %573 = vmatpush1.msra.mxu0 0.0
    %574 = vmatprep.subr.mxu0 0.0
    %575 = vmatpush1.msra.mxu0 0.0
    %576 = vmatprep.subr.mxu0 0.0
    %577 = vmatpush1.msra.mxu0 0.0
    %578 = vmatprep.subr.mxu0 0.0
    %579 = vmatpush1.msra.mxu0 0.0
    %580 = vmatprep.subr.mxu0 0.0
    %581 = vmatpush1.msra.mxu0 0.0
    %582 = vmatprep.subr.mxu0 0.0
    %583 = vmatpush1.msra.mxu0 0.0
    %584 = vmatprep.subr.mxu0 0.0
    %585 = vmatpush1.msra.mxu0 0.0
    %586 = vmatprep.subr.mxu0 0.0
    %587 = vmatpush1.msra.mxu0 0.0
    %588 = vmatprep.subr.mxu0 0.0
    %589 = vmatpush1.msra.mxu0 %v559
    %590 = vmatprep.subr.mxu0 0.0
    %591 = vmatpush1.msra.mxu0 %v558
    %592 = vmatprep.subr.mxu0 0.0
    %593 = vmatpush2.msra.mxu0 0.0
    %594 = vmatprep.subr.mxu0 0.0
    %595 = vmatpush2.msra.mxu0 0.0
    %596 = vmatprep.subr.mxu0 0.0
    %597 = vmatpush2.msra.mxu0 0.0
    %598 = vmatprep.subr.mxu0 0.0
    %599 = vmatpush2.msra.mxu0 0.0
    %600 = vmatprep.subr.mxu0 0.0
    %601 = vmatpush2.msra.mxu0 0.0
    %602 = vmatprep.subr.mxu0 0.0
    %603 = vmatpush2.msra.mxu0 0.0
    %604 = vmatprep.subr.mxu0 0.0
    %605 = vmatpush2.msra.mxu0 0.0
    %606 = vmatprep.subr.mxu0 0.0
    %607 = vmatpush2.msra.mxu0 0.0
    %608 = vmatprep.subr.mxu0 0.0
    %609 = vmatpush2.msra.mxu0 0.0
    %610 = vmatprep.subr.mxu0 0.0
    %611 = vmatpush2.msra.mxu0 0.0
    %612 = vmatprep.subr.mxu0 0.0
    %613 = vmatpush2.msra.mxu0 0.0
    %614 = vmatprep.subr.mxu0 0.0
    %615 = vmatpush2.msra.mxu0 0.0
    %616 = vmatprep.subr.mxu0 0.0
    %617 = vmatpush2.msra.mxu0 0.0
    %618 = vmatprep.subr.mxu0 0.0
    %619 = vmatpush2.msra.mxu0 0.0
    %620 = vmatprep.subr.mxu0 0.0
    %621 = vmatpush2.msra.mxu0 0.0
    %622 = vmatprep.subr.mxu0 0.0
    %623 = vmatpush2.msra.mxu0 0.0
    %624 = vmatprep.mubr.f32.mxu0 0.0
    %625 = vmatmul.mubr.f32.gmra.mxu0 %v64
    %v626 = vpop.f32.mrf.mxu0
    %v627 = vadd.f32 0.0, %v626
    %v628 = vpop.f32.mrf.mxu0
    %629 = vmatprep.mubr.f32.mxu0 0.0
    %630 = vmatmul.mubr.f32.gmra.mxu0 %v67
    %v631 = vpop.f32.mrf.mxu0
    %v632 = vadd.f32 0.0, %v631
    %v633 = vpop.f32.mrf.mxu0
    %634 = vdwg.mxu0
    %635 = vst [vmem:[%s555] sm:$0xff] %v627
    %636 = vst [vmem:[%s553 + $0x8] sm:$0xff] %v632
    %s637 = scalar_lea.vmem [#allocation3], 112
    %v638 = vld [vmem:[%s637] sm:$0xff]
    %v639 = vld [vmem:[%s637 + $0x8] sm:$0xff]
    %640 = vmatprep.subr.mxu0 0.0
    %641 = vmatpush1.msra.mxu0 0.0
    %642 = vmatprep.subr.mxu0 0.0
    %643 = vmatpush1.msra.mxu0 0.0
    %644 = vmatprep.subr.mxu0 0.0
    %645 = vmatpush1.msra.mxu0 0.0
    %646 = vmatprep.subr.mxu0 0.0
    %647 = vmatpush1.msra.mxu0 0.0
    %648 = vmatprep.subr.mxu0 0.0
    %649 = vmatpush1.msra.mxu0 0.0
    %650 = vmatprep.subr.mxu0 0.0
    %651 = vmatpush1.msra.mxu0 0.0
    %652 = vmatprep.subr.mxu0 0.0
    %653 = vmatpush1.msra.mxu0 0.0
    %654 = vmatprep.subr.mxu0 0.0
    %655 = vmatpush1.msra.mxu0 0.0
    %656 = vmatprep.subr.mxu0 0.0
    %657 = vmatpush1.msra.mxu0 0.0
    %658 = vmatprep.subr.mxu0 0.0
    %659 = vmatpush1.msra.mxu0 0.0
    %660 = vmatprep.subr.mxu0 0.0
    %661 = vmatpush1.msra.mxu0 0.0
    %662 = vmatprep.subr.mxu0 0.0
    %663 = vmatpush1.msra.mxu0 0.0
    %664 = vmatprep.subr.mxu0 0.0
    %665 = vmatpush1.msra.mxu0 0.0
    %666 = vmatprep.subr.mxu0 0.0
    %667 = vmatpush1.msra.mxu0 0.0
    %668 = vmatprep.subr.mxu0 0.0
    %669 = vmatpush1.msra.mxu0 %v639
    %670 = vmatprep.subr.mxu0 0.0
    %671 = vmatpush1.msra.mxu0 %v638
    %672 = vmatprep.subr.mxu0 0.0
    %673 = vmatpush2.msra.mxu0 0.0
    %674 = vmatprep.subr.mxu0 0.0
    %675 = vmatpush2.msra.mxu0 0.0
    %676 = vmatprep.subr.mxu0 0.0
    %677 = vmatpush2.msra.mxu0 0.0
    %678 = vmatprep.subr.mxu0 0.0
    %679 = vmatpush2.msra.mxu0 0.0
    %680 = vmatprep.subr.mxu0 0.0
    %681 = vmatpush2.msra.mxu0 0.0
    %682 = vmatprep.subr.mxu0 0.0
    %683 = vmatpush2.msra.mxu0 0.0
    %684 = vmatprep.subr.mxu0 0.0
    %685 = vmatpush2.msra.mxu0 0.0
    %686 = vmatprep.subr.mxu0 0.0
    %687 = vmatpush2.msra.mxu0 0.0
    %688 = vmatprep.subr.mxu0 0.0
    %689 = vmatpush2.msra.mxu0 0.0
    %690 = vmatprep.subr.mxu0 0.0
    %691 = vmatpush2.msra.mxu0 0.0
    %692 = vmatprep.subr.mxu0 0.0
    %693 = vmatpush2.msra.mxu0 0.0
    %694 = vmatprep.subr.mxu0 0.0
    %695 = vmatpush2.msra.mxu0 0.0
    %696 = vmatprep.subr.mxu0 0.0
    %697 = vmatpush2.msra.mxu0 0.0
    %698 = vmatprep.subr.mxu0 0.0
    %699 = vmatpush2.msra.mxu0 0.0
    %700 = vmatprep.subr.mxu0 0.0
    %701 = vmatpush2.msra.mxu0 0.0
    %702 = vmatprep.subr.mxu0 0.0
    %703 = vmatpush2.msra.mxu0 0.0
    %704 = vmatprep.mubr.f32.mxu0 0.0
    %705 = vmatmul.mubr.f32.gmra.mxu0 %v64
    %v706 = vpop.f32.mrf.mxu0
    %v707 = vadd.f32 0.0, %v706
    %v708 = vpop.f32.mrf.mxu0
    %709 = vmatprep.mubr.f32.mxu0 0.0
    %710 = vmatmul.mubr.f32.gmra.mxu0 %v67
    %v711 = vpop.f32.mrf.mxu0
    %v712 = vadd.f32 0.0, %v711
    %v713 = vpop.f32.mrf.mxu0
    %714 = vdwg.mxu0
    %715 = vst [vmem:[%s473] sm:$0xff] %v707
    %716 = vst [vmem:[%s471 + $0x8] sm:$0xff] %v712
    %s717 = scalar_lea.vmem [#allocation3], 128
    %v718 = vld [vmem:[%s717] sm:$0xff]
    %v719 = vld [vmem:[%s717 + $0x8] sm:$0xff]
    %720 = vmatprep.subr.mxu0 0.0
    %721 = vmatpush1.msra.mxu0 0.0
    %722 = vmatprep.subr.mxu0 0.0
    %723 = vmatpush1.msra.mxu0 0.0
    %724 = vmatprep.subr.mxu0 0.0
    %725 = vmatpush1.msra.mxu0 0.0
    %726 = vmatprep.subr.mxu0 0.0
    %727 = vmatpush1.msra.mxu0 0.0
    %728 = vmatprep.subr.mxu0 0.0
    %729 = vmatpush1.msra.mxu0 0.0
    %730 = vmatprep.subr.mxu0 0.0
    %731 = vmatpush1.msra.mxu0 0.0
    %732 = vmatprep.subr.mxu0 0.0
    %733 = vmatpush1.msra.mxu0 0.0
    %734 = vmatprep.subr.mxu0 0.0
    %735 = vmatpush1.msra.mxu0 0.0
    %736 = vmatprep.subr.mxu0 0.0
    %737 = vmatpush1.msra.mxu0 0.0
    %738 = vmatprep.subr.mxu0 0.0
    %739 = vmatpush1.msra.mxu0 0.0
    %740 = vmatprep.subr.mxu0 0.0
    %741 = vmatpush1.msra.mxu0 0.0
    %742 = vmatprep.subr.mxu0 0.0
    %743 = vmatpush1.msra.mxu0 0.0
    %744 = vmatprep.subr.mxu0 0.0
    %745 = vmatpush1.msra.mxu0 0.0
    %746 = vmatprep.subr.mxu0 0.0
    %747 = vmatpush1.msra.mxu0 0.0
    %748 = vmatprep.subr.mxu0 0.0
    %749 = vmatpush1.msra.mxu0 %v719
    %750 = vmatprep.subr.mxu0 0.0
    %751 = vmatpush1.msra.mxu0 %v718
    %752 = vmatprep.subr.mxu0 0.0
    %753 = vmatpush2.msra.mxu0 0.0
    %754 = vmatprep.subr.mxu0 0.0
    %755 = vmatpush2.msra.mxu0 0.0
    %756 = vmatprep.subr.mxu0 0.0
    %757 = vmatpush2.msra.mxu0 0.0
    %758 = vmatprep.subr.mxu0 0.0
    %759 = vmatpush2.msra.mxu0 0.0
    %760 = vmatprep.subr.mxu0 0.0
    %761 = vmatpush2.msra.mxu0 0.0
    %762 = vmatprep.subr.mxu0 0.0
    %763 = vmatpush2.msra.mxu0 0.0
    %764 = vmatprep.subr.mxu0 0.0
    %765 = vmatpush2.msra.mxu0 0.0
    %766 = vmatprep.subr.mxu0 0.0
    %767 = vmatpush2.msra.mxu0 0.0
    %768 = vmatprep.subr.mxu0 0.0
    %769 = vmatpush2.msra.mxu0 0.0
    %770 = vmatprep.subr.mxu0 0.0
    %771 = vmatpush2.msra.mxu0 0.0
    %772 = vmatprep.subr.mxu0 0.0
    %773 = vmatpush2.msra.mxu0 0.0
    %774 = vmatprep.subr.mxu0 0.0
    %775 = vmatpush2.msra.mxu0 0.0
    %776 = vmatprep.subr.mxu0 0.0
    %777 = vmatpush2.msra.mxu0 0.0
    %778 = vmatprep.subr.mxu0 0.0
    %779 = vmatpush2.msra.mxu0 0.0
    %780 = vmatprep.subr.mxu0 0.0
    %781 = vmatpush2.msra.mxu0 0.0
    %782 = vmatprep.subr.mxu0 0.0
    %783 = vmatpush2.msra.mxu0 0.0
    %784 = vmatprep.mubr.f32.mxu0 0.0
    %785 = vmatmul.mubr.f32.gmra.mxu0 %v64
    %v786 = vpop.f32.mrf.mxu0
    %v787 = vadd.f32 0.0, %v786
    %v788 = vpop.f32.mrf.mxu0
    %789 = vmatprep.mubr.f32.mxu0 0.0
    %790 = vmatmul.mubr.f32.gmra.mxu0 %v67
    %v791 = vpop.f32.mrf.mxu0
    %v792 = vadd.f32 0.0, %v791
    %v793 = vpop.f32.mrf.mxu0
    %794 = vdwg.mxu0
    %795 = vst [vmem:[%s391] sm:$0xff] %v787
    %796 = vst [vmem:[%s389 + $0x8] sm:$0xff] %v792
    %s797 = scalar_lea.vmem [#allocation3], 144
    %v798 = vld [vmem:[%s797] sm:$0xff]
    %v799 = vld [vmem:[%s797 + $0x8] sm:$0xff]
    %800 = vmatprep.subr.mxu0 0.0
    %801 = vmatpush1.msra.mxu0 0.0
    %802 = vmatprep.subr.mxu0 0.0
    %803 = vmatpush1.msra.mxu0 0.0
    %804 = vmatprep.subr.mxu0 0.0
    %805 = vmatpush1.msra.mxu0 0.0
    %806 = vmatprep.subr.mxu0 0.0
    %807 = vmatpush1.msra.mxu0 0.0
    %808 = vmatprep.subr.mxu0 0.0
    %809 = vmatpush1.msra.mxu0 0.0
    %810 = vmatprep.subr.mxu0 0.0
    %811 = vmatpush1.msra.mxu0 0.0
    %812 = vmatprep.subr.mxu0 0.0
    %813 = vmatpush1.msra.mxu0 0.0
    %814 = vmatprep.subr.mxu0 0.0
    %815 = vmatpush1.msra.mxu0 0.0
    %816 = vmatprep.subr.mxu0 0.0
    %817 = vmatpush1.msra.mxu0 0.0
    %818 = vmatprep.subr.mxu0 0.0
    %819 = vmatpush1.msra.mxu0 0.0
    %820 = vmatprep.subr.mxu0 0.0
    %821 = vmatpush1.msra.mxu0 0.0
    %822 = vmatprep.subr.mxu0 0.0
    %823 = vmatpush1.msra.mxu0 0.0
    %824 = vmatprep.subr.mxu0 0.0
    %825 = vmatpush1.msra.mxu0 0.0
    %826 = vmatprep.subr.mxu0 0.0
    %827 = vmatpush1.msra.mxu0 0.0
    %828 = vmatprep.subr.mxu0 0.0
    %829 = vmatpush1.msra.mxu0 %v799
    %830 = vmatprep.subr.mxu0 0.0
    %831 = vmatpush1.msra.mxu0 %v798
    %832 = vmatprep.subr.mxu0 0.0
    %833 = vmatpush2.msra.mxu0 0.0
    %834 = vmatprep.subr.mxu0 0.0
    %835 = vmatpush2.msra.mxu0 0.0
    %836 = vmatprep.subr.mxu0 0.0
    %837 = vmatpush2.msra.mxu0 0.0
    %838 = vmatprep.subr.mxu0 0.0
    %839 = vmatpush2.msra.mxu0 0.0
    %840 = vmatprep.subr.mxu0 0.0
    %841 = vmatpush2.msra.mxu0 0.0
    %842 = vmatprep.subr.mxu0 0.0
    %843 = vmatpush2.msra.mxu0 0.0
    %844 = vmatprep.subr.mxu0 0.0
    %845 = vmatpush2.msra.mxu0 0.0
    %846 = vmatprep.subr.mxu0 0.0
    %847 = vmatpush2.msra.mxu0 0.0
    %848 = vmatprep.subr.mxu0 0.0
    %849 = vmatpush2.msra.mxu0 0.0
    %850 = vmatprep.subr.mxu0 0.0
    %851 = vmatpush2.msra.mxu0 0.0
    %852 = vmatprep.subr.mxu0 0.0
    %853 = vmatpush2.msra.mxu0 0.0
    %854 = vmatprep.subr.mxu0 0.0
    %855 = vmatpush2.msra.mxu0 0.0
    %856 = vmatprep.subr.mxu0 0.0
    %857 = vmatpush2.msra.mxu0 0.0
    %858 = vmatprep.subr.mxu0 0.0
    %859 = vmatpush2.msra.mxu0 0.0
    %860 = vmatprep.subr.mxu0 0.0
    %861 = vmatpush2.msra.mxu0 0.0
    %862 = vmatprep.subr.mxu0 0.0
    %863 = vmatpush2.msra.mxu0 0.0
    %864 = vmatprep.mubr.f32.mxu0 0.0
    %865 = vmatmul.mubr.f32.gmra.mxu0 %v64
    %v866 = vpop.f32.mrf.mxu0
    %v867 = vadd.f32 0.0, %v866
    %v868 = vpop.f32.mrf.mxu0
    %869 = vmatprep.mubr.f32.mxu0 0.0
    %870 = vmatmul.mubr.f32.gmra.mxu0 %v67
    %v871 = vpop.f32.mrf.mxu0
    %v872 = vadd.f32 0.0, %v871
    %v873 = vpop.f32.mrf.mxu0
    %874 = vdwg.mxu0
    %875 = vst [vmem:[%s309] sm:$0xff] %v867
    %876 = vst [vmem:[%s307 + $0x8] sm:$0xff] %v872
    %s877 = scalar_lea.vmem [#allocation3], 160
    %v878 = vld [vmem:[%s877] sm:$0xff]
    %v879 = vld [vmem:[%s877 + $0x8] sm:$0xff]
    %880 = vmatprep.subr.mxu0 0.0
    %881 = vmatpush1.msra.mxu0 0.0
    %882 = vmatprep.subr.mxu0 0.0
    %883 = vmatpush1.msra.mxu0 0.0
    %884 = vmatprep.subr.mxu0 0.0
    %885 = vmatpush1.msra.mxu0 0.0
    %886 = vmatprep.subr.mxu0 0.0
    %887 = vmatpush1.msra.mxu0 0.0
    %888 = vmatprep.subr.mxu0 0.0
    %889 = vmatpush1.msra.mxu0 0.0
    %890 = vmatprep.subr.mxu0 0.0
    %891 = vmatpush1.msra.mxu0 0.0
    %892 = vmatprep.subr.mxu0 0.0
    %893 = vmatpush1.msra.mxu0 0.0
    %894 = vmatprep.subr.mxu0 0.0
    %895 = vmatpush1.msra.mxu0 0.0
    %896 = vmatprep.subr.mxu0 0.0
    %897 = vmatpush1.msra.mxu0 0.0
    %898 = vmatprep.subr.mxu0 0.0
    %899 = vmatpush1.msra.mxu0 0.0
    %900 = vmatprep.subr.mxu0 0.0
    %901 = vmatpush1.msra.mxu0 0.0
    %902 = vmatprep.subr.mxu0 0.0
    %903 = vmatpush1.msra.mxu0 0.0
    %904 = vmatprep.subr.mxu0 0.0
    %905 = vmatpush1.msra.mxu0 0.0
    %906 = vmatprep.subr.mxu0 0.0
    %907 = vmatpush1.msra.mxu0 0.0
    %908 = vmatprep.subr.mxu0 0.0
    %909 = vmatpush1.msra.mxu0 %v879
    %910 = vmatprep.subr.mxu0 0.0
    %911 = vmatpush1.msra.mxu0 %v878
    %912 = vmatprep.subr.mxu0 0.0
    %913 = vmatpush2.msra.mxu0 0.0
    %914 = vmatprep.subr.mxu0 0.0
    %915 = vmatpush2.msra.mxu0 0.0
    %916 = vmatprep.subr.mxu0 0.0
    %917 = vmatpush2.msra.mxu0 0.0
    %918 = vmatprep.subr.mxu0 0.0
    %919 = vmatpush2.msra.mxu0 0.0
    %920 = vmatprep.subr.mxu0 0.0
    %921 = vmatpush2.msra.mxu0 0.0
    %922 = vmatprep.subr.mxu0 0.0
    %923 = vmatpush2.msra.mxu0 0.0
    %924 = vmatprep.subr.mxu0 0.0
    %925 = vmatpush2.msra.mxu0 0.0
    %926 = vmatprep.subr.mxu0 0.0
    %927 = vmatpush2.msra.mxu0 0.0
    %928 = vmatprep.subr.mxu0 0.0
    %929 = vmatpush2.msra.mxu0 0.0
    %930 = vmatprep.subr.mxu0 0.0
    %931 = vmatpush2.msra.mxu0 0.0
    %932 = vmatprep.subr.mxu0 0.0
    %933 = vmatpush2.msra.mxu0 0.0
    %934 = vmatprep.subr.mxu0 0.0
    %935 = vmatpush2.msra.mxu0 0.0
    %936 = vmatprep.subr.mxu0 0.0
    %937 = vmatpush2.msra.mxu0 0.0
    %938 = vmatprep.subr.mxu0 0.0
    %939 = vmatpush2.msra.mxu0 0.0
    %940 = vmatprep.subr.mxu0 0.0
    %941 = vmatpush2.msra.mxu0 0.0
    %942 = vmatprep.subr.mxu0 0.0
    %943 = vmatpush2.msra.mxu0 0.0
    %944 = vmatprep.mubr.f32.mxu0 0.0
    %945 = vmatmul.mubr.f32.gmra.mxu0 %v64
    %v946 = vpop.f32.mrf.mxu0
    %v947 = vadd.f32 0.0, %v946
    %v948 = vpop.f32.mrf.mxu0
    %949 = vmatprep.mubr.f32.mxu0 0.0
    %950 = vmatmul.mubr.f32.gmra.mxu0 %v67
    %v951 = vpop.f32.mrf.mxu0
    %v952 = vadd.f32 0.0, %v951
    %v953 = vpop.f32.mrf.mxu0
    %954 = vdwg.mxu0
    %955 = vst [vmem:[%s227] sm:$0xff] %v947
    %956 = vst [vmem:[%s225 + $0x8] sm:$0xff] %v952
    %s957 = scalar_lea.vmem [#allocation3], 176
    %v958 = vld [vmem:[%s957] sm:$0xff]
    %v959 = vld [vmem:[%s957 + $0x8] sm:$0xff]
    %960 = vmatprep.subr.mxu0 0.0
    %961 = vmatpush1.msra.mxu0 0.0
    %962 = vmatprep.subr.mxu0 0.0
    %963 = vmatpush1.msra.mxu0 0.0
    %964 = vmatprep.subr.mxu0 0.0
    %965 = vmatpush1.msra.mxu0 0.0
    %966 = vmatprep.subr.mxu0 0.0
    %967 = vmatpush1.msra.mxu0 0.0
    %968 = vmatprep.subr.mxu0 0.0
    %969 = vmatpush1.msra.mxu0 0.0
    %970 = vmatprep.subr.mxu0 0.0
    %971 = vmatpush1.msra.mxu0 0.0
    %972 = vmatprep.subr.mxu0 0.0
    %973 = vmatpush1.msra.mxu0 0.0
    %974 = vmatprep.subr.mxu0 0.0
    %975 = vmatpush1.msra.mxu0 0.0
    %976 = vmatprep.subr.mxu0 0.0
    %977 = vmatpush1.msra.mxu0 0.0
    %978 = vmatprep.subr.mxu0 0.0
    %979 = vmatpush1.msra.mxu0 0.0
    %980 = vmatprep.subr.mxu0 0.0
    %981 = vmatpush1.msra.mxu0 0.0
    %982 = vmatprep.subr.mxu0 0.0
    %983 = vmatpush1.msra.mxu0 0.0
    %984 = vmatprep.subr.mxu0 0.0
    %985 = vmatpush1.msra.mxu0 0.0
    %986 = vmatprep.subr.mxu0 0.0
    %987 = vmatpush1.msra.mxu0 0.0
    %988 = vmatprep.subr.mxu0 0.0
    %989 = vmatpush1.msra.mxu0 %v959
    %990 = vmatprep.subr.mxu0 0.0
    %991 = vmatpush1.msra.mxu0 %v958
    %992 = vmatprep.subr.mxu0 0.0
    %993 = vmatpush2.msra.mxu0 0.0
    %994 = vmatprep.subr.mxu0 0.0
    %995 = vmatpush2.msra.mxu0 0.0
    %996 = vmatprep.subr.mxu0 0.0
    %997 = vmatpush2.msra.mxu0 0.0
    %998 = vmatprep.subr.mxu0 0.0
    %999 = vmatpush2.msra.mxu0 0.0
    %1000 = vmatprep.subr.mxu0 0.0
    %1001 = vmatpush2.msra.mxu0 0.0
    %1002 = vmatprep.subr.mxu0 0.0
    %1003 = vmatpush2.msra.mxu0 0.0
    %1004 = vmatprep.subr.mxu0 0.0
    %1005 = vmatpush2.msra.mxu0 0.0
    %1006 = vmatprep.subr.mxu0 0.0
    %1007 = vmatpush2.msra.mxu0 0.0
    %1008 = vmatprep.subr.mxu0 0.0
    %1009 = vmatpush2.msra.mxu0 0.0
    %1010 = vmatprep.subr.mxu0 0.0
    %1011 = vmatpush2.msra.mxu0 0.0
    %1012 = vmatprep.subr.mxu0 0.0
    %1013 = vmatpush2.msra.mxu0 0.0
    %1014 = vmatprep.subr.mxu0 0.0
    %1015 = vmatpush2.msra.mxu0 0.0
    %1016 = vmatprep.subr.mxu0 0.0
    %1017 = vmatpush2.msra.mxu0 0.0
    %1018 = vmatprep.subr.mxu0 0.0
    %1019 = vmatpush2.msra.mxu0 0.0
    %1020 = vmatprep.subr.mxu0 0.0
    %1021 = vmatpush2.msra.mxu0 0.0
    %1022 = vmatprep.subr.mxu0 0.0
    %1023 = vmatpush2.msra.mxu0 0.0
    %1024 = vmatprep.mubr.f32.mxu0 0.0
    %1025 = vmatmul.mubr.f32.gmra.mxu0 %v64
    %v1026 = vpop.f32.mrf.mxu0
    %v1027 = vadd.f32 0.0, %v1026
    %v1028 = vpop.f32.mrf.mxu0
    %1029 = vmatprep.mubr.f32.mxu0 0.0
    %1030 = vmatmul.mubr.f32.gmra.mxu0 %v67
    %v1031 = vpop.f32.mrf.mxu0
    %v1032 = vadd.f32 0.0, %v1031
    %v1033 = vpop.f32.mrf.mxu0
    %1034 = vdwg.mxu0
    %1035 = vst [vmem:[%s145] sm:$0xff] %v1027
    %1036 = vst [vmem:[#allocation2 + $0x8] sm:$0xff] %v1032
    %v1037 = vld [vmem:[#allocation2] sm:$0xff]
    %v1038 = vld [vmem:[#allocation2 + $0x8] sm:$0xff]
    %v1040 = vsel %vm62, %v58, 0
    %v1043 = vsel %vm62, %v59, 0
    %1045 = vmatprep.subr.mxu0 0.0
    %1046 = vmatpush1.msra.mxu0 0.0
    %1047 = vmatprep.subr.mxu0 0.0
    %1048 = vmatpush1.msra.mxu0 0.0
    %1049 = vmatprep.subr.mxu0 0.0
    %1050 = vmatpush1.msra.mxu0 0.0
    %1051 = vmatprep.subr.mxu0 0.0
    %1052 = vmatpush1.msra.mxu0 0.0
    %1053 = vmatprep.subr.mxu0 0.0
    %1054 = vmatpush1.msra.mxu0 0.0
    %1055 = vmatprep.subr.mxu0 0.0
    %1056 = vmatpush1.msra.mxu0 0.0
    %1057 = vmatprep.subr.mxu0 0.0
    %1058 = vmatpush1.msra.mxu0 0.0
    %1059 = vmatprep.subr.mxu0 0.0
    %1060 = vmatpush1.msra.mxu0 0.0
    %1061 = vmatprep.subr.mxu0 0.0
    %1062 = vmatpush1.msra.mxu0 0.0
    %1063 = vmatprep.subr.mxu0 0.0
    %1064 = vmatpush1.msra.mxu0 0.0
    %1065 = vmatprep.subr.mxu0 0.0
    %1066 = vmatpush1.msra.mxu0 0.0
    %1067 = vmatprep.subr.mxu0 0.0
    %1068 = vmatpush1.msra.mxu0 0.0
    %1069 = vmatprep.subr.mxu0 0.0
    %1070 = vmatpush1.msra.mxu0 0.0
    %1071 = vmatprep.subr.mxu0 0.0
    %1072 = vmatpush1.msra.mxu0 0.0
    %1073 = vmatprep.subr.mxu0 0.0
    %1074 = vmatpush1.msra.mxu0 0.0
    %1075 = vmatprep.subr.mxu0 0.0
    %1076 = vmatpush1.msra.mxu0 0.0
    %1077 = vmatprep.subr.mxu0 0.0
    %1078 = vmatpush2.msra.mxu0 0.0
    %1079 = vmatprep.subr.mxu0 0.0
    %1080 = vmatpush2.msra.mxu0 0.0
    %1081 = vmatprep.subr.mxu0 0.0
    %1082 = vmatpush2.msra.mxu0 0.0
    %1083 = vmatprep.subr.mxu0 0.0
    %1084 = vmatpush2.msra.mxu0 0.0
    %1085 = vmatprep.subr.mxu0 0.0
    %1086 = vmatpush2.msra.mxu0 0.0
    %1087 = vmatprep.subr.mxu0 0.0
    %1088 = vmatpush2.msra.mxu0 0.0
    %1089 = vmatprep.subr.mxu0 0.0
    %1090 = vmatpush2.msra.mxu0 0.0
    %1091 = vmatprep.subr.mxu0 0.0
    %1092 = vmatpush2.msra.mxu0 0.0
    %1093 = vmatprep.subr.mxu0 0.0
    %1094 = vmatpush2.msra.mxu0 0.0
    %1095 = vmatprep.subr.mxu0 0.0
    %1096 = vmatpush2.msra.mxu0 0.0
    %1097 = vmatprep.subr.mxu0 0.0
    %1098 = vmatpush2.msra.mxu0 0.0
    %1099 = vmatprep.subr.mxu0 0.0
    %1100 = vmatpush2.msra.mxu0 0.0
    %1101 = vmatprep.subr.mxu0 0.0
    %1102 = vmatpush2.msra.mxu0 0.0
    %1103 = vmatprep.subr.mxu0 0.0
    %1104 = vmatpush2.msra.mxu0 0.0
    %1105 = vmatprep.subr.mxu0 0.0
    %1106 = vmatpush2.msra.mxu0 0.0
    %1107 = vmatprep.subr.mxu0 0.0
    %1108 = vmatpush2.msra.mxu0 0.0
    %1109 = vmatprep.mubr.f32.mxu0 0.0
    %1110 = vmatmul.mubr.f32.gmra.mxu0 %v1040
    %v1111 = vpop.f32.mrf.mxu0
    %v1112 = vadd.f32 0.0, %v1111
    %v1113 = vpop.f32.mrf.mxu0
    %1114 = vmatprep.mubr.f32.mxu0 0.0
    %1115 = vmatmul.mubr.f32.gmra.mxu0 %v1043
    %v1116 = vpop.f32.mrf.mxu0
    %v1117 = vadd.f32 0.0, %v1116
    %v1118 = vpop.f32.mrf.mxu0
    %1119 = vdwg.mxu0
    %v1120 = vadd.f32 %v1037, %v1112
    %v1121 = vadd.f32 %v1038, %v1117
    %v1122 = vtanh.pop %v1120
    %v1123 = vtanh.pop %v1121
    %1124 = vst [vmem:[#allocation9] sm:$0xff] %v1122
    %s1125 = scalar_lea.vmem [#allocation9], 176
    %1126 = vst [vmem:[%s1125 + $0x8] sm:$0xff] %v1123
    %v1127 = vld [vmem:[%s225] sm:$0xff]
    %v1128 = vld [vmem:[%s225 + $0x8] sm:$0xff]
    %1129 = vmatprep.subr.mxu0 0.0
    %1130 = vmatpush1.msra.mxu0 0.0
    %1131 = vmatprep.subr.mxu0 0.0
    %1132 = vmatpush1.msra.mxu0 0.0
    %1133 = vmatprep.subr.mxu0 0.0
    %1134 = vmatpush1.msra.mxu0 0.0
    %1135 = vmatprep.subr.mxu0 0.0
    %1136 = vmatpush1.msra.mxu0 0.0
    %1137 = vmatprep.subr.mxu0 0.0
    %1138 = vmatpush1.msra.mxu0 0.0
    %1139 = vmatprep.subr.mxu0 0.0
    %1140 = vmatpush1.msra.mxu0 0.0
    %1141 = vmatprep.subr.mxu0 0.0
    %1142 = vmatpush1.msra.mxu0 0.0
    %1143 = vmatprep.subr.mxu0 0.0
    %1144 = vmatpush1.msra.mxu0 0.0
    %1145 = vmatprep.subr.mxu0 0.0
    %1146 = vmatpush1.msra.mxu0 0.0
    %1147 = vmatprep.subr.mxu0 0.0
    %1148 = vmatpush1.msra.mxu0 0.0
    %1149 = vmatprep.subr.mxu0 0.0
    %1150 = vmatpush1.msra.mxu0 0.0
    %1151 = vmatprep.subr.mxu0 0.0
    %1152 = vmatpush1.msra.mxu0 0.0
    %1153 = vmatprep.subr.mxu0 0.0
    %1154 = vmatpush1.msra.mxu0 0.0
    %1155 = vmatprep.subr.mxu0 0.0
    %1156 = vmatpush1.msra.mxu0 0.0
    %1157 = vmatprep.subr.mxu0 0.0
    %1158 = vmatpush1.msra.mxu0 %v1123
    %1159 = vmatprep.subr.mxu0 0.0
    %1160 = vmatpush1.msra.mxu0 %v1122
    %1161 = vmatprep.subr.mxu0 0.0
    %1162 = vmatpush2.msra.mxu0 0.0
    %1163 = vmatprep.subr.mxu0 0.0
    %1164 = vmatpush2.msra.mxu0 0.0
    %1165 = vmatprep.subr.mxu0 0.0
    %1166 = vmatpush2.msra.mxu0 0.0
    %1167 = vmatprep.subr.mxu0 0.0
    %1168 = vmatpush2.msra.mxu0 0.0
    %1169 = vmatprep.subr.mxu0 0.0
    %1170 = vmatpush2.msra.mxu0 0.0
    %1171 = vmatprep.subr.mxu0 0.0
    %1172 = vmatpush2.msra.mxu0 0.0
    %1173 = vmatprep.subr.mxu0 0.0
    %1174 = vmatpush2.msra.mxu0 0.0
    %1175 = vmatprep.subr.mxu0 0.0
    %1176 = vmatpush2.msra.mxu0 0.0
    %1177 = vmatprep.subr.mxu0 0.0
    %1178 = vmatpush2.msra.mxu0 0.0
    %1179 = vmatprep.subr.mxu0 0.0
    %1180 = vmatpush2.msra.mxu0 0.0
    %1181 = vmatprep.subr.mxu0 0.0
    %1182 = vmatpush2.msra.mxu0 0.0
    %1183 = vmatprep.subr.mxu0 0.0
    %1184 = vmatpush2.msra.mxu0 0.0
    %1185 = vmatprep.subr.mxu0 0.0
    %1186 = vmatpush2.msra.mxu0 0.0
    %1187 = vmatprep.subr.mxu0 0.0
    %1188 = vmatpush2.msra.mxu0 0.0
    %1189 = vmatprep.subr.mxu0 0.0
    %1190 = vmatpush2.msra.mxu0 0.0
    %1191 = vmatprep.subr.mxu0 0.0
    %1192 = vmatpush2.msra.mxu0 0.0
    %1193 = vmatprep.mubr.f32.mxu0 0.0
    %1194 = vmatmul.mubr.f32.gmra.mxu0 %v1040
    %v1195 = vpop.f32.mrf.mxu0
    %v1196 = vadd.f32 0.0, %v1195
    %v1197 = vpop.f32.mrf.mxu0
    %1198 = vmatprep.mubr.f32.mxu0 0.0
    %1199 = vmatmul.mubr.f32.gmra.mxu0 %v1043
    %v1200 = vpop.f32.mrf.mxu0
    %v1201 = vadd.f32 0.0, %v1200
    %v1202 = vpop.f32.mrf.mxu0
    %1203 = vdwg.mxu0
    %v1204 = vadd.f32 %v1127, %v1196
    %v1205 = vadd.f32 %v1128, %v1201
    %v1206 = vtanh.pop %v1204
    %v1207 = vtanh.pop %v1205
    %s1208 = scalar_lea.vmem [#allocation9], 16
    %1209 = vst [vmem:[%s1208] sm:$0xff] %v1206
    %s1210 = scalar_lea.vmem [#allocation9], 160
    %1211 = vst [vmem:[%s1210 + $0x8] sm:$0xff] %v1207
    %v1212 = vld [vmem:[%s307] sm:$0xff]
    %v1213 = vld [vmem:[%s307 + $0x8] sm:$0xff]
    %1214 = vmatprep.subr.mxu0 0.0
    %1215 = vmatpush1.msra.mxu0 0.0
    %1216 = vmatprep.subr.mxu0 0.0
    %1217 = vmatpush1.msra.mxu0 0.0
    %1218 = vmatprep.subr.mxu0 0.0
    %1219 = vmatpush1.msra.mxu0 0.0
    %1220 = vmatprep.subr.mxu0 0.0
    %1221 = vmatpush1.msra.mxu0 0.0
    %1222 = vmatprep.subr.mxu0 0.0
    %1223 = vmatpush1.msra.mxu0 0.0
    %1224 = vmatprep.subr.mxu0 0.0
    %1225 = vmatpush1.msra.mxu0 0.0
    %1226 = vmatprep.subr.mxu0 0.0
    %1227 = vmatpush1.msra.mxu0 0.0
    %1228 = vmatprep.subr.mxu0 0.0
    %1229 = vmatpush1.msra.mxu0 0.0
    %1230 = vmatprep.subr.mxu0 0.0
    %1231 = vmatpush1.msra.mxu0 0.0
    %1232 = vmatprep.subr.mxu0 0.0
    %1233 = vmatpush1.msra.mxu0 0.0
    %1234 = vmatprep.subr.mxu0 0.0
    %1235 = vmatpush1.msra.mxu0 0.0
    %1236 = vmatprep.subr.mxu0 0.0
    %1237 = vmatpush1.msra.mxu0 0.0
    %1238 = vmatprep.subr.mxu0 0.0
    %1239 = vmatpush1.msra.mxu0 0.0
    %1240 = vmatprep.subr.mxu0 0.0
    %1241 = vmatpush1.msra.mxu0 0.0
    %1242 = vmatprep.subr.mxu0 0.0
    %1243 = vmatpush1.msra.mxu0 %v1207
    %1244 = vmatprep.subr.mxu0 0.0
    %1245 = vmatpush1.msra.mxu0 %v1206
    %1246 = vmatprep.subr.mxu0 0.0
    %1247 = vmatpush2.msra.mxu0 0.0
    %1248 = vmatprep.subr.mxu0 0.0
    %1249 = vmatpush2.msra.mxu0 0.0
    %1250 = vmatprep.subr.mxu0 0.0
    %1251 = vmatpush2.msra.mxu0 0.0
    %1252 = vmatprep.subr.mxu0 0.0
    %1253 = vmatpush2.msra.mxu0 0.0
    %1254 = vmatprep.subr.mxu0 0.0
    %1255 = vmatpush2.msra.mxu0 0.0
    %1256 = vmatprep.subr.mxu0 0.0
    %1257 = vmatpush2.msra.mxu0 0.0
    %1258 = vmatprep.subr.mxu0 0.0
    %1259 = vmatpush2.msra.mxu0 0.0
    %1260 = vmatprep.subr.mxu0 0.0
    %1261 = vmatpush2.msra.mxu0 0.0
    %1262 = vmatprep.subr.mxu0 0.0
    %1263 = vmatpush2.msra.mxu0 0.0
    %1264 = vmatprep.subr.mxu0 0.0
    %1265 = vmatpush2.msra.mxu0 0.0
    %1266 = vmatprep.subr.mxu0 0.0
    %1267 = vmatpush2.msra.mxu0 0.0
    %1268 = vmatprep.subr.mxu0 0.0
    %1269 = vmatpush2.msra.mxu0 0.0
    %1270 = vmatprep.subr.mxu0 0.0
    %1271 = vmatpush2.msra.mxu0 0.0
    %1272 = vmatprep.subr.mxu0 0.0
    %1273 = vmatpush2.msra.mxu0 0.0
    %1274 = vmatprep.subr.mxu0 0.0
    %1275 = vmatpush2.msra.mxu0 0.0
    %1276 = vmatprep.subr.mxu0 0.0
    %1277 = vmatpush2.msra.mxu0 0.0
    %1278 = vmatprep.mubr.f32.mxu0 0.0
    %1279 = vmatmul.mubr.f32.gmra.mxu0 %v1040
    %v1280 = vpop.f32.mrf.mxu0
    %v1281 = vadd.f32 0.0, %v1280
    %v1282 = vpop.f32.mrf.mxu0
    %1283 = vmatprep.mubr.f32.mxu0 0.0
    %1284 = vmatmul.mubr.f32.gmra.mxu0 %v1043
    %v1285 = vpop.f32.mrf.mxu0
    %v1286 = vadd.f32 0.0, %v1285
    %v1287 = vpop.f32.mrf.mxu0
    %1288 = vdwg.mxu0
    %v1289 = vadd.f32 %v1212, %v1281
    %v1290 = vadd.f32 %v1213, %v1286
    %v1291 = vtanh.pop %v1289
    %v1292 = vtanh.pop %v1290
    %s1293 = scalar_lea.vmem [#allocation9], 32
    %1294 = vst [vmem:[%s1293] sm:$0xff] %v1291
    %s1295 = scalar_lea.vmem [#allocation9], 144
    %1296 = vst [vmem:[%s1295 + $0x8] sm:$0xff] %v1292
    %v1297 = vld [vmem:[%s389] sm:$0xff]
    %v1298 = vld [vmem:[%s389 + $0x8] sm:$0xff]
    %1299 = vmatprep.subr.mxu0 0.0
    %1300 = vmatpush1.msra.mxu0 0.0
    %1301 = vmatprep.subr.mxu0 0.0
    %1302 = vmatpush1.msra.mxu0 0.0
    %1303 = vmatprep.subr.mxu0 0.0
    %1304 = vmatpush1.msra.mxu0 0.0
    %1305 = vmatprep.subr.mxu0 0.0
    %1306 = vmatpush1.msra.mxu0 0.0
    %1307 = vmatprep.subr.mxu0 0.0
    %1308 = vmatpush1.msra.mxu0 0.0
    %1309 = vmatprep.subr.mxu0 0.0
    %1310 = vmatpush1.msra.mxu0 0.0
    %1311 = vmatprep.subr.mxu0 0.0
    %1312 = vmatpush1.msra.mxu0 0.0
    %1313 = vmatprep.subr.mxu0 0.0
    %1314 = vmatpush1.msra.mxu0 0.0
    %1315 = vmatprep.subr.mxu0 0.0
    %1316 = vmatpush1.msra.mxu0 0.0
    %1317 = vmatprep.subr.mxu0 0.0
    %1318 = vmatpush1.msra.mxu0 0.0
    %1319 = vmatprep.subr.mxu0 0.0
    %1320 = vmatpush1.msra.mxu0 0.0
    %1321 = vmatprep.subr.mxu0 0.0
    %1322 = vmatpush1.msra.mxu0 0.0
    %1323 = vmatprep.subr.mxu0 0.0
    %1324 = vmatpush1.msra.mxu0 0.0
    %1325 = vmatprep.subr.mxu0 0.0
    %1326 = vmatpush1.msra.mxu0 0.0
    %1327 = vmatprep.subr.mxu0 0.0
    %1328 = vmatpush1.msra.mxu0 %v1292
    %1329 = vmatprep.subr.mxu0 0.0
    %1330 = vmatpush1.msra.mxu0 %v1291
    %1331 = vmatprep.subr.mxu0 0.0
    %1332 = vmatpush2.msra.mxu0 0.0
    %1333 = vmatprep.subr.mxu0 0.0
    %1334 = vmatpush2.msra.mxu0 0.0
    %1335 = vmatprep.subr.mxu0 0.0
    %1336 = vmatpush2.msra.mxu0 0.0
    %1337 = vmatprep.subr.mxu0 0.0
    %1338 = vmatpush2.msra.mxu0 0.0
    %1339 = vmatprep.subr.mxu0 0.0
    %1340 = vmatpush2.msra.mxu0 0.0
    %1341 = vmatprep.subr.mxu0 0.0
    %1342 = vmatpush2.msra.mxu0 0.0
    %1343 = vmatprep.subr.mxu0 0.0
    %1344 = vmatpush2.msra.mxu0 0.0
    %1345 = vmatprep.subr.mxu0 0.0
    %1346 = vmatpush2.msra.mxu0 0.0
    %1347 = vmatprep.subr.mxu0 0.0
    %1348 = vmatpush2.msra.mxu0 0.0
    %1349 = vmatprep.subr.mxu0 0.0
    %1350 = vmatpush2.msra.mxu0 0.0
    %1351 = vmatprep.subr.mxu0 0.0
    %1352 = vmatpush2.msra.mxu0 0.0
    %1353 = vmatprep.subr.mxu0 0.0
    %1354 = vmatpush2.msra.mxu0 0.0
    %1355 = vmatprep.subr.mxu0 0.0
    %1356 = vmatpush2.msra.mxu0 0.0
    %1357 = vmatprep.subr.mxu0 0.0
    %1358 = vmatpush2.msra.mxu0 0.0
    %1359 = vmatprep.subr.mxu0 0.0
    %1360 = vmatpush2.msra.mxu0 0.0
    %1361 = vmatprep.subr.mxu0 0.0
    %1362 = vmatpush2.msra.mxu0 0.0
    %1363 = vmatprep.mubr.f32.mxu0 0.0
    %1364 = vmatmul.mubr.f32.gmra.mxu0 %v1040
    %v1365 = vpop.f32.mrf.mxu0
    %v1366 = vadd.f32 0.0, %v1365
    %v1367 = vpop.f32.mrf.mxu0
    %1368 = vmatprep.mubr.f32.mxu0 0.0
    %1369 = vmatmul.mubr.f32.gmra.mxu0 %v1043
    %v1370 = vpop.f32.mrf.mxu0
    %v1371 = vadd.f32 0.0, %v1370
    %v1372 = vpop.f32.mrf.mxu0
    %1373 = vdwg.mxu0
    %v1374 = vadd.f32 %v1297, %v1366
    %v1375 = vadd.f32 %v1298, %v1371
    %v1376 = vtanh.pop %v1374
    %v1377 = vtanh.pop %v1375
    %s1378 = scalar_lea.vmem [#allocation9], 48
    %1379 = vst [vmem:[%s1378] sm:$0xff] %v1376
    %s1380 = scalar_lea.vmem [#allocation9], 128
    %1381 = vst [vmem:[%s1380 + $0x8] sm:$0xff] %v1377
    %v1382 = vld [vmem:[%s471] sm:$0xff]
    %v1383 = vld [vmem:[%s471 + $0x8] sm:$0xff]
    %1384 = vmatprep.subr.mxu0 0.0
    %1385 = vmatpush1.msra.mxu0 0.0
    %1386 = vmatprep.subr.mxu0 0.0
    %1387 = vmatpush1.msra.mxu0 0.0
    %1388 = vmatprep.subr.mxu0 0.0
    %1389 = vmatpush1.msra.mxu0 0.0
    %1390 = vmatprep.subr.mxu0 0.0
    %1391 = vmatpush1.msra.mxu0 0.0
    %1392 = vmatprep.subr.mxu0 0.0
    %1393 = vmatpush1.msra.mxu0 0.0
    %1394 = vmatprep.subr.mxu0 0.0
    %1395 = vmatpush1.msra.mxu0 0.0
    %1396 = vmatprep.subr.mxu0 0.0
    %1397 = vmatpush1.msra.mxu0 0.0
    %1398 = vmatprep.subr.mxu0 0.0
    %1399 = vmatpush1.msra.mxu0 0.0
    %1400 = vmatprep.subr.mxu0 0.0
    %1401 = vmatpush1.msra.mxu0 0.0
    %1402 = vmatprep.subr.mxu0 0.0
    %1403 = vmatpush1.msra.mxu0 0.0
    %1404 = vmatprep.subr.mxu0 0.0
    %1405 = vmatpush1.msra.mxu0 0.0
    %1406 = vmatprep.subr.mxu0 0.0
    %1407 = vmatpush1.msra.mxu0 0.0
    %1408 = vmatprep.subr.mxu0 0.0
    %1409 = vmatpush1.msra.mxu0 0.0
    %1410 = vmatprep.subr.mxu0 0.0
    %1411 = vmatpush1.msra.mxu0 0.0
    %1412 = vmatprep.subr.mxu0 0.0
    %1413 = vmatpush1.msra.mxu0 %v1377
    %1414 = vmatprep.subr.mxu0 0.0
    %1415 = vmatpush1.msra.mxu0 %v1376
    %1416 = vmatprep.subr.mxu0 0.0
    %1417 = vmatpush2.msra.mxu0 0.0
    %1418 = vmatprep.subr.mxu0 0.0
    %1419 = vmatpush2.msra.mxu0 0.0
    %1420 = vmatprep.subr.mxu0 0.0
    %1421 = vmatpush2.msra.mxu0 0.0
    %1422 = vmatprep.subr.mxu0 0.0
    %1423 = vmatpush2.msra.mxu0 0.0
    %1424 = vmatprep.subr.mxu0 0.0
    %1425 = vmatpush2.msra.mxu0 0.0
    %1426 = vmatprep.subr.mxu0 0.0
    %1427 = vmatpush2.msra.mxu0 0.0
    %1428 = vmatprep.subr.mxu0 0.0
    %1429 = vmatpush2.msra.mxu0 0.0
    %1430 = vmatprep.subr.mxu0 0.0
    %1431 = vmatpush2.msra.mxu0 0.0
    %1432 = vmatprep.subr.mxu0 0.0
    %1433 = vmatpush2.msra.mxu0 0.0
    %1434 = vmatprep.subr.mxu0 0.0
    %1435 = vmatpush2.msra.mxu0 0.0
    %1436 = vmatprep.subr.mxu0 0.0
    %1437 = vmatpush2.msra.mxu0 0.0
    %1438 = vmatprep.subr.mxu0 0.0
    %1439 = vmatpush2.msra.mxu0 0.0
    %1440 = vmatprep.subr.mxu0 0.0
    %1441 = vmatpush2.msra.mxu0 0.0
    %1442 = vmatprep.subr.mxu0 0.0
    %1443 = vmatpush2.msra.mxu0 0.0
    %1444 = vmatprep.subr.mxu0 0.0
    %1445 = vmatpush2.msra.mxu0 0.0
    %1446 = vmatprep.subr.mxu0 0.0
    %1447 = vmatpush2.msra.mxu0 0.0
    %1448 = vmatprep.mubr.f32.mxu0 0.0
    %1449 = vmatmul.mubr.f32.gmra.mxu0 %v1040
    %v1450 = vpop.f32.mrf.mxu0
    %v1451 = vadd.f32 0.0, %v1450
    %v1452 = vpop.f32.mrf.mxu0
    %1453 = vmatprep.mubr.f32.mxu0 0.0
    %1454 = vmatmul.mubr.f32.gmra.mxu0 %v1043
    %v1455 = vpop.f32.mrf.mxu0
    %v1456 = vadd.f32 0.0, %v1455
    %v1457 = vpop.f32.mrf.mxu0
    %1458 = vdwg.mxu0
    %v1459 = vadd.f32 %v1382, %v1451
    %v1460 = vadd.f32 %v1383, %v1456
    %v1461 = vtanh.pop %v1459
    %v1462 = vtanh.pop %v1460
    %s1463 = scalar_lea.vmem [#allocation9], 64
    %1464 = vst [vmem:[%s1463] sm:$0xff] %v1461
    %s1465 = scalar_lea.vmem [#allocation9], 112
    %1466 = vst [vmem:[%s1465 + $0x8] sm:$0xff] %v1462
    %v1467 = vld [vmem:[%s553] sm:$0xff]
    %v1468 = vld [vmem:[%s553 + $0x8] sm:$0xff]
    %1469 = vmatprep.subr.mxu0 0.0
    %1470 = vmatpush1.msra.mxu0 0.0
    %1471 = vmatprep.subr.mxu0 0.0
    %1472 = vmatpush1.msra.mxu0 0.0
    %1473 = vmatprep.subr.mxu0 0.0
    %1474 = vmatpush1.msra.mxu0 0.0
    %1475 = vmatprep.subr.mxu0 0.0
    %1476 = vmatpush1.msra.mxu0 0.0
    %1477 = vmatprep.subr.mxu0 0.0
    %1478 = vmatpush1.msra.mxu0 0.0
    %1479 = vmatprep.subr.mxu0 0.0
    %1480 = vmatpush1.msra.mxu0 0.0
    %1481 = vmatprep.subr.mxu0 0.0
    %1482 = vmatpush1.msra.mxu0 0.0
    %1483 = vmatprep.subr.mxu0 0.0
    %1484 = vmatpush1.msra.mxu0 0.0
    %1485 = vmatprep.subr.mxu0 0.0
    %1486 = vmatpush1.msra.mxu0 0.0
    %1487 = vmatprep.subr.mxu0 0.0
    %1488 = vmatpush1.msra.mxu0 0.0
    %1489 = vmatprep.subr.mxu0 0.0
    %1490 = vmatpush1.msra.mxu0 0.0
    %1491 = vmatprep.subr.mxu0 0.0
    %1492 = vmatpush1.msra.mxu0 0.0
    %1493 = vmatprep.subr.mxu0 0.0
    %1494 = vmatpush1.msra.mxu0 0.0
    %1495 = vmatprep.subr.mxu0 0.0
    %1496 = vmatpush1.msra.mxu0 0.0
    %1497 = vmatprep.subr.mxu0 0.0
    %1498 = vmatpush1.msra.mxu0 %v1462
    %1499 = vmatprep.subr.mxu0 0.0
    %1500 = vmatpush1.msra.mxu0 %v1461
    %1501 = vmatprep.subr.mxu0 0.0
    %1502 = vmatpush2.msra.mxu0 0.0
    %1503 = vmatprep.subr.mxu0 0.0
    %1504 = vmatpush2.msra.mxu0 0.0
    %1505 = vmatprep.subr.mxu0 0.0
    %1506 = vmatpush2.msra.mxu0 0.0
    %1507 = vmatprep.subr.mxu0 0.0
    %1508 = vmatpush2.msra.mxu0 0.0
    %1509 = vmatprep.subr.mxu0 0.0
    %1510 = vmatpush2.msra.mxu0 0.0
    %1511 = vmatprep.subr.mxu0 0.0
    %1512 = vmatpush2.msra.mxu0 0.0
    %1513 = vmatprep.subr.mxu0 0.0
    %1514 = vmatpush2.msra.mxu0 0.0
    %1515 = vmatprep.subr.mxu0 0.0
    %1516 = vmatpush2.msra.mxu0 0.0
    %1517 = vmatprep.subr.mxu0 0.0
    %1518 = vmatpush2.msra.mxu0 0.0
    %1519 = vmatprep.subr.mxu0 0.0
    %1520 = vmatpush2.msra.mxu0 0.0
    %1521 = vmatprep.subr.mxu0 0.0
    %1522 = vmatpush2.msra.mxu0 0.0
    %1523 = vmatprep.subr.mxu0 0.0
    %1524 = vmatpush2.msra.mxu0 0.0
    %1525 = vmatprep.subr.mxu0 0.0
    %1526 = vmatpush2.msra.mxu0 0.0
    %1527 = vmatprep.subr.mxu0 0.0
    %1528 = vmatpush2.msra.mxu0 0.0
    %1529 = vmatprep.subr.mxu0 0.0
    %1530 = vmatpush2.msra.mxu0 0.0
    %1531 = vmatprep.subr.mxu0 0.0
    %1532 = vmatpush2.msra.mxu0 0.0
    %1533 = vmatprep.mubr.f32.mxu0 0.0
    %1534 = vmatmul.mubr.f32.gmra.mxu0 %v1040
    %v1535 = vpop.f32.mrf.mxu0
    %v1536 = vadd.f32 0.0, %v1535
    %v1537 = vpop.f32.mrf.mxu0
    %1538 = vmatprep.mubr.f32.mxu0 0.0
    %1539 = vmatmul.mubr.f32.gmra.mxu0 %v1043
    %v1540 = vpop.f32.mrf.mxu0
    %v1541 = vadd.f32 0.0, %v1540
    %v1542 = vpop.f32.mrf.mxu0
    %1543 = vdwg.mxu0
    %v1544 = vadd.f32 %v1467, %v1536
    %v1545 = vadd.f32 %v1468, %v1541
    %v1546 = vtanh.pop %v1544
    %v1547 = vtanh.pop %v1545
    %s1548 = scalar_lea.vmem [#allocation9], 80
    %1549 = vst [vmem:[%s1548] sm:$0xff] %v1546
    %s1550 = scalar_lea.vmem [#allocation9], 96
    %1551 = vst [vmem:[%s1550 + $0x8] sm:$0xff] %v1547
    %v1552 = vld [vmem:[%s555] sm:$0xff]
    %v1553 = vld [vmem:[%s555 + $0x8] sm:$0xff]
    %1554 = vmatprep.subr.mxu0 0.0
    %1555 = vmatpush1.msra.mxu0 0.0
    %1556 = vmatprep.subr.mxu0 0.0
    %1557 = vmatpush1.msra.mxu0 0.0
    %1558 = vmatprep.subr.mxu0 0.0
    %1559 = vmatpush1.msra.mxu0 0.0
    %1560 = vmatprep.subr.mxu0 0.0
    %1561 = vmatpush1.msra.mxu0 0.0
    %1562 = vmatprep.subr.mxu0 0.0
    %1563 = vmatpush1.msra.mxu0 0.0
    %1564 = vmatprep.subr.mxu0 0.0
    %1565 = vmatpush1.msra.mxu0 0.0
    %1566 = vmatprep.subr.mxu0 0.0
    %1567 = vmatpush1.msra.mxu0 0.0
    %1568 = vmatprep.subr.mxu0 0.0
    %1569 = vmatpush1.msra.mxu0 0.0
    %1570 = vmatprep.subr.mxu0 0.0
    %1571 = vmatpush1.msra.mxu0 0.0
    %1572 = vmatprep.subr.mxu0 0.0
    %1573 = vmatpush1.msra.mxu0 0.0
    %1574 = vmatprep.subr.mxu0 0.0
    %1575 = vmatpush1.msra.mxu0 0.0
    %1576 = vmatprep.subr.mxu0 0.0
    %1577 = vmatpush1.msra.mxu0 0.0
    %1578 = vmatprep.subr.mxu0 0.0
    %1579 = vmatpush1.msra.mxu0 0.0
    %1580 = vmatprep.subr.mxu0 0.0
    %1581 = vmatpush1.msra.mxu0 0.0
    %1582 = vmatprep.subr.mxu0 0.0
    %1583 = vmatpush1.msra.mxu0 %v1547
    %1584 = vmatprep.subr.mxu0 0.0
    %1585 = vmatpush1.msra.mxu0 %v1546
    %1586 = vmatprep.subr.mxu0 0.0
    %1587 = vmatpush2.msra.mxu0 0.0
    %1588 = vmatprep.subr.mxu0 0.0
    %1589 = vmatpush2.msra.mxu0 0.0
    %1590 = vmatprep.subr.mxu0 0.0
    %1591 = vmatpush2.msra.mxu0 0.0
    %1592 = vmatprep.subr.mxu0 0.0
    %1593 = vmatpush2.msra.mxu0 0.0
    %1594 = vmatprep.subr.mxu0 0.0
    %1595 = vmatpush2.msra.mxu0 0.0
    %1596 = vmatprep.subr.mxu0 0.0
    %1597 = vmatpush2.msra.mxu0 0.0
    %1598 = vmatprep.subr.mxu0 0.0
    %1599 = vmatpush2.msra.mxu0 0.0
    %1600 = vmatprep.subr.mxu0 0.0
    %1601 = vmatpush2.msra.mxu0 0.0
    %1602 = vmatprep.subr.mxu0 0.0
    %1603 = vmatpush2.msra.mxu0 0.0
    %1604 = vmatprep.subr.mxu0 0.0
    %1605 = vmatpush2.msra.mxu0 0.0
    %1606 = vmatprep.subr.mxu0 0.0
    %1607 = vmatpush2.msra.mxu0 0.0
    %1608 = vmatprep.subr.mxu0 0.0
    %1609 = vmatpush2.msra.mxu0 0.0
    %1610 = vmatprep.subr.mxu0 0.0
    %1611 = vmatpush2.msra.mxu0 0.0
    %1612 = vmatprep.subr.mxu0 0.0
    %1613 = vmatpush2.msra.mxu0 0.0
    %1614 = vmatprep.subr.mxu0 0.0
    %1615 = vmatpush2.msra.mxu0 0.0
    %1616 = vmatprep.subr.mxu0 0.0
    %1617 = vmatpush2.msra.mxu0 0.0
    %1618 = vmatprep.mubr.f32.mxu0 0.0
    %1619 = vmatmul.mubr.f32.gmra.mxu0 %v1040
    %v1620 = vpop.f32.mrf.mxu0
    %v1621 = vadd.f32 0.0, %v1620
    %v1622 = vpop.f32.mrf.mxu0
    %1623 = vmatprep.mubr.f32.mxu0 0.0
    %1624 = vmatmul.mubr.f32.gmra.mxu0 %v1043
    %v1625 = vpop.f32.mrf.mxu0
    %v1626 = vadd.f32 0.0, %v1625
    %v1627 = vpop.f32.mrf.mxu0
    %1628 = vdwg.mxu0
    %v1629 = vadd.f32 %v1552, %v1621
    %v1630 = vadd.f32 %v1553, %v1626
    %v1631 = vtanh.pop %v1629
    %v1632 = vtanh.pop %v1630
    %1633 = vst [vmem:[%s1550] sm:$0xff] %v1631
    %1634 = vst [vmem:[%s1548 + $0x8] sm:$0xff] %v1632
    %v1635 = vld [vmem:[%s473] sm:$0xff]
    %v1636 = vld [vmem:[%s473 + $0x8] sm:$0xff]
    %1637 = vmatprep.subr.mxu0 0.0
    %1638 = vmatpush1.msra.mxu0 0.0
    %1639 = vmatprep.subr.mxu0 0.0
    %1640 = vmatpush1.msra.mxu0 0.0
    %1641 = vmatprep.subr.mxu0 0.0
    %1642 = vmatpush1.msra.mxu0 0.0
    %1643 = vmatprep.subr.mxu0 0.0
    %1644 = vmatpush1.msra.mxu0 0.0
    %1645 = vmatprep.subr.mxu0 0.0
    %1646 = vmatpush1.msra.mxu0 0.0
    %1647 = vmatprep.subr.mxu0 0.0
    %1648 = vmatpush1.msra.mxu0 0.0
    %1649 = vmatprep.subr.mxu0 0.0
    %1650 = vmatpush1.msra.mxu0 0.0
    %1651 = vmatprep.subr.mxu0 0.0
    %1652 = vmatpush1.msra.mxu0 0.0
    %1653 = vmatprep.subr.mxu0 0.0
    %1654 = vmatpush1.msra.mxu0 0.0
    %1655 = vmatprep.subr.mxu0 0.0
    %1656 = vmatpush1.msra.mxu0 0.0
    %1657 = vmatprep.subr.mxu0 0.0
    %1658 = vmatpush1.msra.mxu0 0.0
    %1659 = vmatprep.subr.mxu0 0.0
    %1660 = vmatpush1.msra.mxu0 0.0
    %1661 = vmatprep.subr.mxu0 0.0
    %1662 = vmatpush1.msra.mxu0 0.0
    %1663 = vmatprep.subr.mxu0 0.0
    %1664 = vmatpush1.msra.mxu0 0.0
    %1665 = vmatprep.subr.mxu0 0.0
    %1666 = vmatpush1.msra.mxu0 %v1632
    %1667 = vmatprep.subr.mxu0 0.0
    %1668 = vmatpush1.msra.mxu0 %v1631
    %1669 = vmatprep.subr.mxu0 0.0
    %1670 = vmatpush2.msra.mxu0 0.0
    %1671 = vmatprep.subr.mxu0 0.0
    %1672 = vmatpush2.msra.mxu0 0.0
    %1673 = vmatprep.subr.mxu0 0.0
    %1674 = vmatpush2.msra.mxu0 0.0
    %1675 = vmatprep.subr.mxu0 0.0
    %1676 = vmatpush2.msra.mxu0 0.0
    %1677 = vmatprep.subr.mxu0 0.0
    %1678 = vmatpush2.msra.mxu0 0.0
    %1679 = vmatprep.subr.mxu0 0.0
    %1680 = vmatpush2.msra.mxu0 0.0
    %1681 = vmatprep.subr.mxu0 0.0
    %1682 = vmatpush2.msra.mxu0 0.0
    %1683 = vmatprep.subr.mxu0 0.0
    %1684 = vmatpush2.msra.mxu0 0.0
    %1685 = vmatprep.subr.mxu0 0.0
    %1686 = vmatpush2.msra.mxu0 0.0
    %1687 = vmatprep.subr.mxu0 0.0
    %1688 = vmatpush2.msra.mxu0 0.0
    %1689 = vmatprep.subr.mxu0 0.0
    %1690 = vmatpush2.msra.mxu0 0.0
    %1691 = vmatprep.subr.mxu0 0.0
    %1692 = vmatpush2.msra.mxu0 0.0
    %1693 = vmatprep.subr.mxu0 0.0
    %1694 = vmatpush2.msra.mxu0 0.0
    %1695 = vmatprep.subr.mxu0 0.0
    %1696 = vmatpush2.msra.mxu0 0.0
    %1697 = vmatprep.subr.mxu0 0.0
    %1698 = vmatpush2.msra.mxu0 0.0
    %1699 = vmatprep.subr.mxu0 0.0
    %1700 = vmatpush2.msra.mxu0 0.0
    %1701 = vmatprep.mubr.f32.mxu0 0.0
    %1702 = vmatmul.mubr.f32.gmra.mxu0 %v1040
    %v1703 = vpop.f32.mrf.mxu0
    %v1704 = vadd.f32 0.0, %v1703
    %v1705 = vpop.f32.mrf.mxu0
    %1706 = vmatprep.mubr.f32.mxu0 0.0
    %1707 = vmatmul.mubr.f32.gmra.mxu0 %v1043
    %v1708 = vpop.f32.mrf.mxu0
    %v1709 = vadd.f32 0.0, %v1708
    %v1710 = vpop.f32.mrf.mxu0
    %1711 = vdwg.mxu0
    %v1712 = vadd.f32 %v1635, %v1704
    %v1713 = vadd.f32 %v1636, %v1709
    %v1714 = vtanh.pop %v1712
    %v1715 = vtanh.pop %v1713
    %1716 = vst [vmem:[%s1465] sm:$0xff] %v1714
    %1717 = vst [vmem:[%s1463 + $0x8] sm:$0xff] %v1715
    %v1718 = vld [vmem:[%s391] sm:$0xff]
    %v1719 = vld [vmem:[%s391 + $0x8] sm:$0xff]
    %1720 = vmatprep.subr.mxu0 0.0
    %1721 = vmatpush1.msra.mxu0 0.0
    %1722 = vmatprep.subr.mxu0 0.0
    %1723 = vmatpush1.msra.mxu0 0.0
    %1724 = vmatprep.subr.mxu0 0.0
    %1725 = vmatpush1.msra.mxu0 0.0
    %1726 = vmatprep.subr.mxu0 0.0
    %1727 = vmatpush1.msra.mxu0 0.0
    %1728 = vmatprep.subr.mxu0 0.0
    %1729 = vmatpush1.msra.mxu0 0.0
    %1730 = vmatprep.subr.mxu0 0.0
    %1731 = vmatpush1.msra.mxu0 0.0
    %1732 = vmatprep.subr.mxu0 0.0
    %1733 = vmatpush1.msra.mxu0 0.0
    %1734 = vmatprep.subr.mxu0 0.0
    %1735 = vmatpush1.msra.mxu0 0.0
    %1736 = vmatprep.subr.mxu0 0.0
    %1737 = vmatpush1.msra.mxu0 0.0
    %1738 = vmatprep.subr.mxu0 0.0
    %1739 = vmatpush1.msra.mxu0 0.0
    %1740 = vmatprep.subr.mxu0 0.0
    %1741 = vmatpush1.msra.mxu0 0.0
    %1742 = vmatprep.subr.mxu0 0.0
    %1743 = vmatpush1.msra.mxu0 0.0
    %1744 = vmatprep.subr.mxu0 0.0
    %1745 = vmatpush1.msra.mxu0 0.0
    %1746 = vmatprep.subr.mxu0 0.0
    %1747 = vmatpush1.msra.mxu0 0.0
    %1748 = vmatprep.subr.mxu0 0.0
    %1749 = vmatpush1.msra.mxu0 %v1715
    %1750 = vmatprep.subr.mxu0 0.0
    %1751 = vmatpush1.msra.mxu0 %v1714
    %1752 = vmatprep.subr.mxu0 0.0
    %1753 = vmatpush2.msra.mxu0 0.0
    %1754 = vmatprep.subr.mxu0 0.0
    %1755 = vmatpush2.msra.mxu0 0.0
    %1756 = vmatprep.subr.mxu0 0.0
    %1757 = vmatpush2.msra.mxu0 0.0
    %1758 = vmatprep.subr.mxu0 0.0
    %1759 = vmatpush2.msra.mxu0 0.0
    %1760 = vmatprep.subr.mxu0 0.0
    %1761 = vmatpush2.msra.mxu0 0.0
    %1762 = vmatprep.subr.mxu0 0.0
    %1763 = vmatpush2.msra.mxu0 0.0
    %1764 = vmatprep.subr.mxu0 0.0
    %1765 = vmatpush2.msra.mxu0 0.0
    %1766 = vmatprep.subr.mxu0 0.0
    %1767 = vmatpush2.msra.mxu0 0.0
    %1768 = vmatprep.subr.mxu0 0.0
    %1769 = vmatpush2.msra.mxu0 0.0
    %1770 = vmatprep.subr.mxu0 0.0
    %1771 = vmatpush2.msra.mxu0 0.0
    %1772 = vmatprep.subr.mxu0 0.0
    %1773 = vmatpush2.msra.mxu0 0.0
    %1774 = vmatprep.subr.mxu0 0.0
    %1775 = vmatpush2.msra.mxu0 0.0
    %1776 = vmatprep.subr.mxu0 0.0
    %1777 = vmatpush2.msra.mxu0 0.0
    %1778 = vmatprep.subr.mxu0 0.0
    %1779 = vmatpush2.msra.mxu0 0.0
    %1780 = vmatprep.subr.mxu0 0.0
    %1781 = vmatpush2.msra.mxu0 0.0
    %1782 = vmatprep.subr.mxu0 0.0
    %1783 = vmatpush2.msra.mxu0 0.0
    %1784 = vmatprep.mubr.f32.mxu0 0.0
    %1785 = vmatmul.mubr.f32.gmra.mxu0 %v1040
    %v1786 = vpop.f32.mrf.mxu0
    %v1787 = vadd.f32 0.0, %v1786
    %v1788 = vpop.f32.mrf.mxu0
    %1789 = vmatprep.mubr.f32.mxu0 0.0
    %1790 = vmatmul.mubr.f32.gmra.mxu0 %v1043
    %v1791 = vpop.f32.mrf.mxu0
    %v1792 = vadd.f32 0.0, %v1791
    %v1793 = vpop.f32.mrf.mxu0
    %1794 = vdwg.mxu0
    %v1795 = vadd.f32 %v1718, %v1787
    %v1796 = vadd.f32 %v1719, %v1792
    %v1797 = vtanh.pop %v1795
    %v1798 = vtanh.pop %v1796
    %1799 = vst [vmem:[%s1380] sm:$0xff] %v1797
    %1800 = vst [vmem:[%s1378 + $0x8] sm:$0xff] %v1798
    %v1801 = vld [vmem:[%s309] sm:$0xff]
    %v1802 = vld [vmem:[%s309 + $0x8] sm:$0xff]
    %1803 = vmatprep.subr.mxu0 0.0
    %1804 = vmatpush1.msra.mxu0 0.0
    %1805 = vmatprep.subr.mxu0 0.0
    %1806 = vmatpush1.msra.mxu0 0.0
    %1807 = vmatprep.subr.mxu0 0.0
    %1808 = vmatpush1.msra.mxu0 0.0
    %1809 = vmatprep.subr.mxu0 0.0
    %1810 = vmatpush1.msra.mxu0 0.0
    %1811 = vmatprep.subr.mxu0 0.0
    %1812 = vmatpush1.msra.mxu0 0.0
    %1813 = vmatprep.subr.mxu0 0.0
    %1814 = vmatpush1.msra.mxu0 0.0
    %1815 = vmatprep.subr.mxu0 0.0
    %1816 = vmatpush1.msra.mxu0 0.0
    %1817 = vmatprep.subr.mxu0 0.0
    %1818 = vmatpush1.msra.mxu0 0.0
    %1819 = vmatprep.subr.mxu0 0.0
    %1820 = vmatpush1.msra.mxu0 0.0
    %1821 = vmatprep.subr.mxu0 0.0
    %1822 = vmatpush1.msra.mxu0 0.0
    %1823 = vmatprep.subr.mxu0 0.0
    %1824 = vmatpush1.msra.mxu0 0.0
    %1825 = vmatprep.subr.mxu0 0.0
    %1826 = vmatpush1.msra.mxu0 0.0
    %1827 = vmatprep.subr.mxu0 0.0
    %1828 = vmatpush1.msra.mxu0 0.0
    %1829 = vmatprep.subr.mxu0 0.0
    %1830 = vmatpush1.msra.mxu0 0.0
    %1831 = vmatprep.subr.mxu0 0.0
    %1832 = vmatpush1.msra.mxu0 %v1798
    %1833 = vmatprep.subr.mxu0 0.0
    %1834 = vmatpush1.msra.mxu0 %v1797
    %1835 = vmatprep.subr.mxu0 0.0
    %1836 = vmatpush2.msra.mxu0 0.0
    %1837 = vmatprep.subr.mxu0 0.0
    %1838 = vmatpush2.msra.mxu0 0.0
    %1839 = vmatprep.subr.mxu0 0.0
    %1840 = vmatpush2.msra.mxu0 0.0
    %1841 = vmatprep.subr.mxu0 0.0
    %1842 = vmatpush2.msra.mxu0 0.0
    %1843 = vmatprep.subr.mxu0 0.0
    %1844 = vmatpush2.msra.mxu0 0.0
    %1845 = vmatprep.subr.mxu0 0.0
    %1846 = vmatpush2.msra.mxu0 0.0
    %1847 = vmatprep.subr.mxu0 0.0
    %1848 = vmatpush2.msra.mxu0 0.0
    %1849 = vmatprep.subr.mxu0 0.0
    %1850 = vmatpush2.msra.mxu0 0.0
    %1851 = vmatprep.subr.mxu0 0.0
    %1852 = vmatpush2.msra.mxu0 0.0
    %1853 = vmatprep.subr.mxu0 0.0
    %1854 = vmatpush2.msra.mxu0 0.0
    %1855 = vmatprep.subr.mxu0 0.0
    %1856 = vmatpush2.msra.mxu0 0.0
    %1857 = vmatprep.subr.mxu0 0.0
    %1858 = vmatpush2.msra.mxu0 0.0
    %1859 = vmatprep.subr.mxu0 0.0
    %1860 = vmatpush2.msra.mxu0 0.0
    %1861 = vmatprep.subr.mxu0 0.0
    %1862 = vmatpush2.msra.mxu0 0.0
    %1863 = vmatprep.subr.mxu0 0.0
    %1864 = vmatpush2.msra.mxu0 0.0
    %1865 = vmatprep.subr.mxu0 0.0
    %1866 = vmatpush2.msra.mxu0 0.0
    %1867 = vmatprep.mubr.f32.mxu0 0.0
    %1868 = vmatmul.mubr.f32.gmra.mxu0 %v1040
    %v1869 = vpop.f32.mrf.mxu0
    %v1870 = vadd.f32 0.0, %v1869
    %v1871 = vpop.f32.mrf.mxu0
    %1872 = vmatprep.mubr.f32.mxu0 0.0
    %1873 = vmatmul.mubr.f32.gmra.mxu0 %v1043
    %v1874 = vpop.f32.mrf.mxu0
    %v1875 = vadd.f32 0.0, %v1874
    %v1876 = vpop.f32.mrf.mxu0
    %1877 = vdwg.mxu0
    %v1878 = vadd.f32 %v1801, %v1870
    %v1879 = vadd.f32 %v1802, %v1875
    %v1880 = vtanh.pop %v1878
    %v1881 = vtanh.pop %v1879
    %1882 = vst [vmem:[%s1295] sm:$0xff] %v1880
    %1883 = vst [vmem:[%s1293 + $0x8] sm:$0xff] %v1881
    %v1884 = vld [vmem:[%s227] sm:$0xff]
    %v1885 = vld [vmem:[%s227 + $0x8] sm:$0xff]
    %1886 = vmatprep.subr.mxu0 0.0
    %1887 = vmatpush1.msra.mxu0 0.0
    %1888 = vmatprep.subr.mxu0 0.0
    %1889 = vmatpush1.msra.mxu0 0.0
    %1890 = vmatprep.subr.mxu0 0.0
    %1891 = vmatpush1.msra.mxu0 0.0
    %1892 = vmatprep.subr.mxu0 0.0
    %1893 = vmatpush1.msra.mxu0 0.0
    %1894 = vmatprep.subr.mxu0 0.0
    %1895 = vmatpush1.msra.mxu0 0.0
    %1896 = vmatprep.subr.mxu0 0.0
    %1897 = vmatpush1.msra.mxu0 0.0
    %1898 = vmatprep.subr.mxu0 0.0
    %1899 = vmatpush1.msra.mxu0 0.0
    %1900 = vmatprep.subr.mxu0 0.0
    %1901 = vmatpush1.msra.mxu0 0.0
    %1902 = vmatprep.subr.mxu0 0.0
    %1903 = vmatpush1.msra.mxu0 0.0
    %1904 = vmatprep.subr.mxu0 0.0
    %1905 = vmatpush1.msra.mxu0 0.0
    %1906 = vmatprep.subr.mxu0 0.0
    %1907 = vmatpush1.msra.mxu0 0.0
    %1908 = vmatprep.subr.mxu0 0.0
    %1909 = vmatpush1.msra.mxu0 0.0
    %1910 = vmatprep.subr.mxu0 0.0
    %1911 = vmatpush1.msra.mxu0 0.0
    %1912 = vmatprep.subr.mxu0 0.0
    %1913 = vmatpush1.msra.mxu0 0.0
    %1914 = vmatprep.subr.mxu0 0.0
    %1915 = vmatpush1.msra.mxu0 %v1881
    %1916 = vmatprep.subr.mxu0 0.0
    %1917 = vmatpush1.msra.mxu0 %v1880
    %1918 = vmatprep.subr.mxu0 0.0
    %1919 = vmatpush2.msra.mxu0 0.0
    %1920 = vmatprep.subr.mxu0 0.0
    %1921 = vmatpush2.msra.mxu0 0.0
    %1922 = vmatprep.subr.mxu0 0.0
    %1923 = vmatpush2.msra.mxu0 0.0
    %1924 = vmatprep.subr.mxu0 0.0
    %1925 = vmatpush2.msra.mxu0 0.0
    %1926 = vmatprep.subr.mxu0 0.0
    %1927 = vmatpush2.msra.mxu0 0.0
    %1928 = vmatprep.subr.mxu0 0.0
    %1929 = vmatpush2.msra.mxu0 0.0
    %1930 = vmatprep.subr.mxu0 0.0
    %1931 = vmatpush2.msra.mxu0 0.0
    %1932 = vmatprep.subr.mxu0 0.0
    %1933 = vmatpush2.msra.mxu0 0.0
    %1934 = vmatprep.subr.mxu0 0.0
    %1935 = vmatpush2.msra.mxu0 0.0
    %1936 = vmatprep.subr.mxu0 0.0
    %1937 = vmatpush2.msra.mxu0 0.0
    %1938 = vmatprep.subr.mxu0 0.0
    %1939 = vmatpush2.msra.mxu0 0.0
    %1940 = vmatprep.subr.mxu0 0.0
    %1941 = vmatpush2.msra.mxu0 0.0
    %1942 = vmatprep.subr.mxu0 0.0
    %1943 = vmatpush2.msra.mxu0 0.0
    %1944 = vmatprep.subr.mxu0 0.0
    %1945 = vmatpush2.msra.mxu0 0.0
    %1946 = vmatprep.subr.mxu0 0.0
    %1947 = vmatpush2.msra.mxu0 0.0
    %1948 = vmatprep.subr.mxu0 0.0
    %1949 = vmatpush2.msra.mxu0 0.0
    %1950 = vmatprep.mubr.f32.mxu0 0.0
    %1951 = vmatmul.mubr.f32.gmra.mxu0 %v1040
    %v1952 = vpop.f32.mrf.mxu0
    %v1953 = vadd.f32 0.0, %v1952
    %v1954 = vpop.f32.mrf.mxu0
    %1955 = vmatprep.mubr.f32.mxu0 0.0
    %1956 = vmatmul.mubr.f32.gmra.mxu0 %v1043
    %v1957 = vpop.f32.mrf.mxu0
    %v1958 = vadd.f32 0.0, %v1957
    %v1959 = vpop.f32.mrf.mxu0
    %1960 = vdwg.mxu0
    %v1961 = vadd.f32 %v1884, %v1953
    %v1962 = vadd.f32 %v1885, %v1958
    %v1963 = vtanh.pop %v1961
    %v1964 = vtanh.pop %v1962
    %1965 = vst [vmem:[%s1210] sm:$0xff] %v1963
    %1966 = vst [vmem:[%s1208 + $0x8] sm:$0xff] %v1964
    %v1967 = vld [vmem:[%s145] sm:$0xff]
    %v1968 = vld [vmem:[%s145 + $0x8] sm:$0xff]
    %1969 = vmatprep.subr.mxu0 0.0
    %1970 = vmatpush1.msra.mxu0 0.0
    %1971 = vmatprep.subr.mxu0 0.0
    %1972 = vmatpush1.msra.mxu0 0.0
    %1973 = vmatprep.subr.mxu0 0.0
    %1974 = vmatpush1.msra.mxu0 0.0
    %1975 = vmatprep.subr.mxu0 0.0
    %1976 = vmatpush1.msra.mxu0 0.0
    %1977 = vmatprep.subr.mxu0 0.0
    %1978 = vmatpush1.msra.mxu0 0.0
    %1979 = vmatprep.subr.mxu0 0.0
    %1980 = vmatpush1.msra.mxu0 0.0
    %1981 = vmatprep.subr.mxu0 0.0
    %1982 = vmatpush1.msra.mxu0 0.0
    %1983 = vmatprep.subr.mxu0 0.0
    %1984 = vmatpush1.msra.mxu0 0.0
    %1985 = vmatprep.subr.mxu0 0.0
    %1986 = vmatpush1.msra.mxu0 0.0
    %1987 = vmatprep.subr.mxu0 0.0
    %1988 = vmatpush1.msra.mxu0 0.0
    %1989 = vmatprep.subr.mxu0 0.0
    %1990 = vmatpush1.msra.mxu0 0.0
    %1991 = vmatprep.subr.mxu0 0.0
    %1992 = vmatpush1.msra.mxu0 0.0
    %1993 = vmatprep.subr.mxu0 0.0
    %1994 = vmatpush1.msra.mxu0 0.0
    %1995 = vmatprep.subr.mxu0 0.0
    %1996 = vmatpush1.msra.mxu0 0.0
    %1997 = vmatprep.subr.mxu0 0.0
    %1998 = vmatpush1.msra.mxu0 %v1964
    %1999 = vmatprep.subr.mxu0 0.0
    %2000 = vmatpush1.msra.mxu0 %v1963
    %2001 = vmatprep.subr.mxu0 0.0
    %2002 = vmatpush2.msra.mxu0 0.0
    %2003 = vmatprep.subr.mxu0 0.0
    %2004 = vmatpush2.msra.mxu0 0.0
    %2005 = vmatprep.subr.mxu0 0.0
    %2006 = vmatpush2.msra.mxu0 0.0
    %2007 = vmatprep.subr.mxu0 0.0
    %2008 = vmatpush2.msra.mxu0 0.0
    %2009 = vmatprep.subr.mxu0 0.0
    %2010 = vmatpush2.msra.mxu0 0.0
    %2011 = vmatprep.subr.mxu0 0.0
    %2012 = vmatpush2.msra.mxu0 0.0
    %2013 = vmatprep.subr.mxu0 0.0
    %2014 = vmatpush2.msra.mxu0 0.0
    %2015 = vmatprep.subr.mxu0 0.0
    %2016 = vmatpush2.msra.mxu0 0.0
    %2017 = vmatprep.subr.mxu0 0.0
    %2018 = vmatpush2.msra.mxu0 0.0
    %2019 = vmatprep.subr.mxu0 0.0
    %2020 = vmatpush2.msra.mxu0 0.0
    %2021 = vmatprep.subr.mxu0 0.0
    %2022 = vmatpush2.msra.mxu0 0.0
    %2023 = vmatprep.subr.mxu0 0.0
    %2024 = vmatpush2.msra.mxu0 0.0
    %2025 = vmatprep.subr.mxu0 0.0
    %2026 = vmatpush2.msra.mxu0 0.0
    %2027 = vmatprep.subr.mxu0 0.0
    %2028 = vmatpush2.msra.mxu0 0.0
    %2029 = vmatprep.subr.mxu0 0.0
    %2030 = vmatpush2.msra.mxu0 0.0
    %2031 = vmatprep.subr.mxu0 0.0
    %2032 = vmatpush2.msra.mxu0 0.0
    %2033 = vmatprep.mubr.f32.mxu0 0.0
    %2034 = vmatmul.mubr.f32.gmra.mxu0 %v1040
    %v2035 = vpop.f32.mrf.mxu0
    %v2036 = vadd.f32 0.0, %v2035
    %v2037 = vpop.f32.mrf.mxu0
    %2038 = vmatprep.mubr.f32.mxu0 0.0
    %2039 = vmatmul.mubr.f32.gmra.mxu0 %v1043
    %v2040 = vpop.f32.mrf.mxu0
    %v2041 = vadd.f32 0.0, %v2040
    %v2042 = vpop.f32.mrf.mxu0
    %2043 = vdwg.mxu0
    %v2044 = vadd.f32 %v1967, %v2036
    %v2045 = vadd.f32 %v1968, %v2041
    %v2046 = vtanh.pop %v2044
    %v2047 = vtanh.pop %v2045
    %2048 = vst [vmem:[%s1125] sm:$0xff] %v2046
    %2049 = vst [vmem:[#allocation9 + $0x8] sm:$0xff] %v2047
    // Predicated region
    $region26: #{tpu_custom_call.1} parent=1 // pred_check
      _
    $region27: #{tpu_custom_call.1} parent=1 // pred_check_branch
      %2051 = sbr.rel (0) target = $region29
    $region28: #{tpu_custom_call.1} parent=1 // pred_region
      %s2053 = ssub.s32 3072, 3072
      %2054 = vsyncadd [#allocation5], %s2053
      %s2055 = sshll.u32 [#allocation9], 4
      %s2056 = int_to_ptr.vmem [resolvable:$true] %s2055
      %2061 = dma.vmem_to_hbm [thread:$0]  %s2056, 3072, %s3, [#allocation5], 128, 128, 8
    $region29: #{tpu_custom_call.1} parent=1 // pred_fallthru
      _
    // Predicated region
    $region30: #{tpu_custom_call.1} parent=1 // pred_check
      _
    $region31: #{tpu_custom_call.1} parent=1 // pred_check_branch
      %2063 = sbr.rel (0) target = $region33
    $region32: #{tpu_custom_call.1} parent=1 // pred_region
      %2064 = dma.done [#allocation5], 3072
    $region33: #{tpu_custom_call.1} parent=1 // pred_fallthru
      _
    %2065 = vsyncpa [#allocation4], 1
    %2066 = vsyncpa [#allocation7], 1
    %2067 = vsyncpa [#allocation5], 1

</llo_original>
